<compile_context>
chip_gen: v6e
topology: v6e:2x2x1
jax: 0.10.0
libtpu: 0.0.40
codegen_flags: <defaults>
</compile_context>

<pallas_src>
import functools

import jax
import jax.numpy as jnp
from jax.experimental import pallas as pl
from jax.experimental.pallas import tpu as pltpu

NEG = -1.0e30  # stands in for -inf in the maxpool padding (never wins a max)


# ------------------------------ fused kernel -------------------------------- #

def _unit_kernel(H2, W2, cm, pool, project, *args):
    """One grid step = one batch element.

    [optional MaxPool2d(3,2,1)] + pre-activation bottleneck + skip, fully fused.
    Activations are kept as (rows=M2, channels) with channels on the lane axis.
    """
    M2 = H2 * W2

    i = 2 if pool else 1
    (s1_ref, b1_ref, w1_ref,
     s2_ref, b2_ref, w2_ref,
     s3_ref, b3_ref, w3_ref,
     mfirst_ref, mlast_ref) = args[i:i + 11]
    j = i + 11
    if project:
        wp_ref, sp_ref, bp_ref = args[j:j + 3]
        j += 3
    out_ref = args[j]
    pad_ref = args[j + 1]          # VMEM scratch: zero-padded conv3x3 input

    # ---------------------------------------------------------------- input
    if pool:
        # MaxPool2d(3, stride=2, padding=1): column 3-max over even/odd padded
        # column planes, then row 3-max via a (pairs, 2) reshape of the rows.
        e = args[0][0]                                    # (H+2, W2+1, Cin) even cols
        o = args[1][0]                                    # (H+2, W2+1, Cin) odd  cols
        colmax = jnp.maximum(jnp.maximum(e[:, :W2, :], o[:, :W2, :]),
                             e[:, 1:W2 + 1, :])           # (H+2, W2, Cin)
        rp = colmax.reshape(colmax.shape[0] // 2, 2, W2, colmax.shape[-1])
        r0 = rp[:, 0]                                     # even padded rows
        r1 = rp[:, 1]                                     # odd  padded rows
        pooled = jnp.maximum(jnp.maximum(r0[:H2], r1[:H2]), r0[1:H2 + 1])
        p = pooled.reshape(M2, pooled.shape[-1])          # (M2, Cin) f32
    else:
        p = args[0][0]                                    # (M2, Cin) f32

    # --------------------------------------------- bn1 + relu + 1x1 (Cin->Cm)
    a1 = jnp.maximum(p * s1_ref[...] + b1_ref[...], 0.0)
    y1 = jnp.dot(a1.astype(jnp.bfloat16), w1_ref[...],
                 preferred_element_type=jnp.float32)      # (M2, Cm) f32

    # ---------------------------------- bn2 + relu + 3x3 (Cm->Cm), in-kernel
    # Flattened zero-padded scratch; each (dh, dw) tap is a shifted contiguous
    # row window; row-wrap at the left/right image border is killed by masks.
    a2 = jnp.maximum(y1 * s2_ref[...] + b2_ref[...], 0.0)
    top = (pad_ref.shape[0] - M2) // 2                    # zero rows above interior
    pad_ref[...] = jnp.zeros(pad_ref.shape, pad_ref.dtype)
    pad_ref[pl.ds(top, M2), :] = a2.astype(jnp.bfloat16)
    acc = jnp.zeros((M2, cm), jnp.float32)
    k = 0
    for dh in (-1, 0, 1):
        for dw in (-1, 0, 1):
            win = pad_ref[pl.ds(top + dh * W2 + dw, M2), :]
            if dw == -1:
                win = win * mfirst_ref[...]               # zero rows with w == 0
            elif dw == 1:
                win = win * mlast_ref[...]                # zero rows with w == W2-1
            acc = acc + jnp.dot(win, w2_ref[k],
                                preferred_element_type=jnp.float32)
            k += 1

    # -------------------------------------------- bn3 + relu + 1x1 (Cm->Cout)
    a3 = jnp.maximum(acc * s3_ref[...] + b3_ref[...], 0.0)
    y3 = jnp.dot(a3.astype(jnp.bfloat16), w3_ref[...],
                 preferred_element_type=jnp.float32)      # (M2, Cout) f32

    # ---------------------------------------------------------- skip + store
    if project:
        skip = jnp.dot(p.astype(jnp.bfloat16), wp_ref[...],
                       preferred_element_type=jnp.float32)
        skip = skip * sp_ref[...] + bp_ref[...]           # folded BN on shortcut
    else:
        skip = p
    out_ref[0] = skip + y3


# ------------------------------ unit wrapper -------------------------------- #

def _residual_unit(x, prm, H2, W2, *, pool):
    """One fused pallas_call: [maxpool +] pre-activation bottleneck + skip.

    x: (N, H, W, Cin) NHWC f32 if pool, else (N, H2*W2, Cin) f32.
    Returns (N, H2*W2, Cout) f32 (lane-dense when Cout >= 128).
    """
    N = x.shape[0]
    cin, cm = prm["w1"].shape
    cout = prm["w3"].shape[1]
    project = "wp" in prm
    M2 = H2 * W2

    def _const(shape):
        return pl.BlockSpec(shape, lambda n: (0,) * len(shape))

    if pool:
        H, W = x.shape[1], x.shape[2]
        assert H % 2 == 0 and W % 2 == 0, "even spatial dims assumed"
        Hp = H + 2
        # -inf pad + even/odd column split: pure layout plumbing done in XLA so
        # every in-kernel op is a contiguous slice / reduction (no strided ops).
        xpad = jnp.pad(x, ((0, 0), (1, 1), (1, 1), (0, 0)), constant_values=NEG)
        x_in = [xpad[:, :, 0::2, :], xpad[:, :, 1::2, :]]      # (N, Hp, W2+1, Cin) x2
        x_specs = [pl.BlockSpec((1, Hp, W2 + 1, cin), lambda n: (n, 0, 0, 0)),
                   pl.BlockSpec((1, Hp, W2 + 1, cin), lambda n: (n, 0, 0, 0))]
    else:
        x_in = [x]
        x_specs = [pl.BlockSpec((1, M2, cin), lambda n: (n, 0, 0))]

    # column-boundary masks for the flattened 3x3 windows (static, tiny)
    col = jnp.arange(M2, dtype=jnp.int32) % W2
    mask_first = (col != 0).astype(jnp.bfloat16).reshape(M2, 1)
    mask_last = (col != W2 - 1).astype(jnp.bfloat16).reshape(M2, 1)

    inputs = x_in + [prm["s1"], prm["b1"], prm["w1"],
                     prm["s2"], prm["b2"], prm["w2"],
                     prm["s3"], prm["b3"], prm["w3"],
                     mask_first, mask_last]
    in_specs = x_specs + [_const((1, cin)), _const((1, cin)), _const((cin, cm)),
                          _const((1, cm)), _const((1, cm)), _const((9, cm, cm)),
                          _const((1, cm)), _const((1, cm)), _const((cm, cout)),
                          _const((M2, 1)), _const((M2, 1))]
    if project:
        inputs += [prm["wp"], prm["sp"], prm["bp"]]
        in_specs += [_const((cin, cout)), _const((1, cout)), _const((1, cout))]

    pad_rows = ((W2 + 1 + 7) // 8) * 8                     # sublane-aligned halo
    kernel = functools.partial(_unit_kernel, H2, W2, cm, pool, project)

    return pl.pallas_call(
        kernel,
        out_shape=jax.ShapeDtypeStruct((N, M2, cout), jnp.float32),
        grid=(N,),
        in_specs=in_specs,
        out_specs=pl.BlockSpec((1, M2, cout), lambda n: (n, 0, 0)),
        scratch_shapes=[pltpu.VMEM((M2 + 2 * pad_rows, cm), jnp.bfloat16)],
        compiler_params=pltpu.CompilerParams(
            dimension_semantics=("parallel",),
            vmem_limit_bytes=32 * 1024 * 1024,
        ),
    )(*inputs)


# --------------------------------- forward ---------------------------------- #

def downsample_forward(x_nchw, params_list):
    """DownSample forward: MaxPool2d(3,2,1) + r pre-activation bottleneck units."""
    x = jnp.transpose(x_nchw, (0, 2, 3, 1)).astype(jnp.float32)   # NCHW -> NHWC
    N, H, W, _ = x.shape
    H2, W2 = H // 2, W // 2                 # MaxPool2d(3, stride=2, padding=1)
    y = _residual_unit(x, params_list[0], H2, W2, pool=True)
    for prm in params_list[1:]:
        y = _residual_unit(y, prm, H2, W2, pool=False)
    cout = params_list[-1]["w3"].shape[1]
    y = y.reshape(N, H2, W2, cout)
    return jnp.transpose(y, (0, 3, 1, 2))                          # NHWC -> NCHW


# ------------------------------- parameters --------------------------------- #

def _folded_bn(key, ch):
    kg, kb, km, kv = jax.random.split(key, 4)
    gamma = jax.random.uniform(kg, (ch,), minval=0.5, maxval=1.5)
    beta = 0.1 * jax.random.normal(kb, (ch,))
    mean = 0.1 * jax.random.normal(km, (ch,))
    var = jax.random.uniform(kv, (ch,), minval=0.5, maxval=1.5)
    s = gamma / jnp.sqrt(var + 1e-5)
    b = beta - mean * s
    return (s.reshape(1, ch).astype(jnp.float32),
            b.reshape(1, ch).astype(jnp.float32))


def init_unit_params(key, cin, cout):
    """Synthetic deterministic params for one ResBlock(cin, cout//4, cout)."""
    cm = cout // 4
    k1, k2, k3, kp, kb1, kb2, kb3, kbp = jax.random.split(key, 8)
    # PyTorch conv layout (cout, cin, kh, kw) -> matmul layouts (rows=pix, cols=cout)
    w1_t = jax.random.normal(k1, (cm, cin, 1, 1)) * (1.0 / jnp.sqrt(cin))
    w2_t = jax.random.normal(k2, (cm, cm, 3, 3)) * (1.0 / jnp.sqrt(9 * cm))
    w3_t = jax.random.normal(k3, (cout, cm, 1, 1)) * (1.0 / jnp.sqrt(cm))
    s1, b1 = _folded_bn(kb1, cin)
    s2, b2 = _folded_bn(kb2, cm)
    s3, b3 = _folded_bn(kb3, cm)
    prm = {
        "w1": jnp.transpose(w1_t[:, :, 0, 0]).astype(jnp.bfloat16),       # (cin, cm)
        "w2": jnp.stack([w2_t[:, :, kh, kw].T
                         for kh in range(3) for kw in range(3)]
                        ).astype(jnp.bfloat16),                           # (9, cm, cm)
        "w3": jnp.transpose(w3_t[:, :, 0, 0]).astype(jnp.bfloat16),       # (cm, cout)
        "s1": s1, "b1": b1, "s2": s2, "b2": b2, "s3": s3, "b3": b3,
    }
    if cin != cout:  # projection shortcut: conv1x1 + folded BN
        wp_t = jax.random.normal(kp, (cout, cin, 1, 1)) * (1.0 / jnp.sqrt(cin))
        sp, bp = _folded_bn(kbp, cout)
        prm["wp"] = jnp.transpose(wp_t[:, :, 0, 0]).astype(jnp.bfloat16)  # (cin, cout)
        prm["sp"] = sp
        prm["bp"] = bp
    return prm


# ----------------------------------- main ------------------------------------ #

if __name__ == "__main__":
    key = jax.random.PRNGKey(0)
    kx, kp1, kp2 = jax.random.split(key, 3)

    # DownSample(input_channel=64, output_channel=128, r=2):
    #   MaxPool2d(3,2,1) -> ResBlock(64, 32, 128)  [projection skip]
    #                    -> ResBlock(128, 32, 128) [identity skip]
    N, C_IN, C_OUT, H, W = 2, 64, 128, 16, 16
    x = jax.random.normal(kx, (N, C_IN, H, W), dtype=jnp.float32)
    params = [init_unit_params(kp1, C_IN, C_OUT),
              init_unit_params(kp2, C_OUT, C_OUT)]

    out = jax.jit(downsample_forward)(x, params)
    out = jax.block_until_ready(out)

    assert out.shape == (N, C_OUT, H // 2, W // 2), out.shape
    assert bool(jnp.isfinite(out).all())
    print("KERNEL_OK")
</pallas_src>

<mosaic_0001>
module attributes {stable_mosaic.version = 11 : i64} {
  func.func @_unit_kernel(%arg0: i32, %arg1: memref<1x18x9x64xf32, #tpu.memory_space<vmem>>, %arg2: memref<1x18x9x64xf32, #tpu.memory_space<vmem>>, %arg3: memref<1x64xf32, #tpu.memory_space<vmem>>, %arg4: memref<1x64xf32, #tpu.memory_space<vmem>>, %arg5: memref<64x32xbf16, #tpu.memory_space<vmem>>, %arg6: memref<1x32xf32, #tpu.memory_space<vmem>>, %arg7: memref<1x32xf32, #tpu.memory_space<vmem>>, %arg8: memref<9x32x32xbf16, #tpu.memory_space<vmem>>, %arg9: memref<1x32xf32, #tpu.memory_space<vmem>>, %arg10: memref<1x32xf32, #tpu.memory_space<vmem>>, %arg11: memref<32x128xbf16, #tpu.memory_space<vmem>>, %arg12: memref<64x1xbf16, #tpu.memory_space<vmem>>, %arg13: memref<64x1xbf16, #tpu.memory_space<vmem>>, %arg14: memref<64x128xbf16, #tpu.memory_space<vmem>>, %arg15: memref<1x128xf32, #tpu.memory_space<vmem>>, %arg16: memref<1x128xf32, #tpu.memory_space<vmem>>, %arg17: memref<1x64x128xf32, #tpu.memory_space<vmem>>, %arg18: memref<96x32xbf16, #tpu.memory_space<vmem>>) attributes {dimension_semantics = [#tpu.dimension_semantics<parallel>], iteration_bounds = array<i64: 2>, scalar_prefetch = 0 : i64, scratch_operands = 1 : i64, tpu.core_type = #tpu.core_type<tc>, window_params = [{transform_indices = @transform_0, window_bounds = array<i64: 1, 18, 9, 64>}, {transform_indices = @transform_1, window_bounds = array<i64: 1, 18, 9, 64>}, {pipeline_mode = #tpu.pipeline_mode<synchronous>, transform_indices = @transform_2, window_bounds = array<i64: 1, 64>}, {pipeline_mode = #tpu.pipeline_mode<synchronous>, transform_indices = @transform_3, window_bounds = array<i64: 1, 64>}, {pipeline_mode = #tpu.pipeline_mode<synchronous>, transform_indices = @transform_4, window_bounds = array<i64: 64, 32>}, {pipeline_mode = #tpu.pipeline_mode<synchronous>, transform_indices = @transform_5, window_bounds = array<i64: 1, 32>}, {pipeline_mode = #tpu.pipeline_mode<synchronous>, transform_indices = @transform_6, window_bounds = array<i64: 1, 32>}, {pipeline_mode = #tpu.pipeline_mode<synchronous>, transform_indices = @transform_7, window_bounds = array<i64: 9, 32, 32>}, {pipeline_mode = #tpu.pipeline_mode<synchronous>, transform_indices = @transform_8, window_bounds = array<i64: 1, 32>}, {pipeline_mode = #tpu.pipeline_mode<synchronous>, transform_indices = @transform_9, window_bounds = array<i64: 1, 32>}, {pipeline_mode = #tpu.pipeline_mode<synchronous>, transform_indices = @transform_10, window_bounds = array<i64: 32, 128>}, {pipeline_mode = #tpu.pipeline_mode<synchronous>, transform_indices = @transform_11, window_bounds = array<i64: 64, 1>}, {pipeline_mode = #tpu.pipeline_mode<synchronous>, transform_indices = @transform_12, window_bounds = array<i64: 64, 1>}, {pipeline_mode = #tpu.pipeline_mode<synchronous>, transform_indices = @transform_13, window_bounds = array<i64: 64, 128>}, {pipeline_mode = #tpu.pipeline_mode<synchronous>, transform_indices = @transform_14, window_bounds = array<i64: 1, 128>}, {pipeline_mode = #tpu.pipeline_mode<synchronous>, transform_indices = @transform_15, window_bounds = array<i64: 1, 128>}, {transform_indices = @transform_16, window_bounds = array<i64: 1, 64, 128>}]} {
    %c0 = arith.constant 0 : index
    %c0_0 = arith.constant 0 : index
    %c0_1 = arith.constant 0 : index
    %c0_2 = arith.constant 0 : index
    %0 = vector.load %arg1[%c0, %c0_0, %c0_1, %c0_2] : memref<1x18x9x64xf32, #tpu.memory_space<vmem>>, vector<1x18x9x64xf32>
    %1 = vector.shape_cast %0 : vector<1x18x9x64xf32> to vector<18x9x64xf32>
    %c0_3 = arith.constant 0 : index
    %c0_4 = arith.constant 0 : index
    %c0_5 = arith.constant 0 : index
    %c0_6 = arith.constant 0 : index
    %2 = vector.load %arg2[%c0_3, %c0_4, %c0_5, %c0_6] : memref<1x18x9x64xf32, #tpu.memory_space<vmem>>, vector<1x18x9x64xf32>
    %3 = vector.shape_cast %2 : vector<1x18x9x64xf32> to vector<18x9x64xf32>
    %4 = vector.extract_strided_slice %1 {offsets = [0, 0, 0], sizes = [18, 8, 64], strides = [1, 1, 1]} : vector<18x9x64xf32> to vector<18x8x64xf32>
    %5 = vector.extract_strided_slice %3 {offsets = [0, 0, 0], sizes = [18, 8, 64], strides = [1, 1, 1]} : vector<18x9x64xf32> to vector<18x8x64xf32>
    %6 = arith.maximumf %4, %5 : vector<18x8x64xf32>
    %7 = vector.extract_strided_slice %1 {offsets = [0, 1, 0], sizes = [18, 8, 64], strides = [1, 1, 1]} : vector<18x9x64xf32> to vector<18x8x64xf32>
    %8 = arith.maximumf %6, %7 : vector<18x8x64xf32>
    %9 = vector.shape_cast %8 : vector<18x8x64xf32> to vector<9x2x8x64xf32>
    %10 = vector.extract_strided_slice %9 {offsets = [0, 0, 0, 0], sizes = [9, 1, 8, 64], strides = [1, 1, 1, 1]} : vector<9x2x8x64xf32> to vector<9x1x8x64xf32>
    %11 = vector.shape_cast %10 : vector<9x1x8x64xf32> to vector<9x8x64xf32>
    %12 = vector.extract_strided_slice %9 {offsets = [0, 1, 0, 0], sizes = [9, 1, 8, 64], strides = [1, 1, 1, 1]} : vector<9x2x8x64xf32> to vector<9x1x8x64xf32>
    %13 = vector.shape_cast %12 : vector<9x1x8x64xf32> to vector<9x8x64xf32>
    %14 = vector.extract_strided_slice %11 {offsets = [0, 0, 0], sizes = [8, 8, 64], strides = [1, 1, 1]} : vector<9x8x64xf32> to vector<8x8x64xf32>
    %15 = vector.extract_strided_slice %13 {offsets = [0, 0, 0], sizes = [8, 8, 64], strides = [1, 1, 1]} : vector<9x8x64xf32> to vector<8x8x64xf32>
    %16 = arith.maximumf %14, %15 : vector<8x8x64xf32>
    %17 = vector.extract_strided_slice %11 {offsets = [1, 0, 0], sizes = [8, 8, 64], strides = [1, 1, 1]} : vector<9x8x64xf32> to vector<8x8x64xf32>
    %18 = arith.maximumf %16, %17 : vector<8x8x64xf32>
    %19 = vector.shape_cast %18 : vector<8x8x64xf32> to vector<64x64xf32>
    %c0_7 = arith.constant 0 : index
    %c0_8 = arith.constant 0 : index
    %20 = vector.load %arg3[%c0_7, %c0_8] : memref<1x64xf32, #tpu.memory_space<vmem>>, vector<1x64xf32>
    %21 = vector.broadcast %20 : vector<1x64xf32> to vector<64x64xf32>
    %22 = arith.mulf %19, %21 : vector<64x64xf32>
    %c0_9 = arith.constant 0 : index
    %c0_10 = arith.constant 0 : index
    %23 = vector.load %arg4[%c0_9, %c0_10] : memref<1x64xf32, #tpu.memory_space<vmem>>, vector<1x64xf32>
    %24 = vector.broadcast %23 : vector<1x64xf32> to vector<64x64xf32>
    %25 = arith.addf %22, %24 : vector<64x64xf32>
    %cst = arith.constant 0.000000e+00 : f32
    %26 = vector.broadcast %cst : f32 to vector<64x64xf32>
    %27 = arith.maximumf %25, %26 : vector<64x64xf32>
    %28 = arith.truncf %27 : vector<64x64xf32> to vector<64x64xbf16>
    %c0_11 = arith.constant 0 : index
    %c0_12 = arith.constant 0 : index
    %29 = vector.load %arg5[%c0_11, %c0_12] : memref<64x32xbf16, #tpu.memory_space<vmem>>, vector<64x32xbf16>
    %cst_13 = arith.constant dense<0.000000e+00> : vector<64x32xf32>
    %30 = tpu.matmul %28, %29, %cst_13 {dimension_numbers = #tpu.dot_dimension_numbers<[1], [0], [0], [1], [0, 0, 1, 1], [], []>} : vector<64x64xbf16>, vector<64x32xbf16>, vector<64x32xf32> -> vector<64x32xf32>
    %c0_14 = arith.constant 0 : index
    %c0_15 = arith.constant 0 : index
    %31 = vector.load %arg6[%c0_14, %c0_15] : memref<1x32xf32, #tpu.memory_space<vmem>>, vector<1x32xf32>
    %32 = vector.broadcast %31 : vector<1x32xf32> to vector<64x32xf32>
    %33 = arith.mulf %30, %32 : vector<64x32xf32>
    %c0_16 = arith.constant 0 : index
    %c0_17 = arith.constant 0 : index
    %34 = vector.load %arg7[%c0_16, %c0_17] : memref<1x32xf32, #tpu.memory_space<vmem>>, vector<1x32xf32>
    %35 = vector.broadcast %34 : vector<1x32xf32> to vector<64x32xf32>
    %36 = arith.addf %33, %35 : vector<64x32xf32>
    %cst_18 = arith.constant 0.000000e+00 : f32
    %37 = vector.broadcast %cst_18 : f32 to vector<64x32xf32>
    %38 = arith.maximumf %36, %37 : vector<64x32xf32>
    %cst_19 = arith.constant 0.000000e+00 : bf16
    %39 = vector.broadcast %cst_19 : bf16 to vector<96x32xbf16>
    %c0_20 = arith.constant 0 : index
    %c0_21 = arith.constant 0 : index
    %40 = vector.load %arg18[%c0_20, %c0_21] : memref<96x32xbf16, #tpu.memory_space<vmem>>, vector<96x32xbf16>
    tpu.vector_store %arg18[%c0_20, %c0_21], %39 {strides = array<i32>} : memref<96x32xbf16, #tpu.memory_space<vmem>>, vector<96x32xbf16>,
    %41 = arith.truncf %38 : vector<64x32xf32> to vector<64x32xbf16>
    %c16 = arith.constant 16 : index
    %c0_22 = arith.constant 0 : index
    %42 = vector.load %arg18[%c16, %c0_22] : memref<96x32xbf16, #tpu.memory_space<vmem>>, vector<64x32xbf16>
    tpu.vector_store %arg18[%c16, %c0_22], %41 {strides = array<i32>} : memref<96x32xbf16, #tpu.memory_space<vmem>>, vector<64x32xbf16>,
    %cst_23 = arith.constant 0.000000e+00 : f32
    %43 = vector.broadcast %cst_23 : f32 to vector<64x32xf32>
    %c7 = arith.constant 7 : index
    %c0_24 = arith.constant 0 : index
    %44 = vector.load %arg18[%c7, %c0_24] : memref<96x32xbf16, #tpu.memory_space<vmem>>, vector<64x32xbf16>
    %c0_25 = arith.constant 0 : index
    %c0_26 = arith.constant 0 : index
    %45 = vector.load %arg12[%c0_25, %c0_26] : memref<64x1xbf16, #tpu.memory_space<vmem>>, vector<64x1xbf16>
    %46 = vector.broadcast %45 : vector<64x1xbf16> to vector<64x32xbf16>
    %47 = arith.mulf %44, %46 : vector<64x32xbf16>
    %c0_27 = arith.constant 0 : index
    %c0_28 = arith.constant 0 : index
    %c0_29 = arith.constant 0 : index
    %48 = vector.load %arg8[%c0_27, %c0_28, %c0_29] : memref<9x32x32xbf16, #tpu.memory_space<vmem>>, vector<1x32x32xbf16>
    %49 = vector.shape_cast %48 : vector<1x32x32xbf16> to vector<32x32xbf16>
    %cst_30 = arith.constant dense<0.000000e+00> : vector<64x32xf32>
    %50 = tpu.matmul %47, %49, %cst_30 {dimension_numbers = #tpu.dot_dimension_numbers<[1], [0], [0], [1], [0, 0, 1, 1], [], []>} : vector<64x32xbf16>, vector<32x32xbf16>, vector<64x32xf32> -> vector<64x32xf32>
    %51 = arith.addf %43, %50 : vector<64x32xf32>
    %c8 = arith.constant 8 : index
    %c0_31 = arith.constant 0 : index
    %52 = vector.load %arg18[%c8, %c0_31] : memref<96x32xbf16, #tpu.memory_space<vmem>>, vector<64x32xbf16>
    %c1 = arith.constant 1 : index
    %c0_32 = arith.constant 0 : index
    %c0_33 = arith.constant 0 : index
    %53 = vector.load %arg8[%c1, %c0_32, %c0_33] : memref<9x32x32xbf16, #tpu.memory_space<vmem>>, vector<1x32x32xbf16>
    %54 = vector.shape_cast %53 : vector<1x32x32xbf16> to vector<32x32xbf16>
    %cst_34 = arith.constant dense<0.000000e+00> : vector<64x32xf32>
    %55 = tpu.matmul %52, %54, %cst_34 {dimension_numbers = #tpu.dot_dimension_numbers<[1], [0], [0], [1], [0, 0, 1, 1], [], []>} : vector<64x32xbf16>, vector<32x32xbf16>, vector<64x32xf32> -> vector<64x32xf32>
    %56 = arith.addf %51, %55 : vector<64x32xf32>
    %c9 = arith.constant 9 : index
    %c0_35 = arith.constant 0 : index
    %57 = vector.load %arg18[%c9, %c0_35] : memref<96x32xbf16, #tpu.memory_space<vmem>>, vector<64x32xbf16>
    %c0_36 = arith.constant 0 : index
    %c0_37 = arith.constant 0 : index
    %58 = vector.load %arg13[%c0_36, %c0_37] : memref<64x1xbf16, #tpu.memory_space<vmem>>, vector<64x1xbf16>
    %59 = vector.broadcast %58 : vector<64x1xbf16> to vector<64x32xbf16>
    %60 = arith.mulf %57, %59 : vector<64x32xbf16>
    %c2 = arith.constant 2 : index
    %c0_38 = arith.constant 0 : index
    %c0_39 = arith.constant 0 : index
    %61 = vector.load %arg8[%c2, %c0_38, %c0_39] : memref<9x32x32xbf16, #tpu.memory_space<vmem>>, vector<1x32x32xbf16>
    %62 = vector.shape_cast %61 : vector<1x32x32xbf16> to vector<32x32xbf16>
    %cst_40 = arith.constant dense<0.000000e+00> : vector<64x32xf32>
    %63 = tpu.matmul %60, %62, %cst_40 {dimension_numbers = #tpu.dot_dimension_numbers<[1], [0], [0], [1], [0, 0, 1, 1], [], []>} : vector<64x32xbf16>, vector<32x32xbf16>, vector<64x32xf32> -> vector<64x32xf32>
    %64 = arith.addf %56, %63 : vector<64x32xf32>
    %c15 = arith.constant 15 : index
    %c0_41 = arith.constant 0 : index
    %65 = vector.load %arg18[%c15, %c0_41] : memref<96x32xbf16, #tpu.memory_space<vmem>>, vector<64x32xbf16>
    %c0_42 = arith.constant 0 : index
    %c0_43 = arith.constant 0 : index
    %66 = vector.load %arg12[%c0_42, %c0_43] : memref<64x1xbf16, #tpu.memory_space<vmem>>, vector<64x1xbf16>
    %67 = vector.broadcast %66 : vector<64x1xbf16> to vector<64x32xbf16>
    %68 = arith.mulf %65, %67 : vector<64x32xbf16>
    %c3 = arith.constant 3 : index
    %c0_44 = arith.constant 0 : index
    %c0_45 = arith.constant 0 : index
    %69 = vector.load %arg8[%c3, %c0_44, %c0_45] : memref<9x32x32xbf16, #tpu.memory_space<vmem>>, vector<1x32x32xbf16>
    %70 = vector.shape_cast %69 : vector<1x32x32xbf16> to vector<32x32xbf16>
    %cst_46 = arith.constant dense<0.000000e+00> : vector<64x32xf32>
    %71 = tpu.matmul %68, %70, %cst_46 {dimension_numbers = #tpu.dot_dimension_numbers<[1], [0], [0], [1], [0, 0, 1, 1], [], []>} : vector<64x32xbf16>, vector<32x32xbf16>, vector<64x32xf32> -> vector<64x32xf32>
    %72 = arith.addf %64, %71 : vector<64x32xf32>
    %c16_47 = arith.constant 16 : index
    %c0_48 = arith.constant 0 : index
    %73 = vector.load %arg18[%c16_47, %c0_48] : memref<96x32xbf16, #tpu.memory_space<vmem>>, vector<64x32xbf16>
    %c4 = arith.constant 4 : index
    %c0_49 = arith.constant 0 : index
    %c0_50 = arith.constant 0 : index
    %74 = vector.load %arg8[%c4, %c0_49, %c0_50] : memref<9x32x32xbf16, #tpu.memory_space<vmem>>, vector<1x32x32xbf16>
    %75 = vector.shape_cast %74 : vector<1x32x32xbf16> to vector<32x32xbf16>
    %cst_51 = arith.constant dense<0.000000e+00> : vector<64x32xf32>
    %76 = tpu.matmul %73, %75, %cst_51 {dimension_numbers = #tpu.dot_dimension_numbers<[1], [0], [0], [1], [0, 0, 1, 1], [], []>} : vector<64x32xbf16>, vector<32x32xbf16>, vector<64x32xf32> -> vector<64x32xf32>
    %77 = arith.addf %72, %76 : vector<64x32xf32>
    %c17 = arith.constant 17 : index
    %c0_52 = arith.constant 0 : index
    %78 = vector.load %arg18[%c17, %c0_52] : memref<96x32xbf16, #tpu.memory_space<vmem>>, vector<64x32xbf16>
    %c0_53 = arith.constant 0 : index
    %c0_54 = arith.constant 0 : index
    %79 = vector.load %arg13[%c0_53, %c0_54] : memref<64x1xbf16, #tpu.memory_space<vmem>>, vector<64x1xbf16>
    %80 = vector.broadcast %79 : vector<64x1xbf16> to vector<64x32xbf16>
    %81 = arith.mulf %78, %80 : vector<64x32xbf16>
    %c5 = arith.constant 5 : index
    %c0_55 = arith.constant 0 : index
    %c0_56 = arith.constant 0 : index
    %82 = vector.load %arg8[%c5, %c0_55, %c0_56] : memref<9x32x32xbf16, #tpu.memory_space<vmem>>, vector<1x32x32xbf16>
    %83 = vector.shape_cast %82 : vector<1x32x32xbf16> to vector<32x32xbf16>
    %cst_57 = arith.constant dense<0.000000e+00> : vector<64x32xf32>
    %84 = tpu.matmul %81, %83, %cst_57 {dimension_numbers = #tpu.dot_dimension_numbers<[1], [0], [0], [1], [0, 0, 1, 1], [], []>} : vector<64x32xbf16>, vector<32x32xbf16>, vector<64x32xf32> -> vector<64x32xf32>
    %85 = arith.addf %77, %84 : vector<64x32xf32>
    %c23 = arith.constant 23 : index
    %c0_58 = arith.constant 0 : index
    %86 = vector.load %arg18[%c23, %c0_58] : memref<96x32xbf16, #tpu.memory_space<vmem>>, vector<64x32xbf16>
    %c0_59 = arith.constant 0 : index
    %c0_60 = arith.constant 0 : index
    %87 = vector.load %arg12[%c0_59, %c0_60] : memref<64x1xbf16, #tpu.memory_space<vmem>>, vector<64x1xbf16>
    %88 = vector.broadcast %87 : vector<64x1xbf16> to vector<64x32xbf16>
    %89 = arith.mulf %86, %88 : vector<64x32xbf16>
    %c6 = arith.constant 6 : index
    %c0_61 = arith.constant 0 : index
    %c0_62 = arith.constant 0 : index
    %90 = vector.load %arg8[%c6, %c0_61, %c0_62] : memref<9x32x32xbf16, #tpu.memory_space<vmem>>, vector<1x32x32xbf16>
    %91 = vector.shape_cast %90 : vector<1x32x32xbf16> to vector<32x32xbf16>
    %cst_63 = arith.constant dense<0.000000e+00> : vector<64x32xf32>
    %92 = tpu.matmul %89, %91, %cst_63 {dimension_numbers = #tpu.dot_dimension_numbers<[1], [0], [0], [1], [0, 0, 1, 1], [], []>} : vector<64x32xbf16>, vector<32x32xbf16>, vector<64x32xf32> -> vector<64x32xf32>
    %93 = arith.addf %85, %92 : vector<64x32xf32>
    %c24 = arith.constant 24 : index
    %c0_64 = arith.constant 0 : index
    %94 = vector.load %arg18[%c24, %c0_64] : memref<96x32xbf16, #tpu.memory_space<vmem>>, vector<64x32xbf16>
    %c7_65 = arith.constant 7 : index
    %c0_66 = arith.constant 0 : index
    %c0_67 = arith.constant 0 : index
    %95 = vector.load %arg8[%c7_65, %c0_66, %c0_67] : memref<9x32x32xbf16, #tpu.memory_space<vmem>>, vector<1x32x32xbf16>
    %96 = vector.shape_cast %95 : vector<1x32x32xbf16> to vector<32x32xbf16>
    %cst_68 = arith.constant dense<0.000000e+00> : vector<64x32xf32>
    %97 = tpu.matmul %94, %96, %cst_68 {dimension_numbers = #tpu.dot_dimension_numbers<[1], [0], [0], [1], [0, 0, 1, 1], [], []>} : vector<64x32xbf16>, vector<32x32xbf16>, vector<64x32xf32> -> vector<64x32xf32>
    %98 = arith.addf %93, %97 : vector<64x32xf32>
    %c25 = arith.constant 25 : index
    %c0_69 = arith.constant 0 : index
    %99 = vector.load %arg18[%c25, %c0_69] : memref<96x32xbf16, #tpu.memory_space<vmem>>, vector<64x32xbf16>
    %c0_70 = arith.constant 0 : index
    %c0_71 = arith.constant 0 : index
    %100 = vector.load %arg13[%c0_70, %c0_71] : memref<64x1xbf16, #tpu.memory_space<vmem>>, vector<64x1xbf16>
    %101 = vector.broadcast %100 : vector<64x1xbf16> to vector<64x32xbf16>
    %102 = arith.mulf %99, %101 : vector<64x32xbf16>
    %c8_72 = arith.constant 8 : index
    %c0_73 = arith.constant 0 : index
    %c0_74 = arith.constant 0 : index
    %103 = vector.load %arg8[%c8_72, %c0_73, %c0_74] : memref<9x32x32xbf16, #tpu.memory_space<vmem>>, vector<1x32x32xbf16>
    %104 = vector.shape_cast %103 : vector<1x32x32xbf16> to vector<32x32xbf16>
    %cst_75 = arith.constant dense<0.000000e+00> : vector<64x32xf32>
    %105 = tpu.matmul %102, %104, %cst_75 {dimension_numbers = #tpu.dot_dimension_numbers<[1], [0], [0], [1], [0, 0, 1, 1], [], []>} : vector<64x32xbf16>, vector<32x32xbf16>, vector<64x32xf32> -> vector<64x32xf32>
    %106 = arith.addf %98, %105 : vector<64x32xf32>
    %c0_76 = arith.constant 0 : index
    %c0_77 = arith.constant 0 : index
    %107 = vector.load %arg9[%c0_76, %c0_77] : memref<1x32xf32, #tpu.memory_space<vmem>>, vector<1x32xf32>
    %108 = vector.broadcast %107 : vector<1x32xf32> to vector<64x32xf32>
    %109 = arith.mulf %106, %108 : vector<64x32xf32>
    %c0_78 = arith.constant 0 : index
    %c0_79 = arith.constant 0 : index
    %110 = vector.load %arg10[%c0_78, %c0_79] : memref<1x32xf32, #tpu.memory_space<vmem>>, vector<1x32xf32>
    %111 = vector.broadcast %110 : vector<1x32xf32> to vector<64x32xf32>
    %112 = arith.addf %109, %111 : vector<64x32xf32>
    %cst_80 = arith.constant 0.000000e+00 : f32
    %113 = vector.broadcast %cst_80 : f32 to vector<64x32xf32>
    %114 = arith.maximumf %112, %113 : vector<64x32xf32>
    %115 = arith.truncf %114 : vector<64x32xf32> to vector<64x32xbf16>
    %c0_81 = arith.constant 0 : index
    %c0_82 = arith.constant 0 : index
    %116 = vector.load %arg11[%c0_81, %c0_82] : memref<32x128xbf16, #tpu.memory_space<vmem>>, vector<32x128xbf16>
    %cst_83 = arith.constant dense<0.000000e+00> : vector<64x128xf32>
    %117 = tpu.matmul %115, %116, %cst_83 {dimension_numbers = #tpu.dot_dimension_numbers<[1], [0], [0], [1], [0, 0, 1, 1], [], []>} : vector<64x32xbf16>, vector<32x128xbf16>, vector<64x128xf32> -> vector<64x128xf32>
    %118 = arith.truncf %19 : vector<64x64xf32> to vector<64x64xbf16>
    %c0_84 = arith.constant 0 : index
    %c0_85 = arith.constant 0 : index
    %119 = vector.load %arg14[%c0_84, %c0_85] : memref<64x128xbf16, #tpu.memory_space<vmem>>, vector<64x128xbf16>
    %cst_86 = arith.constant dense<0.000000e+00> : vector<64x128xf32>
    %120 = tpu.matmul %118, %119, %cst_86 {dimension_numbers = #tpu.dot_dimension_numbers<[1], [0], [0], [1], [0, 0, 1, 1], [], []>} : vector<64x64xbf16>, vector<64x128xbf16>, vector<64x128xf32> -> vector<64x128xf32>
    %c0_87 = arith.constant 0 : index
    %c0_88 = arith.constant 0 : index
    %121 = vector.load %arg15[%c0_87, %c0_88] : memref<1x128xf32, #tpu.memory_space<vmem>>, vector<1x128xf32>
    %122 = vector.broadcast %121 : vector<1x128xf32> to vector<64x128xf32>
    %123 = arith.mulf %120, %122 : vector<64x128xf32>
    %c0_89 = arith.constant 0 : index
    %c0_90 = arith.constant 0 : index
    %124 = vector.load %arg16[%c0_89, %c0_90] : memref<1x128xf32, #tpu.memory_space<vmem>>, vector<1x128xf32>
    %125 = vector.broadcast %124 : vector<1x128xf32> to vector<64x128xf32>
    %126 = arith.addf %123, %125 : vector<64x128xf32>
    %127 = arith.addf %126, %117 : vector<64x128xf32>
    %c0_91 = arith.constant 0 : index
    %c0_92 = arith.constant 0 : index
    %c0_93 = arith.constant 0 : index
    %128 = vector.load %arg17[%c0_91, %c0_92, %c0_93] : memref<1x64x128xf32, #tpu.memory_space<vmem>>, vector<1x64x128xf32>
    %129 = vector.shape_cast %128 : vector<1x64x128xf32> to vector<64x128xf32>
    %130 = vector.shape_cast %127 : vector<64x128xf32> to vector<1x64x128xf32>
    tpu.vector_store %arg17[%c0_91, %c0_92, %c0_93], %130 {strides = array<i32>} : memref<1x64x128xf32, #tpu.memory_space<vmem>>, vector<1x64x128xf32>,
    return
  }
  func.func @transform_0(%arg0: i32) -> (i32, i32, i32, i32) {
    %c0_i32 = arith.constant 0 : i32
    %c0_i32_0 = arith.constant 0 : i32
    %c0_i32_1 = arith.constant 0 : i32
    %c0_i32_2 = arith.constant 0 : i32
    return %arg0, %c0_i32, %c0_i32_0, %c0_i32_1 : i32, i32, i32, i32
  }
  func.func @transform_1(%arg0: i32) -> (i32, i32, i32, i32) {
    %c0_i32 = arith.constant 0 : i32
    %c0_i32_0 = arith.constant 0 : i32
    %c0_i32_1 = arith.constant 0 : i32
    %c0_i32_2 = arith.constant 0 : i32
    return %arg0, %c0_i32, %c0_i32_0, %c0_i32_1 : i32, i32, i32, i32
  }
  func.func @transform_2(%arg0: i32) -> (i32, i32) {
    %c0_i32 = arith.constant 0 : i32
    %c0_i32_0 = arith.constant 0 : i32
    %c0_i32_1 = arith.constant 0 : i32
    return %c0_i32, %c0_i32_0 : i32, i32
  }
  func.func @transform_3(%arg0: i32) -> (i32, i32) {
    %c0_i32 = arith.constant 0 : i32
    %c0_i32_0 = arith.constant 0 : i32
    %c0_i32_1 = arith.constant 0 : i32
    return %c0_i32, %c0_i32_0 : i32, i32
  }
  func.func @transform_4(%arg0: i32) -> (i32, i32) {
    %c0_i32 = arith.constant 0 : i32
    %c0_i32_0 = arith.constant 0 : i32
    %c0_i32_1 = arith.constant 0 : i32
    return %c0_i32, %c0_i32_0 : i32, i32
  }
  func.func @transform_5(%arg0: i32) -> (i32, i32) {
    %c0_i32 = arith.constant 0 : i32
    %c0_i32_0 = arith.constant 0 : i32
    %c0_i32_1 = arith.constant 0 : i32
    return %c0_i32, %c0_i32_0 : i32, i32
  }
  func.func @transform_6(%arg0: i32) -> (i32, i32) {
    %c0_i32 = arith.constant 0 : i32
    %c0_i32_0 = arith.constant 0 : i32
    %c0_i32_1 = arith.constant 0 : i32
    return %c0_i32, %c0_i32_0 : i32, i32
  }
  func.func @transform_7(%arg0: i32) -> (i32, i32, i32) {
    %c0_i32 = arith.constant 0 : i32
    %c0_i32_0 = arith.constant 0 : i32
    %c0_i32_1 = arith.constant 0 : i32
    %c0_i32_2 = arith.constant 0 : i32
    return %c0_i32, %c0_i32_0, %c0_i32_1 : i32, i32, i32
  }
  func.func @transform_8(%arg0: i32) -> (i32, i32) {
    %c0_i32 = arith.constant 0 : i32
    %c0_i32_0 = arith.constant 0 : i32
    %c0_i32_1 = arith.constant 0 : i32
    return %c0_i32, %c0_i32_0 : i32, i32
  }
  func.func @transform_9(%arg0: i32) -> (i32, i32) {
    %c0_i32 = arith.constant 0 : i32
    %c0_i32_0 = arith.constant 0 : i32
    %c0_i32_1 = arith.constant 0 : i32
    return %c0_i32, %c0_i32_0 : i32, i32
  }
  func.func @transform_10(%arg0: i32) -> (i32, i32) {
    %c0_i32 = arith.constant 0 : i32
    %c0_i32_0 = arith.constant 0 : i32
    %c0_i32_1 = arith.constant 0 : i32
    return %c0_i32, %c0_i32_0 : i32, i32
  }
  func.func @transform_11(%arg0: i32) -> (i32, i32) {
    %c0_i32 = arith.constant 0 : i32
    %c0_i32_0 = arith.constant 0 : i32
    %c0_i32_1 = arith.constant 0 : i32
    return %c0_i32, %c0_i32_0 : i32, i32
  }
  func.func @transform_12(%arg0: i32) -> (i32, i32) {
    %c0_i32 = arith.constant 0 : i32
    %c0_i32_0 = arith.constant 0 : i32
    %c0_i32_1 = arith.constant 0 : i32
    return %c0_i32, %c0_i32_0 : i32, i32
  }
  func.func @transform_13(%arg0: i32) -> (i32, i32) {
    %c0_i32 = arith.constant 0 : i32
    %c0_i32_0 = arith.constant 0 : i32
    %c0_i32_1 = arith.constant 0 : i32
    return %c0_i32, %c0_i32_0 : i32, i32
  }
  func.func @transform_14(%arg0: i32) -> (i32, i32) {
    %c0_i32 = arith.constant 0 : i32
    %c0_i32_0 = arith.constant 0 : i32
    %c0_i32_1 = arith.constant 0 : i32
    return %c0_i32, %c0_i32_0 : i32, i32
  }
  func.func @transform_15(%arg0: i32) -> (i32, i32) {
    %c0_i32 = arith.constant 0 : i32
    %c0_i32_0 = arith.constant 0 : i32
    %c0_i32_1 = arith.constant 0 : i32
    return %c0_i32, %c0_i32_0 : i32, i32
  }
  func.func @transform_16(%arg0: i32) -> (i32, i32, i32) {
    %c0_i32 = arith.constant 0 : i32
    %c0_i32_0 = arith.constant 0 : i32
    %c0_i32_1 = arith.constant 0 : i32
    return %arg0, %c0_i32, %c0_i32_0 : i32, i32, i32
  }
}

module attributes {stable_mosaic.version = 11 : i64} {
  func.func @_unit_kernel(%arg0: i32, %arg1: memref<1x64x128xf32, #tpu.memory_space<vmem>>, %arg2: memref<1x128xf32, #tpu.memory_space<vmem>>, %arg3: memref<1x128xf32, #tpu.memory_space<vmem>>, %arg4: memref<128x32xbf16, #tpu.memory_space<vmem>>, %arg5: memref<1x32xf32, #tpu.memory_space<vmem>>, %arg6: memref<1x32xf32, #tpu.memory_space<vmem>>, %arg7: memref<9x32x32xbf16, #tpu.memory_space<vmem>>, %arg8: memref<1x32xf32, #tpu.memory_space<vmem>>, %arg9: memref<1x32xf32, #tpu.memory_space<vmem>>, %arg10: memref<32x128xbf16, #tpu.memory_space<vmem>>, %arg11: memref<64x1xbf16, #tpu.memory_space<vmem>>, %arg12: memref<64x1xbf16, #tpu.memory_space<vmem>>, %arg13: memref<1x64x128xf32, #tpu.memory_space<vmem>>, %arg14: memref<96x32xbf16, #tpu.memory_space<vmem>>) attributes {dimension_semantics = [#tpu.dimension_semantics<parallel>], iteration_bounds = array<i64: 2>, scalar_prefetch = 0 : i64, scratch_operands = 1 : i64, tpu.core_type = #tpu.core_type<tc>, window_params = [{transform_indices = @transform_0, window_bounds = array<i64: 1, 64, 128>}, {pipeline_mode = #tpu.pipeline_mode<synchronous>, transform_indices = @transform_1, window_bounds = array<i64: 1, 128>}, {pipeline_mode = #tpu.pipeline_mode<synchronous>, transform_indices = @transform_2, window_bounds = array<i64: 1, 128>}, {pipeline_mode = #tpu.pipeline_mode<synchronous>, transform_indices = @transform_3, window_bounds = array<i64: 128, 32>}, {pipeline_mode = #tpu.pipeline_mode<synchronous>, transform_indices = @transform_4, window_bounds = array<i64: 1, 32>}, {pipeline_mode = #tpu.pipeline_mode<synchronous>, transform_indices = @transform_5, window_bounds = array<i64: 1, 32>}, {pipeline_mode = #tpu.pipeline_mode<synchronous>, transform_indices = @transform_6, window_bounds = array<i64: 9, 32, 32>}, {pipeline_mode = #tpu.pipeline_mode<synchronous>, transform_indices = @transform_7, window_bounds = array<i64: 1, 32>}, {pipeline_mode = #tpu.pipeline_mode<synchronous>, transform_indices = @transform_8, window_bounds = array<i64: 1, 32>}, {pipeline_mode = #tpu.pipeline_mode<synchronous>, transform_indices = @transform_9, window_bounds = array<i64: 32, 128>}, {pipeline_mode = #tpu.pipeline_mode<synchronous>, transform_indices = @transform_10, window_bounds = array<i64: 64, 1>}, {pipeline_mode = #tpu.pipeline_mode<synchronous>, transform_indices = @transform_11, window_bounds = array<i64: 64, 1>}, {transform_indices = @transform_12, window_bounds = array<i64: 1, 64, 128>}]} {
    %c0 = arith.constant 0 : index
    %c0_0 = arith.constant 0 : index
    %c0_1 = arith.constant 0 : index
    %0 = vector.load %arg1[%c0, %c0_0, %c0_1] : memref<1x64x128xf32, #tpu.memory_space<vmem>>, vector<1x64x128xf32>
    %1 = vector.shape_cast %0 : vector<1x64x128xf32> to vector<64x128xf32>
    %c0_2 = arith.constant 0 : index
    %c0_3 = arith.constant 0 : index
    %2 = vector.load %arg2[%c0_2, %c0_3] : memref<1x128xf32, #tpu.memory_space<vmem>>, vector<1x128xf32>
    %3 = vector.broadcast %2 : vector<1x128xf32> to vector<64x128xf32>
    %4 = arith.mulf %1, %3 : vector<64x128xf32>
    %c0_4 = arith.constant 0 : index
    %c0_5 = arith.constant 0 : index
    %5 = vector.load %arg3[%c0_4, %c0_5] : memref<1x128xf32, #tpu.memory_space<vmem>>, vector<1x128xf32>
    %6 = vector.broadcast %5 : vector<1x128xf32> to vector<64x128xf32>
    %7 = arith.addf %4, %6 : vector<64x128xf32>
    %cst = arith.constant 0.000000e+00 : f32
    %8 = vector.broadcast %cst : f32 to vector<64x128xf32>
    %9 = arith.maximumf %7, %8 : vector<64x128xf32>
    %10 = arith.truncf %9 : vector<64x128xf32> to vector<64x128xbf16>
    %c0_6 = arith.constant 0 : index
    %c0_7 = arith.constant 0 : index
    %11 = vector.load %arg4[%c0_6, %c0_7] : memref<128x32xbf16, #tpu.memory_space<vmem>>, vector<128x32xbf16>
    %cst_8 = arith.constant dense<0.000000e+00> : vector<64x32xf32>
    %12 = tpu.matmul %10, %11, %cst_8 {dimension_numbers = #tpu.dot_dimension_numbers<[1], [0], [0], [1], [0, 0, 1, 1], [], []>} : vector<64x128xbf16>, vector<128x32xbf16>, vector<64x32xf32> -> vector<64x32xf32>
    %c0_9 = arith.constant 0 : index
    %c0_10 = arith.constant 0 : index
    %13 = vector.load %arg5[%c0_9, %c0_10] : memref<1x32xf32, #tpu.memory_space<vmem>>, vector<1x32xf32>
    %14 = vector.broadcast %13 : vector<1x32xf32> to vector<64x32xf32>
    %15 = arith.mulf %12, %14 : vector<64x32xf32>
    %c0_11 = arith.constant 0 : index
    %c0_12 = arith.constant 0 : index
    %16 = vector.load %arg6[%c0_11, %c0_12] : memref<1x32xf32, #tpu.memory_space<vmem>>, vector<1x32xf32>
    %17 = vector.broadcast %16 : vector<1x32xf32> to vector<64x32xf32>
    %18 = arith.addf %15, %17 : vector<64x32xf32>
    %cst_13 = arith.constant 0.000000e+00 : f32
    %19 = vector.broadcast %cst_13 : f32 to vector<64x32xf32>
    %20 = arith.maximumf %18, %19 : vector<64x32xf32>
    %cst_14 = arith.constant 0.000000e+00 : bf16
    %21 = vector.broadcast %cst_14 : bf16 to vector<96x32xbf16>
    %c0_15 = arith.constant 0 : index
    %c0_16 = arith.constant 0 : index
    %22 = vector.load %arg14[%c0_15, %c0_16] : memref<96x32xbf16, #tpu.memory_space<vmem>>, vector<96x32xbf16>
    tpu.vector_store %arg14[%c0_15, %c0_16], %21 {strides = array<i32>} : memref<96x32xbf16, #tpu.memory_space<vmem>>, vector<96x32xbf16>,
    %23 = arith.truncf %20 : vector<64x32xf32> to vector<64x32xbf16>
    %c16 = arith.constant 16 : index
    %c0_17 = arith.constant 0 : index
    %24 = vector.load %arg14[%c16, %c0_17] : memref<96x32xbf16, #tpu.memory_space<vmem>>, vector<64x32xbf16>
    tpu.vector_store %arg14[%c16, %c0_17], %23 {strides = array<i32>} : memref<96x32xbf16, #tpu.memory_space<vmem>>, vector<64x32xbf16>,
    %cst_18 = arith.constant 0.000000e+00 : f32
    %25 = vector.broadcast %cst_18 : f32 to vector<64x32xf32>
    %c7 = arith.constant 7 : index
    %c0_19 = arith.constant 0 : index
    %26 = vector.load %arg14[%c7, %c0_19] : memref<96x32xbf16, #tpu.memory_space<vmem>>, vector<64x32xbf16>
    %c0_20 = arith.constant 0 : index
    %c0_21 = arith.constant 0 : index
    %27 = vector.load %arg11[%c0_20, %c0_21] : memref<64x1xbf16, #tpu.memory_space<vmem>>, vector<64x1xbf16>
    %28 = vector.broadcast %27 : vector<64x1xbf16> to vector<64x32xbf16>
    %29 = arith.mulf %26, %28 : vector<64x32xbf16>
    %c0_22 = arith.constant 0 : index
    %c0_23 = arith.constant 0 : index
    %c0_24 = arith.constant 0 : index
    %30 = vector.load %arg7[%c0_22, %c0_23, %c0_24] : memref<9x32x32xbf16, #tpu.memory_space<vmem>>, vector<1x32x32xbf16>
    %31 = vector.shape_cast %30 : vector<1x32x32xbf16> to vector<32x32xbf16>
    %cst_25 = arith.constant dense<0.000000e+00> : vector<64x32xf32>
    %32 = tpu.matmul %29, %31, %cst_25 {dimension_numbers = #tpu.dot_dimension_numbers<[1], [0], [0], [1], [0, 0, 1, 1], [], []>} : vector<64x32xbf16>, vector<32x32xbf16>, vector<64x32xf32> -> vector<64x32xf32>
    %33 = arith.addf %25, %32 : vector<64x32xf32>
    %c8 = arith.constant 8 : index
    %c0_26 = arith.constant 0 : index
    %34 = vector.load %arg14[%c8, %c0_26] : memref<96x32xbf16, #tpu.memory_space<vmem>>, vector<64x32xbf16>
    %c1 = arith.constant 1 : index
    %c0_27 = arith.constant 0 : index
    %c0_28 = arith.constant 0 : index
    %35 = vector.load %arg7[%c1, %c0_27, %c0_28] : memref<9x32x32xbf16, #tpu.memory_space<vmem>>, vector<1x32x32xbf16>
    %36 = vector.shape_cast %35 : vector<1x32x32xbf16> to vector<32x32xbf16>
    %cst_29 = arith.constant dense<0.000000e+00> : vector<64x32xf32>
    %37 = tpu.matmul %34, %36, %cst_29 {dimension_numbers = #tpu.dot_dimension_numbers<[1], [0], [0], [1], [0, 0, 1, 1], [], []>} : vector<64x32xbf16>, vector<32x32xbf16>, vector<64x32xf32> -> vector<64x32xf32>
    %38 = arith.addf %33, %37 : vector<64x32xf32>
    %c9 = arith.constant 9 : index
    %c0_30 = arith.constant 0 : index
    %39 = vector.load %arg14[%c9, %c0_30] : memref<96x32xbf16, #tpu.memory_space<vmem>>, vector<64x32xbf16>
    %c0_31 = arith.constant 0 : index
    %c0_32 = arith.constant 0 : index
    %40 = vector.load %arg12[%c0_31, %c0_32] : memref<64x1xbf16, #tpu.memory_space<vmem>>, vector<64x1xbf16>
    %41 = vector.broadcast %40 : vector<64x1xbf16> to vector<64x32xbf16>
    %42 = arith.mulf %39, %41 : vector<64x32xbf16>
    %c2 = arith.constant 2 : index
    %c0_33 = arith.constant 0 : index
    %c0_34 = arith.constant 0 : index
    %43 = vector.load %arg7[%c2, %c0_33, %c0_34] : memref<9x32x32xbf16, #tpu.memory_space<vmem>>, vector<1x32x32xbf16>
    %44 = vector.shape_cast %43 : vector<1x32x32xbf16> to vector<32x32xbf16>
    %cst_35 = arith.constant dense<0.000000e+00> : vector<64x32xf32>
    %45 = tpu.matmul %42, %44, %cst_35 {dimension_numbers = #tpu.dot_dimension_numbers<[1], [0], [0], [1], [0, 0, 1, 1], [], []>} : vector<64x32xbf16>, vector<32x32xbf16>, vector<64x32xf32> -> vector<64x32xf32>
    %46 = arith.addf %38, %45 : vector<64x32xf32>
    %c15 = arith.constant 15 : index
    %c0_36 = arith.constant 0 : index
    %47 = vector.load %arg14[%c15, %c0_36] : memref<96x32xbf16, #tpu.memory_space<vmem>>, vector<64x32xbf16>
    %c0_37 = arith.constant 0 : index
    %c0_38 = arith.constant 0 : index
    %48 = vector.load %arg11[%c0_37, %c0_38] : memref<64x1xbf16, #tpu.memory_space<vmem>>, vector<64x1xbf16>
    %49 = vector.broadcast %48 : vector<64x1xbf16> to vector<64x32xbf16>
    %50 = arith.mulf %47, %49 : vector<64x32xbf16>
    %c3 = arith.constant 3 : index
    %c0_39 = arith.constant 0 : index
    %c0_40 = arith.constant 0 : index
    %51 = vector.load %arg7[%c3, %c0_39, %c0_40] : memref<9x32x32xbf16, #tpu.memory_space<vmem>>, vector<1x32x32xbf16>
    %52 = vector.shape_cast %51 : vector<1x32x32xbf16> to vector<32x32xbf16>
    %cst_41 = arith.constant dense<0.000000e+00> : vector<64x32xf32>
    %53 = tpu.matmul %50, %52, %cst_41 {dimension_numbers = #tpu.dot_dimension_numbers<[1], [0], [0], [1], [0, 0, 1, 1], [], []>} : vector<64x32xbf16>, vector<32x32xbf16>, vector<64x32xf32> -> vector<64x32xf32>
    %54 = arith.addf %46, %53 : vector<64x32xf32>
    %c16_42 = arith.constant 16 : index
    %c0_43 = arith.constant 0 : index
    %55 = vector.load %arg14[%c16_42, %c0_43] : memref<96x32xbf16, #tpu.memory_space<vmem>>, vector<64x32xbf16>
    %c4 = arith.constant 4 : index
    %c0_44 = arith.constant 0 : index
    %c0_45 = arith.constant 0 : index
    %56 = vector.load %arg7[%c4, %c0_44, %c0_45] : memref<9x32x32xbf16, #tpu.memory_space<vmem>>, vector<1x32x32xbf16>
    %57 = vector.shape_cast %56 : vector<1x32x32xbf16> to vector<32x32xbf16>
    %cst_46 = arith.constant dense<0.000000e+00> : vector<64x32xf32>
    %58 = tpu.matmul %55, %57, %cst_46 {dimension_numbers = #tpu.dot_dimension_numbers<[1], [0], [0], [1], [0, 0, 1, 1], [], []>} : vector<64x32xbf16>, vector<32x32xbf16>, vector<64x32xf32> -> vector<64x32xf32>
    %59 = arith.addf %54, %58 : vector<64x32xf32>
    %c17 = arith.constant 17 : index
    %c0_47 = arith.constant 0 : index
    %60 = vector.load %arg14[%c17, %c0_47] : memref<96x32xbf16, #tpu.memory_space<vmem>>, vector<64x32xbf16>
    %c0_48 = arith.constant 0 : index
    %c0_49 = arith.constant 0 : index
    %61 = vector.load %arg12[%c0_48, %c0_49] : memref<64x1xbf16, #tpu.memory_space<vmem>>, vector<64x1xbf16>
    %62 = vector.broadcast %61 : vector<64x1xbf16> to vector<64x32xbf16>
    %63 = arith.mulf %60, %62 : vector<64x32xbf16>
    %c5 = arith.constant 5 : index
    %c0_50 = arith.constant 0 : index
    %c0_51 = arith.constant 0 : index
    %64 = vector.load %arg7[%c5, %c0_50, %c0_51] : memref<9x32x32xbf16, #tpu.memory_space<vmem>>, vector<1x32x32xbf16>
    %65 = vector.shape_cast %64 : vector<1x32x32xbf16> to vector<32x32xbf16>
    %cst_52 = arith.constant dense<0.000000e+00> : vector<64x32xf32>
    %66 = tpu.matmul %63, %65, %cst_52 {dimension_numbers = #tpu.dot_dimension_numbers<[1], [0], [0], [1], [0, 0, 1, 1], [], []>} : vector<64x32xbf16>, vector<32x32xbf16>, vector<64x32xf32> -> vector<64x32xf32>
    %67 = arith.addf %59, %66 : vector<64x32xf32>
    %c23 = arith.constant 23 : index
    %c0_53 = arith.constant 0 : index
    %68 = vector.load %arg14[%c23, %c0_53] : memref<96x32xbf16, #tpu.memory_space<vmem>>, vector<64x32xbf16>
    %c0_54 = arith.constant 0 : index
    %c0_55 = arith.constant 0 : index
    %69 = vector.load %arg11[%c0_54, %c0_55] : memref<64x1xbf16, #tpu.memory_space<vmem>>, vector<64x1xbf16>
    %70 = vector.broadcast %69 : vector<64x1xbf16> to vector<64x32xbf16>
    %71 = arith.mulf %68, %70 : vector<64x32xbf16>
    %c6 = arith.constant 6 : index
    %c0_56 = arith.constant 0 : index
    %c0_57 = arith.constant 0 : index
    %72 = vector.load %arg7[%c6, %c0_56, %c0_57] : memref<9x32x32xbf16, #tpu.memory_space<vmem>>, vector<1x32x32xbf16>
    %73 = vector.shape_cast %72 : vector<1x32x32xbf16> to vector<32x32xbf16>
    %cst_58 = arith.constant dense<0.000000e+00> : vector<64x32xf32>
    %74 = tpu.matmul %71, %73, %cst_58 {dimension_numbers = #tpu.dot_dimension_numbers<[1], [0], [0], [1], [0, 0, 1, 1], [], []>} : vector<64x32xbf16>, vector<32x32xbf16>, vector<64x32xf32> -> vector<64x32xf32>
    %75 = arith.addf %67, %74 : vector<64x32xf32>
    %c24 = arith.constant 24 : index
    %c0_59 = arith.constant 0 : index
    %76 = vector.load %arg14[%c24, %c0_59] : memref<96x32xbf16, #tpu.memory_space<vmem>>, vector<64x32xbf16>
    %c7_60 = arith.constant 7 : index
    %c0_61 = arith.constant 0 : index
    %c0_62 = arith.constant 0 : index
    %77 = vector.load %arg7[%c7_60, %c0_61, %c0_62] : memref<9x32x32xbf16, #tpu.memory_space<vmem>>, vector<1x32x32xbf16>
    %78 = vector.shape_cast %77 : vector<1x32x32xbf16> to vector<32x32xbf16>
    %cst_63 = arith.constant dense<0.000000e+00> : vector<64x32xf32>
    %79 = tpu.matmul %76, %78, %cst_63 {dimension_numbers = #tpu.dot_dimension_numbers<[1], [0], [0], [1], [0, 0, 1, 1], [], []>} : vector<64x32xbf16>, vector<32x32xbf16>, vector<64x32xf32> -> vector<64x32xf32>
    %80 = arith.addf %75, %79 : vector<64x32xf32>
    %c25 = arith.constant 25 : index
    %c0_64 = arith.constant 0 : index
    %81 = vector.load %arg14[%c25, %c0_64] : memref<96x32xbf16, #tpu.memory_space<vmem>>, vector<64x32xbf16>
    %c0_65 = arith.constant 0 : index
    %c0_66 = arith.constant 0 : index
    %82 = vector.load %arg12[%c0_65, %c0_66] : memref<64x1xbf16, #tpu.memory_space<vmem>>, vector<64x1xbf16>
    %83 = vector.broadcast %82 : vector<64x1xbf16> to vector<64x32xbf16>
    %84 = arith.mulf %81, %83 : vector<64x32xbf16>
    %c8_67 = arith.constant 8 : index
    %c0_68 = arith.constant 0 : index
    %c0_69 = arith.constant 0 : index
    %85 = vector.load %arg7[%c8_67, %c0_68, %c0_69] : memref<9x32x32xbf16, #tpu.memory_space<vmem>>, vector<1x32x32xbf16>
    %86 = vector.shape_cast %85 : vector<1x32x32xbf16> to vector<32x32xbf16>
    %cst_70 = arith.constant dense<0.000000e+00> : vector<64x32xf32>
    %87 = tpu.matmul %84, %86, %cst_70 {dimension_numbers = #tpu.dot_dimension_numbers<[1], [0], [0], [1], [0, 0, 1, 1], [], []>} : vector<64x32xbf16>, vector<32x32xbf16>, vector<64x32xf32> -> vector<64x32xf32>
    %88 = arith.addf %80, %87 : vector<64x32xf32>
    %c0_71 = arith.constant 0 : index
    %c0_72 = arith.constant 0 : index
    %89 = vector.load %arg8[%c0_71, %c0_72] : memref<1x32xf32, #tpu.memory_space<vmem>>, vector<1x32xf32>
    %90 = vector.broadcast %89 : vector<1x32xf32> to vector<64x32xf32>
    %91 = arith.mulf %88, %90 : vector<64x32xf32>
    %c0_73 = arith.constant 0 : index
    %c0_74 = arith.constant 0 : index
    %92 = vector.load %arg9[%c0_73, %c0_74] : memref<1x32xf32, #tpu.memory_space<vmem>>, vector<1x32xf32>
    %93 = vector.broadcast %92 : vector<1x32xf32> to vector<64x32xf32>
    %94 = arith.addf %91, %93 : vector<64x32xf32>
    %cst_75 = arith.constant 0.000000e+00 : f32
    %95 = vector.broadcast %cst_75 : f32 to vector<64x32xf32>
    %96 = arith.maximumf %94, %95 : vector<64x32xf32>
    %97 = arith.truncf %96 : vector<64x32xf32> to vector<64x32xbf16>
    %c0_76 = arith.constant 0 : index
    %c0_77 = arith.constant 0 : index
    %98 = vector.load %arg10[%c0_76, %c0_77] : memref<32x128xbf16, #tpu.memory_space<vmem>>, vector<32x128xbf16>
    %cst_78 = arith.constant dense<0.000000e+00> : vector<64x128xf32>
    %99 = tpu.matmul %97, %98, %cst_78 {dimension_numbers = #tpu.dot_dimension_numbers<[1], [0], [0], [1], [0, 0, 1, 1], [], []>} : vector<64x32xbf16>, vector<32x128xbf16>, vector<64x128xf32> -> vector<64x128xf32>
    %100 = arith.addf %1, %99 : vector<64x128xf32>
    %c0_79 = arith.constant 0 : index
    %c0_80 = arith.constant 0 : index
    %c0_81 = arith.constant 0 : index
    %101 = vector.load %arg13[%c0_79, %c0_80, %c0_81] : memref<1x64x128xf32, #tpu.memory_space<vmem>>, vector<1x64x128xf32>
    %102 = vector.shape_cast %101 : vector<1x64x128xf32> to vector<64x128xf32>
    %103 = vector.shape_cast %100 : vector<64x128xf32> to vector<1x64x128xf32>
    tpu.vector_store %arg13[%c0_79, %c0_80, %c0_81], %103 {strides = array<i32>} : memref<1x64x128xf32, #tpu.memory_space<vmem>>, vector<1x64x128xf32>,
    return
  }
  func.func @transform_0(%arg0: i32) -> (i32, i32, i32) {
    %c0_i32 = arith.constant 0 : i32
    %c0_i32_0 = arith.constant 0 : i32
    %c0_i32_1 = arith.constant 0 : i32
    return %arg0, %c0_i32, %c0_i32_0 : i32, i32, i32
  }
  func.func @transform_1(%arg0: i32) -> (i32, i32) {
    %c0_i32 = arith.constant 0 : i32
    %c0_i32_0 = arith.constant 0 : i32
    %c0_i32_1 = arith.constant 0 : i32
    return %c0_i32, %c0_i32_0 : i32, i32
  }
  func.func @transform_2(%arg0: i32) -> (i32, i32) {
    %c0_i32 = arith.constant 0 : i32
    %c0_i32_0 = arith.constant 0 : i32
    %c0_i32_1 = arith.constant 0 : i32
    return %c0_i32, %c0_i32_0 : i32, i32
  }
  func.func @transform_3(%arg0: i32) -> (i32, i32) {
    %c0_i32 = arith.constant 0 : i32
    %c0_i32_0 = arith.constant 0 : i32
    %c0_i32_1 = arith.constant 0 : i32
    return %c0_i32, %c0_i32_0 : i32, i32
  }
  func.func @transform_4(%arg0: i32) -> (i32, i32) {
    %c0_i32 = arith.constant 0 : i32
    %c0_i32_0 = arith.constant 0 : i32
    %c0_i32_1 = arith.constant 0 : i32
    return %c0_i32, %c0_i32_0 : i32, i32
  }
  func.func @transform_5(%arg0: i32) -> (i32, i32) {
    %c0_i32 = arith.constant 0 : i32
    %c0_i32_0 = arith.constant 0 : i32
    %c0_i32_1 = arith.constant 0 : i32
    return %c0_i32, %c0_i32_0 : i32, i32
  }
  func.func @transform_6(%arg0: i32) -> (i32, i32, i32) {
    %c0_i32 = arith.constant 0 : i32
    %c0_i32_0 = arith.constant 0 : i32
    %c0_i32_1 = arith.constant 0 : i32
    %c0_i32_2 = arith.constant 0 : i32
    return %c0_i32, %c0_i32_0, %c0_i32_1 : i32, i32, i32
  }
  func.func @transform_7(%arg0: i32) -> (i32, i32) {
    %c0_i32 = arith.constant 0 : i32
    %c0_i32_0 = arith.constant 0 : i32
    %c0_i32_1 = arith.constant 0 : i32
    return %c0_i32, %c0_i32_0 : i32, i32
  }
  func.func @transform_8(%arg0: i32) -> (i32, i32) {
    %c0_i32 = arith.constant 0 : i32
    %c0_i32_0 = arith.constant 0 : i32
    %c0_i32_1 = arith.constant 0 : i32
    return %c0_i32, %c0_i32_0 : i32, i32
  }
  func.func @transform_9(%arg0: i32) -> (i32, i32) {
    %c0_i32 = arith.constant 0 : i32
    %c0_i32_0 = arith.constant 0 : i32
    %c0_i32_1 = arith.constant 0 : i32
    return %c0_i32, %c0_i32_0 : i32, i32
  }
  func.func @transform_10(%arg0: i32) -> (i32, i32) {
    %c0_i32 = arith.constant 0 : i32
    %c0_i32_0 = arith.constant 0 : i32
    %c0_i32_1 = arith.constant 0 : i32
    return %c0_i32, %c0_i32_0 : i32, i32
  }
  func.func @transform_11(%arg0: i32) -> (i32, i32) {
    %c0_i32 = arith.constant 0 : i32
    %c0_i32_0 = arith.constant 0 : i32
    %c0_i32_1 = arith.constant 0 : i32
    return %c0_i32, %c0_i32_0 : i32, i32
  }
  func.func @transform_12(%arg0: i32) -> (i32, i32, i32) {
    %c0_i32 = arith.constant 0 : i32
    %c0_i32_0 = arith.constant 0 : i32
    %c0_i32_1 = arith.constant 0 : i32
    return %arg0, %c0_i32, %c0_i32_0 : i32, i32, i32
  }
}

</mosaic_0001>

<llo_original>
// kernel: downsample_forward.2
$region0: #{downsample_forward.2}
  #allocation0 [shape = 'u32[]', space=smem, size = 0x4, offset = 0x4, fixed_abs, tag = 'smem constant byte address 0x4 - core index']
  #allocation1 [shape = 'u32[144,128]{1,0:T(1,128)}', space=vmem, size = 0x12000, scoped, tag = 'internal scratch']
  #allocation2 [shape = 'bf16[96,32]{1,0:T(8,128)(2,1)}', space=vmem, size = 0x6000, scoped, tag = 'scratch operand']
  %s0 = inlined_call_operand.vmem [shape: f32[2,18,9,64], index: 0, kind: input, shape index: {}]
  %s1 = inlined_call_operand.vmem [shape: f32[2,18,9,64], index: 1, kind: input, shape index: {}]
  %s2 = inlined_call_operand.vmem [shape: f32[1,64], index: 2, kind: input, shape index: {}]
  %s3 = inlined_call_operand.vmem [shape: f32[1,64], index: 3, kind: input, shape index: {}]
  %s4 = inlined_call_operand.vmem [shape: bf16[64,32], index: 4, kind: input, shape index: {}]
  %s5 = inlined_call_operand.vmem [shape: f32[1,32], index: 5, kind: input, shape index: {}]
  %s6 = inlined_call_operand.vmem [shape: f32[1,32], index: 6, kind: input, shape index: {}]
  %s7 = inlined_call_operand.vmem [shape: bf16[9,32,32], index: 7, kind: input, shape index: {}]
  %s8 = inlined_call_operand.vmem [shape: f32[1,32], index: 8, kind: input, shape index: {}]
  %s9 = inlined_call_operand.vmem [shape: f32[1,32], index: 9, kind: input, shape index: {}]
  %s10 = inlined_call_operand.vmem [shape: bf16[32,128], index: 10, kind: input, shape index: {}]
  %s11 = inlined_call_operand.vmem [shape: bf16[64,1], index: 11, kind: input, shape index: {}]
  %s12 = inlined_call_operand.vmem [shape: bf16[64,1], index: 12, kind: input, shape index: {}]
  %s13 = inlined_call_operand.vmem [shape: bf16[64,128], index: 13, kind: input, shape index: {}]
  %s14 = inlined_call_operand.vmem [shape: f32[1,128], index: 14, kind: input, shape index: {}]
  %s15 = inlined_call_operand.vmem [shape: f32[1,128], index: 15, kind: input, shape index: {}]
  %s16 = inlined_call_operand.vmem [shape: f32[2,64,128], index: 16, kind: output, shape index: {}]
  %s17 = sld [smem:[#allocation0]]
  $region97: #{downsample_forward.2} parent=0
    _
  %s19 = ssub.s32 1, %s17
  %s20 = scalar_select 0, %s19, %s17
  loop: start=0, step=1, limit=4
  $region2: #{downsample_forward.2} parent=0 // loop_pre_header
    _
  $region3: #{downsample_forward.2} parent=0 // loop_header
    %s22 = sphi 0, %s26
    %p23 = scmp.ge.s32.totalorder %s22, 4
    %s32 = sphi 0, %s34
    %s35 = sphi 0, %s32
    %s36 = sphi 0, %s35
    %s52 = sphi 0, %s36
    %s58 = sphi 0, %s60
    %s61 = sphi 0, %s58
    %s62 = sphi 0, %s61
    %s78 = sphi 0, %s62
    %s82 = sphi 0, %s82
    %s84 = sphi 0, %s82
    %s85 = sphi 0, %s84
    %s99 = sphi 0, %s85
    %s103 = sphi 0, %s103
    %s105 = sphi 0, %s103
    %s106 = sphi 0, %s105
    %s120 = sphi 0, %s106
    %s124 = sphi 0, %s124
    %s126 = sphi 0, %s124
    %s127 = sphi 0, %s126
    %s141 = sphi 0, %s127
    %s145 = sphi 0, %s145
    %s147 = sphi 0, %s145
    %s148 = sphi 0, %s147
    %s162 = sphi 0, %s148
    %s166 = sphi 0, %s166
    %s168 = sphi 0, %s166
    %s169 = sphi 0, %s168
    %s183 = sphi 0, %s169
    %s187 = sphi 0, %s187
    %s189 = sphi 0, %s187
    %s190 = sphi 0, %s189
    %s204 = sphi 0, %s190
    %s208 = sphi 0, %s208
    %s210 = sphi 0, %s208
    %s211 = sphi 0, %s210
    %s225 = sphi 0, %s211
    %s229 = sphi 0, %s229
    %s231 = sphi 0, %s229
    %s232 = sphi 0, %s231
    %s246 = sphi 0, %s232
    %s250 = sphi 0, %s250
    %s252 = sphi 0, %s250
    %s253 = sphi 0, %s252
    %s267 = sphi 0, %s253
    %s271 = sphi 0, %s271
    %s273 = sphi 0, %s271
    %s274 = sphi 0, %s273
    %s288 = sphi 0, %s274
    %s292 = sphi 0, %s292
    %s294 = sphi 0, %s292
    %s295 = sphi 0, %s294
    %s309 = sphi 0, %s295
    %s313 = sphi 0, %s313
    %s315 = sphi 0, %s313
    %s316 = sphi 0, %s315
    %s330 = sphi 0, %s316
    %s334 = sphi 0, %s334
    %s336 = sphi 0, %s334
    %s337 = sphi 0, %s336
    %s351 = sphi 0, %s337
    %s355 = sphi 0, %s355
    %s357 = sphi 0, %s355
    %s358 = sphi 0, %s357
    %s372 = sphi 0, %s358
    %s378 = sphi 0, %s380
    %s381 = sphi 0, %s378
    %s382 = sphi 0, %s381
    %s398 = sphi 0, %s382
  $region4: #{downsample_forward.2} parent=0 // loop_header_branch
    %25 = sbr.rel (%p23) target = $region8
  $region5: #{downsample_forward.2} parent=0 // loop_body
    %s27 = ssub.s32 %s22, 1
    %s28 = ssub.s32 %s22, 2
    %s29 = sadd.s32 %s22, 1
    %s30 = ssub.s32 %s22, %s29
    %p31 = scmp.eq.s32.totalorder %s30, 0
    %s33 = sadd.s32 %s32, 1
    %s34 = scalar_select %p31, %s32, %s33
    %p37 = pneg %p31
    %p38 = scmp.eq.s32.totalorder %s22, 1
    %p39 = por %p37, %p38
    %p40 = scmp.ne.s32.totalorder %s32, %s35
    %p41 = scmp.eq.s32.totalorder %s22, 0
    %p42 = por %p40, %p41
    %p43 = scmp.ne.s32.totalorder %s32, %s35
    %p44 = scmp.eq.s32.totalorder %s27, 1
    %p45 = por %p43, %p44
    %p46 = scmp.ne.s32.totalorder %s35, %s36
    %p47 = scmp.eq.s32.totalorder %s27, 0
    %p48 = por %p46, %p47
    %p49 = scmp.ne.s32.totalorder %s35, %s36
    %p50 = scmp.eq.s32.totalorder %s28, 1
    %p51 = por %p49, %p50
    %p53 = scmp.ne.s32.totalorder %s36, %s52
    %p54 = scmp.eq.s32.totalorder %s28, 0
    %p55 = por %p53, %p54
    %s56 = ssub.s32 %s22, %s29
    %p57 = scmp.eq.s32.totalorder %s56, 0
    %s59 = sadd.s32 %s58, 1
    %s60 = scalar_select %p57, %s58, %s59
    %p63 = pneg %p57
    %p64 = scmp.eq.s32.totalorder %s22, 1
    %p65 = por %p63, %p64
    %p66 = scmp.ne.s32.totalorder %s58, %s61
    %p67 = scmp.eq.s32.totalorder %s22, 0
    %p68 = por %p66, %p67
    %p69 = scmp.ne.s32.totalorder %s58, %s61
    %p70 = scmp.eq.s32.totalorder %s27, 1
    %p71 = por %p69, %p70
    %p72 = scmp.ne.s32.totalorder %s61, %s62
    %p73 = scmp.eq.s32.totalorder %s27, 0
    %p74 = por %p72, %p73
    %p75 = scmp.ne.s32.totalorder %s61, %s62
    %p76 = scmp.eq.s32.totalorder %s28, 1
    %p77 = por %p75, %p76
    %p79 = scmp.ne.s32.totalorder %s62, %s78
    %p80 = scmp.eq.s32.totalorder %s28, 0
    %p81 = por %p79, %p80
    %s83 = sadd.s32 %s82, 1
    %p86 = scmp.eq.s32.totalorder %s22, 1
    %p87 = scmp.ne.s32.totalorder %s82, %s84
    %p88 = scmp.eq.s32.totalorder %s22, 0
    %p89 = por %p87, %p88
    %p90 = scmp.ne.s32.totalorder %s82, %s84
    %p91 = scmp.eq.s32.totalorder %s27, 1
    %p92 = por %p90, %p91
    %p93 = scmp.ne.s32.totalorder %s84, %s85
    %p94 = scmp.eq.s32.totalorder %s27, 0
    %p95 = por %p93, %p94
    %p96 = scmp.ne.s32.totalorder %s84, %s85
    %p97 = scmp.eq.s32.totalorder %s28, 1
    %p98 = por %p96, %p97
    %p100 = scmp.ne.s32.totalorder %s85, %s99
    %p101 = scmp.eq.s32.totalorder %s28, 0
    %p102 = por %p100, %p101
    %s104 = sadd.s32 %s103, 1
    %p107 = scmp.eq.s32.totalorder %s22, 1
    %p108 = scmp.ne.s32.totalorder %s103, %s105
    %p109 = scmp.eq.s32.totalorder %s22, 0
    %p110 = por %p108, %p109
    %p111 = scmp.ne.s32.totalorder %s103, %s105
    %p112 = scmp.eq.s32.totalorder %s27, 1
    %p113 = por %p111, %p112
    %p114 = scmp.ne.s32.totalorder %s105, %s106
    %p115 = scmp.eq.s32.totalorder %s27, 0
    %p116 = por %p114, %p115
    %p117 = scmp.ne.s32.totalorder %s105, %s106
    %p118 = scmp.eq.s32.totalorder %s28, 1
    %p119 = por %p117, %p118
    %p121 = scmp.ne.s32.totalorder %s106, %s120
    %p122 = scmp.eq.s32.totalorder %s28, 0
    %p123 = por %p121, %p122
    %s125 = sadd.s32 %s124, 1
    %p128 = scmp.eq.s32.totalorder %s22, 1
    %p129 = scmp.ne.s32.totalorder %s124, %s126
    %p130 = scmp.eq.s32.totalorder %s22, 0
    %p131 = por %p129, %p130
    %p132 = scmp.ne.s32.totalorder %s124, %s126
    %p133 = scmp.eq.s32.totalorder %s27, 1
    %p134 = por %p132, %p133
    %p135 = scmp.ne.s32.totalorder %s126, %s127
    %p136 = scmp.eq.s32.totalorder %s27, 0
    %p137 = por %p135, %p136
    %p138 = scmp.ne.s32.totalorder %s126, %s127
    %p139 = scmp.eq.s32.totalorder %s28, 1
    %p140 = por %p138, %p139
    %p142 = scmp.ne.s32.totalorder %s127, %s141
    %p143 = scmp.eq.s32.totalorder %s28, 0
    %p144 = por %p142, %p143
    %s146 = sadd.s32 %s145, 1
    %p149 = scmp.eq.s32.totalorder %s22, 1
    %p150 = scmp.ne.s32.totalorder %s145, %s147
    %p151 = scmp.eq.s32.totalorder %s22, 0
    %p152 = por %p150, %p151
    %p153 = scmp.ne.s32.totalorder %s145, %s147
    %p154 = scmp.eq.s32.totalorder %s27, 1
    %p155 = por %p153, %p154
    %p156 = scmp.ne.s32.totalorder %s147, %s148
    %p157 = scmp.eq.s32.totalorder %s27, 0
    %p158 = por %p156, %p157
    %p159 = scmp.ne.s32.totalorder %s147, %s148
    %p160 = scmp.eq.s32.totalorder %s28, 1
    %p161 = por %p159, %p160
    %p163 = scmp.ne.s32.totalorder %s148, %s162
    %p164 = scmp.eq.s32.totalorder %s28, 0
    %p165 = por %p163, %p164
    %s167 = sadd.s32 %s166, 1
    %p170 = scmp.eq.s32.totalorder %s22, 1
    %p171 = scmp.ne.s32.totalorder %s166, %s168
    %p172 = scmp.eq.s32.totalorder %s22, 0
    %p173 = por %p171, %p172
    %p174 = scmp.ne.s32.totalorder %s166, %s168
    %p175 = scmp.eq.s32.totalorder %s27, 1
    %p176 = por %p174, %p175
    %p177 = scmp.ne.s32.totalorder %s168, %s169
    %p178 = scmp.eq.s32.totalorder %s27, 0
    %p179 = por %p177, %p178
    %p180 = scmp.ne.s32.totalorder %s168, %s169
    %p181 = scmp.eq.s32.totalorder %s28, 1
    %p182 = por %p180, %p181
    %p184 = scmp.ne.s32.totalorder %s169, %s183
    %p185 = scmp.eq.s32.totalorder %s28, 0
    %p186 = por %p184, %p185
    %s188 = sadd.s32 %s187, 1
    %p191 = scmp.eq.s32.totalorder %s22, 1
    %p192 = scmp.ne.s32.totalorder %s187, %s189
    %p193 = scmp.eq.s32.totalorder %s22, 0
    %p194 = por %p192, %p193
    %p195 = scmp.ne.s32.totalorder %s187, %s189
    %p196 = scmp.eq.s32.totalorder %s27, 1
    %p197 = por %p195, %p196
    %p198 = scmp.ne.s32.totalorder %s189, %s190
    %p199 = scmp.eq.s32.totalorder %s27, 0
    %p200 = por %p198, %p199
    %p201 = scmp.ne.s32.totalorder %s189, %s190
    %p202 = scmp.eq.s32.totalorder %s28, 1
    %p203 = por %p201, %p202
    %p205 = scmp.ne.s32.totalorder %s190, %s204
    %p206 = scmp.eq.s32.totalorder %s28, 0
    %p207 = por %p205, %p206
    %s209 = sadd.s32 %s208, 1
    %p212 = scmp.eq.s32.totalorder %s22, 1
    %p213 = scmp.ne.s32.totalorder %s208, %s210
    %p214 = scmp.eq.s32.totalorder %s22, 0
    %p215 = por %p213, %p214
    %p216 = scmp.ne.s32.totalorder %s208, %s210
    %p217 = scmp.eq.s32.totalorder %s27, 1
    %p218 = por %p216, %p217
    %p219 = scmp.ne.s32.totalorder %s210, %s211
    %p220 = scmp.eq.s32.totalorder %s27, 0
    %p221 = por %p219, %p220
    %p222 = scmp.ne.s32.totalorder %s210, %s211
    %p223 = scmp.eq.s32.totalorder %s28, 1
    %p224 = por %p222, %p223
    %p226 = scmp.ne.s32.totalorder %s211, %s225
    %p227 = scmp.eq.s32.totalorder %s28, 0
    %p228 = por %p226, %p227
    %s230 = sadd.s32 %s229, 1
    %p233 = scmp.eq.s32.totalorder %s22, 1
    %p234 = scmp.ne.s32.totalorder %s229, %s231
    %p235 = scmp.eq.s32.totalorder %s22, 0
    %p236 = por %p234, %p235
    %p237 = scmp.ne.s32.totalorder %s229, %s231
    %p238 = scmp.eq.s32.totalorder %s27, 1
    %p239 = por %p237, %p238
    %p240 = scmp.ne.s32.totalorder %s231, %s232
    %p241 = scmp.eq.s32.totalorder %s27, 0
    %p242 = por %p240, %p241
    %p243 = scmp.ne.s32.totalorder %s231, %s232
    %p244 = scmp.eq.s32.totalorder %s28, 1
    %p245 = por %p243, %p244
    %p247 = scmp.ne.s32.totalorder %s232, %s246
    %p248 = scmp.eq.s32.totalorder %s28, 0
    %p249 = por %p247, %p248
    %s251 = sadd.s32 %s250, 1
    %p254 = scmp.eq.s32.totalorder %s22, 1
    %p255 = scmp.ne.s32.totalorder %s250, %s252
    %p256 = scmp.eq.s32.totalorder %s22, 0
    %p257 = por %p255, %p256
    %p258 = scmp.ne.s32.totalorder %s250, %s252
    %p259 = scmp.eq.s32.totalorder %s27, 1
    %p260 = por %p258, %p259
    %p261 = scmp.ne.s32.totalorder %s252, %s253
    %p262 = scmp.eq.s32.totalorder %s27, 0
    %p263 = por %p261, %p262
    %p264 = scmp.ne.s32.totalorder %s252, %s253
    %p265 = scmp.eq.s32.totalorder %s28, 1
    %p266 = por %p264, %p265
    %p268 = scmp.ne.s32.totalorder %s253, %s267
    %p269 = scmp.eq.s32.totalorder %s28, 0
    %p270 = por %p268, %p269
    %s272 = sadd.s32 %s271, 1
    %p275 = scmp.eq.s32.totalorder %s22, 1
    %p276 = scmp.ne.s32.totalorder %s271, %s273
    %p277 = scmp.eq.s32.totalorder %s22, 0
    %p278 = por %p276, %p277
    %p279 = scmp.ne.s32.totalorder %s271, %s273
    %p280 = scmp.eq.s32.totalorder %s27, 1
    %p281 = por %p279, %p280
    %p282 = scmp.ne.s32.totalorder %s273, %s274
    %p283 = scmp.eq.s32.totalorder %s27, 0
    %p284 = por %p282, %p283
    %p285 = scmp.ne.s32.totalorder %s273, %s274
    %p286 = scmp.eq.s32.totalorder %s28, 1
    %p287 = por %p285, %p286
    %p289 = scmp.ne.s32.totalorder %s274, %s288
    %p290 = scmp.eq.s32.totalorder %s28, 0
    %p291 = por %p289, %p290
    %s293 = sadd.s32 %s292, 1
    %p296 = scmp.eq.s32.totalorder %s22, 1
    %p297 = scmp.ne.s32.totalorder %s292, %s294
    %p298 = scmp.eq.s32.totalorder %s22, 0
    %p299 = por %p297, %p298
    %p300 = scmp.ne.s32.totalorder %s292, %s294
    %p301 = scmp.eq.s32.totalorder %s27, 1
    %p302 = por %p300, %p301
    %p303 = scmp.ne.s32.totalorder %s294, %s295
    %p304 = scmp.eq.s32.totalorder %s27, 0
    %p305 = por %p303, %p304
    %p306 = scmp.ne.s32.totalorder %s294, %s295
    %p307 = scmp.eq.s32.totalorder %s28, 1
    %p308 = por %p306, %p307
    %p310 = scmp.ne.s32.totalorder %s295, %s309
    %p311 = scmp.eq.s32.totalorder %s28, 0
    %p312 = por %p310, %p311
    %s314 = sadd.s32 %s313, 1
    %p317 = scmp.eq.s32.totalorder %s22, 1
    %p318 = scmp.ne.s32.totalorder %s313, %s315
    %p319 = scmp.eq.s32.totalorder %s22, 0
    %p320 = por %p318, %p319
    %p321 = scmp.ne.s32.totalorder %s313, %s315
    %p322 = scmp.eq.s32.totalorder %s27, 1
    %p323 = por %p321, %p322
    %p324 = scmp.ne.s32.totalorder %s315, %s316
    %p325 = scmp.eq.s32.totalorder %s27, 0
    %p326 = por %p324, %p325
    %p327 = scmp.ne.s32.totalorder %s315, %s316
    %p328 = scmp.eq.s32.totalorder %s28, 1
    %p329 = por %p327, %p328
    %p331 = scmp.ne.s32.totalorder %s316, %s330
    %p332 = scmp.eq.s32.totalorder %s28, 0
    %p333 = por %p331, %p332
    %s335 = sadd.s32 %s334, 1
    %p338 = scmp.eq.s32.totalorder %s22, 1
    %p339 = scmp.ne.s32.totalorder %s334, %s336
    %p340 = scmp.eq.s32.totalorder %s22, 0
    %p341 = por %p339, %p340
    %p342 = scmp.ne.s32.totalorder %s334, %s336
    %p343 = scmp.eq.s32.totalorder %s27, 1
    %p344 = por %p342, %p343
    %p345 = scmp.ne.s32.totalorder %s336, %s337
    %p346 = scmp.eq.s32.totalorder %s27, 0
    %p347 = por %p345, %p346
    %p348 = scmp.ne.s32.totalorder %s336, %s337
    %p349 = scmp.eq.s32.totalorder %s28, 1
    %p350 = por %p348, %p349
    %p352 = scmp.ne.s32.totalorder %s337, %s351
    %p353 = scmp.eq.s32.totalorder %s28, 0
    %p354 = por %p352, %p353
    %s356 = sadd.s32 %s355, 1
    %p359 = scmp.eq.s32.totalorder %s22, 1
    %p360 = scmp.ne.s32.totalorder %s355, %s357
    %p361 = scmp.eq.s32.totalorder %s22, 0
    %p362 = por %p360, %p361
    %p363 = scmp.ne.s32.totalorder %s355, %s357
    %p364 = scmp.eq.s32.totalorder %s27, 1
    %p365 = por %p363, %p364
    %p366 = scmp.ne.s32.totalorder %s357, %s358
    %p367 = scmp.eq.s32.totalorder %s27, 0
    %p368 = por %p366, %p367
    %p369 = scmp.ne.s32.totalorder %s357, %s358
    %p370 = scmp.eq.s32.totalorder %s28, 1
    %p371 = por %p369, %p370
    %p373 = scmp.ne.s32.totalorder %s358, %s372
    %p374 = scmp.eq.s32.totalorder %s28, 0
    %p375 = por %p373, %p374
    %s376 = ssub.s32 %s22, %s29
    %p377 = scmp.eq.s32.totalorder %s376, 0
    %s379 = sadd.s32 %s378, 1
    %s380 = scalar_select %p377, %s378, %s379
    %p383 = pneg %p377
    %p384 = scmp.eq.s32.totalorder %s22, 1
    %p385 = por %p383, %p384
    %p386 = scmp.ne.s32.totalorder %s378, %s381
    %p387 = scmp.eq.s32.totalorder %s22, 0
    %p388 = por %p386, %p387
    %p389 = scmp.ne.s32.totalorder %s378, %s381
    %p390 = scmp.eq.s32.totalorder %s27, 1
    %p391 = por %p389, %p390
    %p392 = scmp.ne.s32.totalorder %s381, %s382
    %p393 = scmp.eq.s32.totalorder %s27, 0
    %p394 = por %p392, %p393
    %p395 = scmp.ne.s32.totalorder %s381, %s382
    %p396 = scmp.eq.s32.totalorder %s28, 1
    %p397 = por %p395, %p396
    %p399 = scmp.ne.s32.totalorder %s382, %s398
    %p400 = scmp.eq.s32.totalorder %s28, 0
    %p401 = por %p399, %p400
    %p402 = scmp.le.s32.totalorder 1, %s22
    %p403 = scmp.lt.s32.totalorder %s22, 3
    %p404 = pnand %p402, %p403
    %p405 = pneg %p404
    // Predicated region
    $region9: #{downsample_forward.2} parent=5 // pred_check
      _
    $region10: #{downsample_forward.2} parent=5 // pred_check_branch
      %407 = sbr.rel (%p404) target = $region12
    $region11: #{downsample_forward.2} parent=5 // pred_region
      %s408 = ssub.s32 %s22, 1
      // Predicated region
      $region13: #{downsample_forward.2} parent=11 // pred_check
        %p409 = pneg %p95
      $region14: #{downsample_forward.2} parent=11 // pred_check_branch
        %411 = sbr.rel (%p409) target = $region16
      $region15: #{downsample_forward.2} parent=11 // pred_region
        _
      $region16: #{downsample_forward.2} parent=11 // pred_fallthru
        _
      // Predicated region
      $region17: #{downsample_forward.2} parent=11 // pred_check
        %p412 = pneg %p116
      $region18: #{downsample_forward.2} parent=11 // pred_check_branch
        %414 = sbr.rel (%p412) target = $region20
      $region19: #{downsample_forward.2} parent=11 // pred_region
        _
      $region20: #{downsample_forward.2} parent=11 // pred_fallthru
        _
      // Predicated region
      $region21: #{downsample_forward.2} parent=11 // pred_check
        %p415 = pneg %p137
      $region22: #{downsample_forward.2} parent=11 // pred_check_branch
        %417 = sbr.rel (%p415) target = $region24
      $region23: #{downsample_forward.2} parent=11 // pred_region
        _
      $region24: #{downsample_forward.2} parent=11 // pred_fallthru
        _
      // Predicated region
      $region25: #{downsample_forward.2} parent=11 // pred_check
        %p418 = pneg %p158
      $region26: #{downsample_forward.2} parent=11 // pred_check_branch
        %420 = sbr.rel (%p418) target = $region28
      $region27: #{downsample_forward.2} parent=11 // pred_region
        _
      $region28: #{downsample_forward.2} parent=11 // pred_fallthru
        _
      // Predicated region
      $region29: #{downsample_forward.2} parent=11 // pred_check
        %p421 = pneg %p179
      $region30: #{downsample_forward.2} parent=11 // pred_check_branch
        %423 = sbr.rel (%p421) target = $region32
      $region31: #{downsample_forward.2} parent=11 // pred_region
        _
      $region32: #{downsample_forward.2} parent=11 // pred_fallthru
        _
      // Predicated region
      $region33: #{downsample_forward.2} parent=11 // pred_check
        %p424 = pneg %p200
      $region34: #{downsample_forward.2} parent=11 // pred_check_branch
        %426 = sbr.rel (%p424) target = $region36
      $region35: #{downsample_forward.2} parent=11 // pred_region
        _
      $region36: #{downsample_forward.2} parent=11 // pred_fallthru
        _
      // Predicated region
      $region37: #{downsample_forward.2} parent=11 // pred_check
        %p427 = pneg %p221
      $region38: #{downsample_forward.2} parent=11 // pred_check_branch
        %429 = sbr.rel (%p427) target = $region40
      $region39: #{downsample_forward.2} parent=11 // pred_region
        _
      $region40: #{downsample_forward.2} parent=11 // pred_fallthru
        _
      // Predicated region
      $region41: #{downsample_forward.2} parent=11 // pred_check
        %p430 = pneg %p242
      $region42: #{downsample_forward.2} parent=11 // pred_check_branch
        %432 = sbr.rel (%p430) target = $region44
      $region43: #{downsample_forward.2} parent=11 // pred_region
        _
      $region44: #{downsample_forward.2} parent=11 // pred_fallthru
        _
      // Predicated region
      $region45: #{downsample_forward.2} parent=11 // pred_check
        %p433 = pneg %p263
      $region46: #{downsample_forward.2} parent=11 // pred_check_branch
        %435 = sbr.rel (%p433) target = $region48
      $region47: #{downsample_forward.2} parent=11 // pred_region
        _
      $region48: #{downsample_forward.2} parent=11 // pred_fallthru
        _
      // Predicated region
      $region49: #{downsample_forward.2} parent=11 // pred_check
        %p436 = pneg %p284
      $region50: #{downsample_forward.2} parent=11 // pred_check_branch
        %438 = sbr.rel (%p436) target = $region52
      $region51: #{downsample_forward.2} parent=11 // pred_region
        _
      $region52: #{downsample_forward.2} parent=11 // pred_fallthru
        _
      // Predicated region
      $region53: #{downsample_forward.2} parent=11 // pred_check
        %p439 = pneg %p305
      $region54: #{downsample_forward.2} parent=11 // pred_check_branch
        %441 = sbr.rel (%p439) target = $region56
      $region55: #{downsample_forward.2} parent=11 // pred_region
        _
      $region56: #{downsample_forward.2} parent=11 // pred_fallthru
        _
      // Predicated region
      $region57: #{downsample_forward.2} parent=11 // pred_check
        %p442 = pneg %p326
      $region58: #{downsample_forward.2} parent=11 // pred_check_branch
        %444 = sbr.rel (%p442) target = $region60
      $region59: #{downsample_forward.2} parent=11 // pred_region
        _
      $region60: #{downsample_forward.2} parent=11 // pred_fallthru
        _
      // Predicated region
      $region61: #{downsample_forward.2} parent=11 // pred_check
        %p445 = pneg %p347
      $region62: #{downsample_forward.2} parent=11 // pred_check_branch
        %447 = sbr.rel (%p445) target = $region64
      $region63: #{downsample_forward.2} parent=11 // pred_region
        _
      $region64: #{downsample_forward.2} parent=11 // pred_fallthru
        _
      // Predicated region
      $region65: #{downsample_forward.2} parent=11 // pred_check
        %p448 = pneg %p368
      $region66: #{downsample_forward.2} parent=11 // pred_check_branch
        %450 = sbr.rel (%p448) target = $region68
      $region67: #{downsample_forward.2} parent=11 // pred_region
        _
      $region68: #{downsample_forward.2} parent=11 // pred_fallthru
        _
    $region12: #{downsample_forward.2} parent=5 // pred_fallthru
      _
    %p451 = scmp.lt.s32.totalorder %s22, 2
    // Predicated region
    $region69: #{downsample_forward.2} parent=5 // pred_check
      %p452 = pneg %p451
    $region70: #{downsample_forward.2} parent=5 // pred_check_branch
      %454 = sbr.rel (%p452) target = $region72
    $region71: #{downsample_forward.2} parent=5 // pred_region
      // Predicated region
      $region73: #{downsample_forward.2} parent=71 // pred_check
        %p455 = pneg %p42
      $region74: #{downsample_forward.2} parent=71 // pred_check_branch
        %457 = sbr.rel (%p455) target = $region76
      $region75: #{downsample_forward.2} parent=71 // pred_region
        %p458 = scmp.lt.s32.totalorder %s22, 1
        %s459 = scalar_select %p458, %s22, 1
        %s460 = smul.addr %s459, 36
        %s461 = smul.addr %s460, 8
        %s462 = scalar_lea.vmem %s0, %s461
      $region76: #{downsample_forward.2} parent=71 // pred_fallthru
        _
      // Predicated region
      $region77: #{downsample_forward.2} parent=71 // pred_check
        %p463 = pneg %p68
      $region78: #{downsample_forward.2} parent=71 // pred_check_branch
        %465 = sbr.rel (%p463) target = $region80
      $region79: #{downsample_forward.2} parent=71 // pred_region
        %p466 = scmp.lt.s32.totalorder %s22, 1
        %s467 = scalar_select %p466, %s22, 1
        %s468 = smul.addr %s467, 36
        %s469 = smul.addr %s468, 8
        %s470 = scalar_lea.vmem %s1, %s469
      $region80: #{downsample_forward.2} parent=71 // pred_fallthru
        _
    $region72: #{downsample_forward.2} parent=5 // pred_fallthru
      _
    %p471 = scmp.le.s32.totalorder 1, %s22
    %p472 = scmp.lt.s32.totalorder %s22, 3
    %p473 = pnand %p471, %p472
    %p474 = pneg %p473
    // Predicated region
    $region81: #{downsample_forward.2} parent=5 // pred_check
      _
    $region82: #{downsample_forward.2} parent=5 // pred_check_branch
      %476 = sbr.rel (%p473) target = $region84
    $region83: #{downsample_forward.2} parent=5 // pred_region
      %s477 = ssub.s32 %s22, 1
      %p478 = scmp.lt.s32.totalorder %s27, 1
      %s479 = scalar_select %p478, %s27, 1
      %s480 = smul.addr %s479, 36
      %s481 = smul.addr %s480, 8
      %s482 = scalar_lea.vmem %s0, %s481
      %p483 = pneg %p48
      %p484 = pneg %p45
      %p485 = scmp.lt.s32.totalorder %s27, 1
      %s486 = scalar_select %p485, %s27, 1
      %s487 = smul.addr %s486, 36
      %s488 = smul.addr %s487, 8
      %s489 = scalar_lea.vmem %s1, %s488
      %p490 = pneg %p74
      %p491 = pneg %p71
      %p492 = pneg %p95
      %p493 = pneg %p92
      %p494 = pneg %p116
      %p495 = pneg %p113
      %p496 = pneg %p137
      %p497 = pneg %p134
      %p498 = pneg %p158
      %p499 = pneg %p155
      %p500 = pneg %p179
      %p501 = pneg %p176
      %p502 = pneg %p200
      %p503 = pneg %p197
      %p504 = pneg %p221
      %p505 = pneg %p218
      %p506 = pneg %p242
      %p507 = pneg %p239
      %p508 = pneg %p263
      %p509 = pneg %p260
      %p510 = pneg %p284
      %p511 = pneg %p281
      %p512 = pneg %p305
      %p513 = pneg %p302
      %p514 = pneg %p326
      %p515 = pneg %p323
      %p516 = pneg %p347
      %p517 = pneg %p344
      %p518 = pneg %p368
      %p519 = pneg %p365
      %p520 = pneg %p394
      %p521 = pneg %p391
      %p522 = scmp.lt.s32.totalorder %s27, 1
      %s523 = scalar_select %p522, %s27, 1
      %s524 = smul.addr %s523, 8
      %s525 = smul.addr %s524, 8
      %s526 = scalar_lea.vmem %s16, %s525
      %p527 = scmp.lt.s32.totalorder %s27, 1
      %s528 = scalar_select %p527, %s27, 1
      %s529 = smul.addr %s528, 36
      %s530 = smul.addr %s529, 8
      %s531 = scalar_lea.vmem %s0, %s530
      %p532 = scmp.lt.s32.totalorder %s27, 1
      %s533 = scalar_select %p532, %s27, 1
      %s534 = smul.addr %s533, 36
      %s535 = smul.addr %s534, 8
      %s536 = scalar_lea.vmem %s1, %s535
      %p537 = scmp.lt.s32.totalorder %s27, 1
      %s538 = scalar_select %p537, %s27, 1
      %s539 = smul.addr %s538, 8
      %s540 = smul.addr %s539, 8
      %s541 = scalar_lea.vmem %s16, %s540
      %v543 = vld [vmem:[%s531] sm:$0xff]
      %v544 = vld [vmem:[%s531 + $0x8] sm:$0x1]
      %v545 = vld [vmem:[%s531 + $0x10] sm:$0xff]
      %v546 = vld [vmem:[%s531 + $0x18] sm:$0x1]
      %v547 = vld [vmem:[%s531 + $0x20] sm:$0xff]
      %v548 = vld [vmem:[%s531 + $0x28] sm:$0x1]
      %v549 = vld [vmem:[%s531 + $0x30] sm:$0xff]
      %v550 = vld [vmem:[%s531 + $0x38] sm:$0x1]
      %v551 = vld [vmem:[%s531 + $0x40] sm:$0xff]
      %v552 = vld [vmem:[%s531 + $0x48] sm:$0x1]
      %v553 = vld [vmem:[%s531 + $0x50] sm:$0xff]
      %v554 = vld [vmem:[%s531 + $0x58] sm:$0x1]
      %v555 = vld [vmem:[%s531 + $0x60] sm:$0xff]
      %v556 = vld [vmem:[%s531 + $0x68] sm:$0x1]
      %v557 = vld [vmem:[%s531 + $0x70] sm:$0xff]
      %v558 = vld [vmem:[%s531 + $0x78] sm:$0x1]
      %v559 = vld [vmem:[%s531 + $0x80] sm:$0xff]
      %v560 = vld [vmem:[%s531 + $0x88] sm:$0x1]
      %v561 = vld [vmem:[%s531 + $0x90] sm:$0xff]
      %v562 = vld [vmem:[%s531 + $0x98] sm:$0x1]
      %v563 = vld [vmem:[%s531 + $0xa0] sm:$0xff]
      %v564 = vld [vmem:[%s531 + $0xa8] sm:$0x1]
      %v565 = vld [vmem:[%s531 + $0xb0] sm:$0xff]
      %v566 = vld [vmem:[%s531 + $0xb8] sm:$0x1]
      %v567 = vld [vmem:[%s531 + $0xc0] sm:$0xff]
      %v568 = vld [vmem:[%s531 + $0xc8] sm:$0x1]
      %v569 = vld [vmem:[%s531 + $0xd0] sm:$0xff]
      %v570 = vld [vmem:[%s531 + $0xd8] sm:$0x1]
      %v571 = vld [vmem:[%s531 + $0xe0] sm:$0xff]
      %v572 = vld [vmem:[%s531 + $0xe8] sm:$0x1]
      %v573 = vld [vmem:[%s531 + $0xf0] sm:$0xff]
      %v574 = vld [vmem:[%s531 + $0xf8] sm:$0x1]
      %v575 = vld [vmem:[%s531 + $0x100] sm:$0xff]
      %v576 = vld [vmem:[%s531 + $0x108] sm:$0x1]
      %v577 = vld [vmem:[%s536] sm:$0xff]
      %v578 = vld [vmem:[%s536 + $0x10] sm:$0xff]
      %v579 = vld [vmem:[%s536 + $0x20] sm:$0xff]
      %v580 = vld [vmem:[%s536 + $0x30] sm:$0xff]
      %v581 = vld [vmem:[%s536 + $0x40] sm:$0xff]
      %v582 = vld [vmem:[%s536 + $0x50] sm:$0xff]
      %v583 = vld [vmem:[%s536 + $0x60] sm:$0xff]
      %v584 = vld [vmem:[%s536 + $0x70] sm:$0xff]
      %v585 = vld [vmem:[%s536 + $0x80] sm:$0xff]
      %v586 = vld [vmem:[%s536 + $0x90] sm:$0xff]
      %v587 = vld [vmem:[%s536 + $0xa0] sm:$0xff]
      %v588 = vld [vmem:[%s536 + $0xb0] sm:$0xff]
      %v589 = vld [vmem:[%s536 + $0xc0] sm:$0xff]
      %v590 = vld [vmem:[%s536 + $0xd0] sm:$0xff]
      %v591 = vld [vmem:[%s536 + $0xe0] sm:$0xff]
      %v592 = vld [vmem:[%s536 + $0xf0] sm:$0xff]
      %v593 = vld [vmem:[%s536 + $0x100] sm:$0xff]
      %v594 = vmax.f32 %v543, %v577
      %v595 = vmax.f32 %v545, %v578
      %v596 = vmax.f32 %v547, %v579
      %v597 = vmax.f32 %v549, %v580
      %v598 = vmax.f32 %v551, %v581
      %v599 = vmax.f32 %v553, %v582
      %v600 = vmax.f32 %v555, %v583
      %v601 = vmax.f32 %v557, %v584
      %v602 = vmax.f32 %v559, %v585
      %v603 = vmax.f32 %v561, %v586
      %v604 = vmax.f32 %v563, %v587
      %v605 = vmax.f32 %v565, %v588
      %v606 = vmax.f32 %v567, %v589
      %v607 = vmax.f32 %v569, %v590
      %v608 = vmax.f32 %v571, %v591
      %v609 = vmax.f32 %v573, %v592
      %v610 = vmax.f32 %v575, %v593
      %vm645 = vcmask 1046528
      %v646 = vrot.slane %v543, 1
      %v647 = vrot.slane %v544, 1
      %v648 = vsel %vm645, %v646, %v647
      %v649 = vrot.slane %v545, 1
      %v650 = vrot.slane %v546, 1
      %v651 = vsel %vm645, %v649, %v650
      %v652 = vrot.slane %v547, 1
      %v653 = vrot.slane %v548, 1
      %v654 = vsel %vm645, %v652, %v653
      %v655 = vrot.slane %v549, 1
      %v656 = vrot.slane %v550, 1
      %v657 = vsel %vm645, %v655, %v656
      %v658 = vrot.slane %v551, 1
      %v659 = vrot.slane %v552, 1
      %v660 = vsel %vm645, %v658, %v659
      %v661 = vrot.slane %v553, 1
      %v662 = vrot.slane %v554, 1
      %v663 = vsel %vm645, %v661, %v662
      %v664 = vrot.slane %v555, 1
      %v665 = vrot.slane %v556, 1
      %v666 = vsel %vm645, %v664, %v665
      %v667 = vrot.slane %v557, 1
      %v668 = vrot.slane %v558, 1
      %v669 = vsel %vm645, %v667, %v668
      %v670 = vrot.slane %v559, 1
      %v671 = vrot.slane %v560, 1
      %v672 = vsel %vm645, %v670, %v671
      %v673 = vrot.slane %v561, 1
      %v674 = vrot.slane %v562, 1
      %v675 = vsel %vm645, %v673, %v674
      %v676 = vrot.slane %v563, 1
      %v677 = vrot.slane %v564, 1
      %v678 = vsel %vm645, %v676, %v677
      %v679 = vrot.slane %v565, 1
      %v680 = vrot.slane %v566, 1
      %v681 = vsel %vm645, %v679, %v680
      %v682 = vrot.slane %v567, 1
      %v683 = vrot.slane %v568, 1
      %v684 = vsel %vm645, %v682, %v683
      %v685 = vrot.slane %v569, 1
      %v686 = vrot.slane %v570, 1
      %v687 = vsel %vm645, %v685, %v686
      %v688 = vrot.slane %v571, 1
      %v689 = vrot.slane %v572, 1
      %v690 = vsel %vm645, %v688, %v689
      %v691 = vrot.slane %v573, 1
      %v692 = vrot.slane %v574, 1
      %v693 = vsel %vm645, %v691, %v692
      %v694 = vrot.slane %v575, 1
      %v695 = vrot.slane %v576, 1
      %v696 = vsel %vm645, %v694, %v695
      %v714 = vmax.f32 %v594, %v648
      %v715 = vmax.f32 %v595, %v651
      %v716 = vmax.f32 %v596, %v654
      %v717 = vmax.f32 %v597, %v657
      %v718 = vmax.f32 %v598, %v660
      %v719 = vmax.f32 %v599, %v663
      %v720 = vmax.f32 %v600, %v666
      %v721 = vmax.f32 %v601, %v669
      %v722 = vmax.f32 %v602, %v672
      %v723 = vmax.f32 %v603, %v675
      %v724 = vmax.f32 %v604, %v678
      %v725 = vmax.f32 %v605, %v681
      %v726 = vmax.f32 %v606, %v684
      %v727 = vmax.f32 %v607, %v687
      %v728 = vmax.f32 %v608, %v690
      %v729 = vmax.f32 %v609, %v693
      %v730 = vmax.f32 %v610, %v696
      %v731 = vmax.f32 %v714, %v715
      %v732 = vmax.f32 %v716, %v717
      %v733 = vmax.f32 %v718, %v719
      %v734 = vmax.f32 %v720, %v721
      %v735 = vmax.f32 %v722, %v723
      %v736 = vmax.f32 %v724, %v725
      %v737 = vmax.f32 %v726, %v727
      %v738 = vmax.f32 %v728, %v729
      %v739 = vmax.f32 %v731, %v716
      %v740 = vmax.f32 %v732, %v718
      %v741 = vmax.f32 %v733, %v720
      %v742 = vmax.f32 %v734, %v722
      %v743 = vmax.f32 %v735, %v724
      %v744 = vmax.f32 %v736, %v726
      %v745 = vmax.f32 %v737, %v728
      %v746 = vmax.f32 %v738, %v730
      %v747 = vld [vmem:[%s2] sm:$0x1]
      %v749 = vlaneseq
      %v750 = vshrl.u32 %v749, 7
      %v751 = vsub.s32 0, %v750
      %v752 = vrot.slane %v747, %v751
      %v754 = vmul.f32 %v739, %v752
      %v755 = vmul.f32 %v740, %v752
      %v756 = vmul.f32 %v741, %v752
      %v757 = vmul.f32 %v742, %v752
      %v758 = vmul.f32 %v743, %v752
      %v759 = vmul.f32 %v744, %v752
      %v760 = vmul.f32 %v745, %v752
      %v761 = vmul.f32 %v746, %v752
      %v762 = vld [vmem:[%s3] sm:$0x1]
      %v764 = vlaneseq
      %v765 = vshrl.u32 %v764, 7
      %v766 = vsub.s32 0, %v765
      %v767 = vrot.slane %v762, %v766
      %v769 = vadd.f32 %v754, %v767
      %v770 = vadd.f32 %v755, %v767
      %v771 = vadd.f32 %v756, %v767
      %v772 = vadd.f32 %v757, %v767
      %v773 = vadd.f32 %v758, %v767
      %v774 = vadd.f32 %v759, %v767
      %v775 = vadd.f32 %v760, %v767
      %v776 = vadd.f32 %v761, %v767
      %v777 = vmax.f32 %v769, 0.0
      %v778 = vmax.f32 %v770, 0.0
      %v779 = vmax.f32 %v771, 0.0
      %v780 = vmax.f32 %v772, 0.0
      %v781 = vmax.f32 %v773, 0.0
      %v782 = vmax.f32 %v774, 0.0
      %v783 = vmax.f32 %v775, 0.0
      %v784 = vmax.f32 %v776, 0.0
      %v785 = vpack.c.bf16 %v778, %v777
      %v786 = vpack.c.bf16 %v780, %v779
      %v787 = vpack.c.bf16 %v782, %v781
      %v788 = vpack.c.bf16 %v784, %v783
      %v789 = vld [vmem:[%s4] sm:$0xf]
      %v790 = vld [vmem:[%s4 + $0x4] sm:$0xf]
      %v791 = vld [vmem:[%s4 + $0x8] sm:$0xf]
      %v792 = vld [vmem:[%s4 + $0xc] sm:$0xf]
      %v793 = vld [vmem:[%s4 + $0x10] sm:$0xf]
      %v794 = vld [vmem:[%s4 + $0x14] sm:$0xf]
      %v795 = vld [vmem:[%s4 + $0x18] sm:$0xf]
      %v796 = vld [vmem:[%s4 + $0x1c] sm:$0xf]
      %v805 = vunpack.c.l.b16 %v789
      %v806 = vunpack.c.l.b16 %v790
      %v807 = vunpack.c.l.b16 %v791
      %v808 = vunpack.c.l.b16 %v792
      %v809 = vunpack.c.l.b16 %v793
      %v810 = vunpack.c.l.b16 %v794
      %v811 = vunpack.c.l.b16 %v795
      %v812 = vunpack.c.l.b16 %v796
      %v813 = vpack.c.b16 %v806, %v805
      %v814 = vpack.c.b16 %v808, %v807
      %v815 = vpack.c.b16 %v810, %v809
      %v816 = vpack.c.b16 %v812, %v811
      %vm821 = vcmask 523264
      %v823 = vsel %vm821, %v785, 0
      %v826 = vsel %vm821, %v786, 0
      %v829 = vsel %vm821, %v787, 0
      %v832 = vsel %vm821, %v788, 0
      %834 = vmatprep.subr.bf16.mxu0 0
      %835 = vmatpush1.bf16.msra.mxu0 0
      %836 = vmatprep.subr.bf16.mxu0 0
      %837 = vmatpush1.bf16.msra.mxu0 0
      %838 = vmatprep.subr.bf16.mxu0 0
      %839 = vmatpush1.bf16.msra.mxu0 0
      %840 = vmatprep.subr.bf16.mxu0 0
      %841 = vmatpush1.bf16.msra.mxu0 0
      %842 = vmatprep.subr.bf16.mxu0 0
      %843 = vmatpush1.bf16.msra.mxu0 %v816
      %844 = vmatprep.subr.bf16.mxu0 0
      %845 = vmatpush1.bf16.msra.mxu0 %v815
      %846 = vmatprep.subr.bf16.mxu0 0
      %847 = vmatpush1.bf16.msra.mxu0 %v814
      %848 = vmatprep.subr.bf16.mxu0 0
      %849 = vmatpush1.bf16.msra.mxu0 %v813
      %850 = vmatprep.subr.bf16.mxu0 0
      %851 = vmatpush2.bf16.msra.mxu0 0
      %852 = vmatprep.subr.bf16.mxu0 0
      %853 = vmatpush2.bf16.msra.mxu0 0
      %854 = vmatprep.subr.bf16.mxu0 0
      %855 = vmatpush2.bf16.msra.mxu0 0
      %856 = vmatprep.subr.bf16.mxu0 0
      %857 = vmatpush2.bf16.msra.mxu0 0
      %858 = vmatprep.subr.bf16.mxu0 0
      %859 = vmatpush2.bf16.msra.mxu0 0
      %860 = vmatprep.subr.bf16.mxu0 0
      %861 = vmatpush2.bf16.msra.mxu0 0
      %862 = vmatprep.subr.bf16.mxu0 0
      %863 = vmatpush2.bf16.msra.mxu0 0
      %864 = vmatprep.subr.bf16.mxu0 0
      %865 = vmatpush2.bf16.msra.mxu0 0
      %866 = vmatprep.mubr.bf16.mxu0 0
      %867 = vmatmul.mubr.bf16.gmra.mxu0 %v823
      %v868 = vpop.f32.mrf.mxu0
      %v869 = vadd.f32 0.0, %v868
      %v870 = vpop.f32.mrf.mxu0
      %v871 = vpop.f32.mrf.mxu0
      %v872 = vadd.f32 0.0, %v871
      %v873 = vpop.f32.mrf.mxu0
      %874 = vmatprep.mubr.bf16.mxu0 0
      %875 = vmatmul.mubr.bf16.gmra.mxu0 %v826
      %v876 = vpop.f32.mrf.mxu0
      %v877 = vadd.f32 0.0, %v876
      %v878 = vpop.f32.mrf.mxu0
      %v879 = vpop.f32.mrf.mxu0
      %v880 = vadd.f32 0.0, %v879
      %v881 = vpop.f32.mrf.mxu0
      %882 = vmatprep.mubr.bf16.mxu0 0
      %883 = vmatmul.mubr.bf16.gmra.mxu0 %v829
      %v884 = vpop.f32.mrf.mxu0
      %v885 = vadd.f32 0.0, %v884
      %v886 = vpop.f32.mrf.mxu0
      %v887 = vpop.f32.mrf.mxu0
      %v888 = vadd.f32 0.0, %v887
      %v889 = vpop.f32.mrf.mxu0
      %890 = vmatprep.mubr.bf16.mxu0 0
      %891 = vmatmul.mubr.bf16.gmra.mxu0 %v832
      %v892 = vpop.f32.mrf.mxu0
      %v893 = vadd.f32 0.0, %v892
      %v894 = vpop.f32.mrf.mxu0
      %v895 = vpop.f32.mrf.mxu0
      %v896 = vadd.f32 0.0, %v895
      %v897 = vpop.f32.mrf.mxu0
      %898 = vdwg.mxu0
      %v899 = vld [vmem:[%s5] sm:$0x1]
      %v901 = vlaneseq
      %v902 = vshrl.u32 %v901, 7
      %v903 = vsub.s32 0, %v902
      %v904 = vrot.slane %v899, %v903
      %v906 = vmul.f32 %v869, %v904
      %v907 = vmul.f32 %v872, %v904
      %v908 = vmul.f32 %v877, %v904
      %v909 = vmul.f32 %v880, %v904
      %v910 = vmul.f32 %v885, %v904
      %v911 = vmul.f32 %v888, %v904
      %v912 = vmul.f32 %v893, %v904
      %v913 = vmul.f32 %v896, %v904
      %v914 = vld [vmem:[%s6] sm:$0x1]
      %v916 = vlaneseq
      %v917 = vshrl.u32 %v916, 7
      %v918 = vsub.s32 0, %v917
      %v919 = vrot.slane %v914, %v918
      %v921 = vadd.f32 %v906, %v919
      %v922 = vadd.f32 %v907, %v919
      %v923 = vadd.f32 %v908, %v919
      %v924 = vadd.f32 %v909, %v919
      %v925 = vadd.f32 %v910, %v919
      %v926 = vadd.f32 %v911, %v919
      %v927 = vadd.f32 %v912, %v919
      %v928 = vadd.f32 %v913, %v919
      %v929 = vmax.f32 %v921, 0.0
      %v930 = vmax.f32 %v922, 0.0
      %v931 = vmax.f32 %v923, 0.0
      %v932 = vmax.f32 %v924, 0.0
      %v933 = vmax.f32 %v925, 0.0
      %v934 = vmax.f32 %v926, 0.0
      %v935 = vmax.f32 %v927, 0.0
      %v936 = vmax.f32 %v928, 0.0
      %vm937 = vcmask 257024
      %938 = vst.msk [vmem:[#allocation2] sm:$0xf] %vm937, 0
      %939 = vst.msk [vmem:[#allocation2 + $0x4] sm:$0xf] %vm937, 0
      %940 = vst.msk [vmem:[#allocation2 + $0x8] sm:$0xf] %vm937, 0
      %941 = vst.msk [vmem:[#allocation2 + $0xc] sm:$0xf] %vm937, 0
      %942 = vst.msk [vmem:[#allocation2 + $0x10] sm:$0xf] %vm937, 0
      %943 = vst.msk [vmem:[#allocation2 + $0x14] sm:$0xf] %vm937, 0
      %944 = vst.msk [vmem:[#allocation2 + $0x18] sm:$0xf] %vm937, 0
      %945 = vst.msk [vmem:[#allocation2 + $0x1c] sm:$0xf] %vm937, 0
      %946 = vst.msk [vmem:[#allocation2 + $0x20] sm:$0xf] %vm937, 0
      %947 = vst.msk [vmem:[#allocation2 + $0x24] sm:$0xf] %vm937, 0
      %948 = vst.msk [vmem:[#allocation2 + $0x28] sm:$0xf] %vm937, 0
      %949 = vst.msk [vmem:[#allocation2 + $0x2c] sm:$0xf] %vm937, 0
      %v950 = vpack.c.bf16 %v930, %v929
      %v951 = vpack.c.bf16 %v932, %v931
      %v952 = vpack.c.bf16 %v934, %v933
      %v953 = vpack.c.bf16 %v936, %v935
      %v958 = vunpack.c.l.b16 %v950
      %v959 = vunpack.c.h.b16 %v950
      %v960 = vunpack.c.l.b16 %v951
      %v961 = vunpack.c.h.b16 %v951
      %v962 = vunpack.c.l.b16 %v952
      %v963 = vunpack.c.h.b16 %v952
      %v964 = vunpack.c.l.b16 %v953
      %v965 = vunpack.c.h.b16 %v953
      %v966 = vpack.c.b16 %v958, %v958
      %v967 = vpack.c.b16 %v959, %v959
      %v968 = vpack.c.b16 %v960, %v960
      %v969 = vpack.c.b16 %v961, %v961
      %v970 = vpack.c.b16 %v962, %v962
      %v971 = vpack.c.b16 %v963, %v963
      %v972 = vpack.c.b16 %v964, %v964
      %v973 = vpack.c.b16 %v965, %v965
      %982 = vst.msk [vmem:[#allocation2 + $0x8] sm:$0xf] %vm937, %v966
      %983 = vst.msk [vmem:[#allocation2 + $0xc] sm:$0xf] %vm937, %v967
      %984 = vst.msk [vmem:[#allocation2 + $0x10] sm:$0xf] %vm937, %v968
      %985 = vst.msk [vmem:[#allocation2 + $0x14] sm:$0xf] %vm937, %v969
      %986 = vst.msk [vmem:[#allocation2 + $0x18] sm:$0xf] %vm937, %v970
      %987 = vst.msk [vmem:[#allocation2 + $0x1c] sm:$0xf] %vm937, %v971
      %988 = vst.msk [vmem:[#allocation2 + $0x20] sm:$0xf] %vm937, %v972
      %989 = vst.msk [vmem:[#allocation2 + $0x24] sm:$0xf] %vm937, %v973
      %v990 = vld [vmem:[#allocation2] sm:$0x8]
      %v991 = vld [vmem:[#allocation2 + $0x4] sm:$0xf]
      %v992 = vld [vmem:[#allocation2 + $0x8] sm:$0xf]
      %v993 = vld [vmem:[#allocation2 + $0xc] sm:$0xf]
      %v994 = vld [vmem:[#allocation2 + $0x10] sm:$0xf]
      %v995 = vld [vmem:[#allocation2 + $0x14] sm:$0xf]
      %v996 = vld [vmem:[#allocation2 + $0x18] sm:$0xf]
      %v997 = vld [vmem:[#allocation2 + $0x1c] sm:$0xf]
      %v998 = vld [vmem:[#allocation2 + $0x20] sm:$0xf]
      %v999 = vld [vmem:[%s11] sm:$0xf]
      %v1000 = vld [vmem:[%s11 + $0x4] sm:$0xf]
      %v1001 = vld [vmem:[%s11 + $0x8] sm:$0xf]
      %v1002 = vld [vmem:[%s11 + $0xc] sm:$0xf]
      %v1003 = vld [vmem:[%s11 + $0x10] sm:$0xf]
      %v1004 = vld [vmem:[%s11 + $0x14] sm:$0xf]
      %v1005 = vld [vmem:[%s11 + $0x18] sm:$0xf]
      %v1006 = vld [vmem:[%s11 + $0x1c] sm:$0xf]
      %1008 = vset.pattern.permute.xlu0 0
      %1009 = vperm.xlu0 %1008, %v999
      %v1010 = vpop.permute.xlu0 %1009
      %v1013 = vunpack.c.l.s4 839922192
      %v1014 = vunpack.c.0.s8 %v1013
      %v1015 = vlaneseq
      %v1016 = vshrl.u32 %v1015, 7
      %v1017 = vsub.s32 %v1014, %v1016
      %v1018 = vrot.slane %v1010, %v1017
      %1020 = vset.pattern.permute.xlu0 0
      %1021 = vperm.xlu0 %1020, %v1000
      %v1022 = vpop.permute.xlu0 %1021
      %v1025 = vunpack.c.l.s4 839922192
      %v1026 = vunpack.c.0.s8 %v1025
      %v1027 = vlaneseq
      %v1028 = vshrl.u32 %v1027, 7
      %v1029 = vsub.s32 %v1026, %v1028
      %v1030 = vrot.slane %v1022, %v1029
      %1032 = vset.pattern.permute.xlu0 0
      %1033 = vperm.xlu0 %1032, %v1001
      %v1034 = vpop.permute.xlu0 %1033
      %v1037 = vunpack.c.l.s4 839922192
      %v1038 = vunpack.c.0.s8 %v1037
      %v1039 = vlaneseq
      %v1040 = vshrl.u32 %v1039, 7
      %v1041 = vsub.s32 %v1038, %v1040
      %v1042 = vrot.slane %v1034, %v1041
      %1044 = vset.pattern.permute.xlu0 0
      %1045 = vperm.xlu0 %1044, %v1002
      %v1046 = vpop.permute.xlu0 %1045
      %v1049 = vunpack.c.l.s4 839922192
      %v1050 = vunpack.c.0.s8 %v1049
      %v1051 = vlaneseq
      %v1052 = vshrl.u32 %v1051, 7
      %v1053 = vsub.s32 %v1050, %v1052
      %v1054 = vrot.slane %v1046, %v1053
      %1056 = vset.pattern.permute.xlu0 0
      %1057 = vperm.xlu0 %1056, %v1003
      %v1058 = vpop.permute.xlu0 %1057
      %v1061 = vunpack.c.l.s4 839922192
      %v1062 = vunpack.c.0.s8 %v1061
      %v1063 = vlaneseq
      %v1064 = vshrl.u32 %v1063, 7
      %v1065 = vsub.s32 %v1062, %v1064
      %v1066 = vrot.slane %v1058, %v1065
      %1068 = vset.pattern.permute.xlu0 0
      %1069 = vperm.xlu0 %1068, %v1004
      %v1070 = vpop.permute.xlu0 %1069
      %v1073 = vunpack.c.l.s4 839922192
      %v1074 = vunpack.c.0.s8 %v1073
      %v1075 = vlaneseq
      %v1076 = vshrl.u32 %v1075, 7
      %v1077 = vsub.s32 %v1074, %v1076
      %v1078 = vrot.slane %v1070, %v1077
      %1080 = vset.pattern.permute.xlu0 0
      %1081 = vperm.xlu0 %1080, %v1005
      %v1082 = vpop.permute.xlu0 %1081
      %v1085 = vunpack.c.l.s4 839922192
      %v1086 = vunpack.c.0.s8 %v1085
      %v1087 = vlaneseq
      %v1088 = vshrl.u32 %v1087, 7
      %v1089 = vsub.s32 %v1086, %v1088
      %v1090 = vrot.slane %v1082, %v1089
      %1092 = vset.pattern.permute.xlu0 0
      %1093 = vperm.xlu0 %1092, %v1006
      %v1094 = vpop.permute.xlu0 %1093
      %v1097 = vunpack.c.l.s4 839922192
      %v1098 = vunpack.c.0.s8 %v1097
      %v1099 = vlaneseq
      %v1100 = vshrl.u32 %v1099, 7
      %v1101 = vsub.s32 %v1098, %v1100
      %v1102 = vrot.slane %v1094, %v1101
      %vm1103 = vsmask.f32 3328
      %vm1104 = vsmask.f32 7440
      %vm1105 = vmor %vm1103, %vm1104
      %v1107 = vshll.u32 %v1018, 16
      %v1109 = vrot.slane %v1107, 5
      %v1110 = vshrl.u32 %v1018, 16
      %v1112 = vrot.slane %v1110, 4
      %v1113 = vor.u32 %v1112, %v1109
      %v1114 = vrot.slane %v1113, 4
      %v1116 = vshll.u32 %v1030, 16
      %v1118 = vrot.slane %v1116, 5
      %v1119 = vsel %vm1105, %v1114, %v1118
      %v1120 = vshrl.u32 %v1030, 16
      %v1122 = vrot.slane %v1120, 4
      %v1123 = vor.u32 %v1122, %v1118
      %v1124 = vrot.slane %v1123, 4
      %v1126 = vshll.u32 %v1042, 16
      %v1128 = vrot.slane %v1126, 5
      %v1129 = vsel %vm1105, %v1124, %v1128
      %v1130 = vshrl.u32 %v1042, 16
      %v1132 = vrot.slane %v1130, 4
      %v1133 = vor.u32 %v1132, %v1128
      %v1134 = vrot.slane %v1133, 4
      %v1136 = vshll.u32 %v1054, 16
      %v1138 = vrot.slane %v1136, 5
      %v1139 = vsel %vm1105, %v1134, %v1138
      %v1140 = vshrl.u32 %v1054, 16
      %v1142 = vrot.slane %v1140, 4
      %v1143 = vor.u32 %v1142, %v1138
      %v1144 = vrot.slane %v1143, 4
      %v1146 = vshll.u32 %v1066, 16
      %v1148 = vrot.slane %v1146, 5
      %v1149 = vsel %vm1105, %v1144, %v1148
      %v1150 = vshrl.u32 %v1066, 16
      %v1152 = vrot.slane %v1150, 4
      %v1153 = vor.u32 %v1152, %v1148
      %v1154 = vrot.slane %v1153, 4
      %v1156 = vshll.u32 %v1078, 16
      %v1158 = vrot.slane %v1156, 5
      %v1159 = vsel %vm1105, %v1154, %v1158
      %v1160 = vshrl.u32 %v1078, 16
      %v1162 = vrot.slane %v1160, 4
      %v1163 = vor.u32 %v1162, %v1158
      %v1164 = vrot.slane %v1163, 4
      %v1166 = vshll.u32 %v1090, 16
      %v1168 = vrot.slane %v1166, 5
      %v1169 = vsel %vm1105, %v1164, %v1168
      %v1170 = vshrl.u32 %v1090, 16
      %v1172 = vrot.slane %v1170, 4
      %v1173 = vor.u32 %v1172, %v1168
      %v1174 = vrot.slane %v1173, 4
      %v1176 = vshll.u32 %v1102, 16
      %v1178 = vrot.slane %v1176, 5
      %v1179 = vsel %vm1105, %v1174, %v1178
      %v1180 = vshrl.u32 %v1102, 16
      %v1182 = vrot.slane %v1180, 4
      %v1183 = vor.u32 %v1182, %v1178
      %v1184 = vrot.slane %v1183, 4
      %v1194 = vmul.bf16 %v990, %v1109
      %v1195 = vmul.bf16 %v991, %v1119
      %v1196 = vmul.bf16 %v992, %v1129
      %v1197 = vmul.bf16 %v993, %v1139
      %v1198 = vmul.bf16 %v994, %v1149
      %v1199 = vmul.bf16 %v995, %v1159
      %v1200 = vmul.bf16 %v996, %v1169
      %v1201 = vmul.bf16 %v997, %v1179
      %v1202 = vmul.bf16 %v998, %v1184
      %v1203 = vld [vmem:[%s7] sm:$0xf]
      %v1204 = vld [vmem:[%s7 + $0x4] sm:$0xf]
      %v1205 = vld [vmem:[%s7 + $0x8] sm:$0xf]
      %v1206 = vld [vmem:[%s7 + $0xc] sm:$0xf]
      %s1207 = scalar_lea.vmem %s7, 16
      %v1208 = vld [vmem:[%s1207] sm:$0xf]
      %v1209 = vld [vmem:[%s1207 + $0x4] sm:$0xf]
      %v1210 = vld [vmem:[%s1207 + $0x8] sm:$0xf]
      %v1211 = vld [vmem:[%s1207 + $0xc] sm:$0xf]
      %v1220 = vunpack.c.l.b16 %v991
      %v1221 = vunpack.c.l.b16 %v992
      %v1222 = vunpack.c.l.b16 %v993
      %v1223 = vunpack.c.l.b16 %v994
      %v1224 = vunpack.c.l.b16 %v995
      %v1225 = vunpack.c.l.b16 %v996
      %v1226 = vunpack.c.l.b16 %v997
      %v1227 = vunpack.c.l.b16 %v998
      %v1228 = vpack.c.b16 %v1221, %v1220
      %v1229 = vpack.c.b16 %v1223, %v1222
      %v1230 = vpack.c.b16 %v1225, %v1224
      %v1231 = vpack.c.b16 %v1227, %v1226
      %v1236 = vunpack.c.l.b16 %v1208
      %v1237 = vunpack.c.l.b16 %v1209
      %v1238 = vunpack.c.l.b16 %v1210
      %v1239 = vunpack.c.l.b16 %v1211
      %v1240 = vpack.c.b16 %v1237, %v1236
      %v1241 = vpack.c.b16 %v1239, %v1238
      %vm1244 = vcmask 261120
      %v1246 = vsel %vm1244, %v1228, 0
      %v1249 = vsel %vm1244, %v1229, 0
      %v1252 = vsel %vm1244, %v1230, 0
      %v1255 = vsel %vm1244, %v1231, 0
      %1257 = vmatprep.subr.bf16.mxu0 0
      %1258 = vmatpush1.bf16.msra.mxu0 0
      %1259 = vmatprep.subr.bf16.mxu0 0
      %1260 = vmatpush1.bf16.msra.mxu0 0
      %1261 = vmatprep.subr.bf16.mxu0 0
      %1262 = vmatpush1.bf16.msra.mxu0 0
      %1263 = vmatprep.subr.bf16.mxu0 0
      %1264 = vmatpush1.bf16.msra.mxu0 0
      %1265 = vmatprep.subr.bf16.mxu0 0
      %1266 = vmatpush1.bf16.msra.mxu0 0
      %1267 = vmatprep.subr.bf16.mxu0 0
      %1268 = vmatpush1.bf16.msra.mxu0 0
      %1269 = vmatprep.subr.bf16.mxu0 0
      %1270 = vmatpush1.bf16.msra.mxu0 %v1241
      %1271 = vmatprep.subr.bf16.mxu0 0
      %1272 = vmatpush1.bf16.msra.mxu0 %v1240
      %1273 = vmatprep.subr.bf16.mxu0 0
      %1274 = vmatpush2.bf16.msra.mxu0 0
      %1275 = vmatprep.subr.bf16.mxu0 0
      %1276 = vmatpush2.bf16.msra.mxu0 0
      %1277 = vmatprep.subr.bf16.mxu0 0
      %1278 = vmatpush2.bf16.msra.mxu0 0
      %1279 = vmatprep.subr.bf16.mxu0 0
      %1280 = vmatpush2.bf16.msra.mxu0 0
      %1281 = vmatprep.subr.bf16.mxu0 0
      %1282 = vmatpush2.bf16.msra.mxu0 0
      %1283 = vmatprep.subr.bf16.mxu0 0
      %1284 = vmatpush2.bf16.msra.mxu0 0
      %1285 = vmatprep.subr.bf16.mxu0 0
      %1286 = vmatpush2.bf16.msra.mxu0 0
      %1287 = vmatprep.subr.bf16.mxu0 0
      %1288 = vmatpush2.bf16.msra.mxu0 0
      %1289 = vmatprep.mubr.bf16.mxu0 0
      %1290 = vmatmul.mubr.bf16.gmra.mxu0 %v1246
      %v1291 = vpop.f32.mrf.mxu0
      %v1292 = vadd.f32 0.0, %v1291
      %v1293 = vpop.f32.mrf.mxu0
      %v1294 = vpop.f32.mrf.mxu0
      %v1295 = vadd.f32 0.0, %v1294
      %v1296 = vpop.f32.mrf.mxu0
      %1297 = vmatprep.mubr.bf16.mxu0 0
      %1298 = vmatmul.mubr.bf16.gmra.mxu0 %v1249
      %v1299 = vpop.f32.mrf.mxu0
      %v1300 = vadd.f32 0.0, %v1299
      %v1301 = vpop.f32.mrf.mxu0
      %v1302 = vpop.f32.mrf.mxu0
      %v1303 = vadd.f32 0.0, %v1302
      %v1304 = vpop.f32.mrf.mxu0
      %1305 = vmatprep.mubr.bf16.mxu0 0
      %1306 = vmatmul.mubr.bf16.gmra.mxu0 %v1252
      %v1307 = vpop.f32.mrf.mxu0
      %v1308 = vadd.f32 0.0, %v1307
      %v1309 = vpop.f32.mrf.mxu0
      %v1310 = vpop.f32.mrf.mxu0
      %v1311 = vadd.f32 0.0, %v1310
      %v1312 = vpop.f32.mrf.mxu0
      %1313 = vmatprep.mubr.bf16.mxu0 0
      %1314 = vmatmul.mubr.bf16.gmra.mxu0 %v1255
      %v1315 = vpop.f32.mrf.mxu0
      %v1316 = vadd.f32 0.0, %v1315
      %v1317 = vpop.f32.mrf.mxu0
      %v1318 = vpop.f32.mrf.mxu0
      %v1319 = vadd.f32 0.0, %v1318
      %v1320 = vpop.f32.mrf.mxu0
      %1321 = vdwg.mxu0
      %v1331 = vunpack.c.l.b16 %v1194
      %v1332 = vunpack.c.l.b16 %v1195
      %v1333 = vunpack.c.l.b16 %v1196
      %v1334 = vunpack.c.l.b16 %v1197
      %v1335 = vunpack.c.l.b16 %v1198
      %v1336 = vunpack.c.l.b16 %v1199
      %v1337 = vunpack.c.l.b16 %v1200
      %v1338 = vunpack.c.l.b16 %v1201
      %v1339 = vunpack.c.l.b16 %v1202
      %v1340 = vpack.c.b16 %v1332, %v1331
      %v1341 = vpack.c.b16 %v1334, %v1333
      %v1342 = vpack.c.b16 %v1336, %v1335
      %v1343 = vpack.c.b16 %v1338, %v1337
      %v1344 = vpack.c.b16 %v1339, %v1339
      %vm1345 = vsmask.f32 4352
      %v1347 = vshrl.u32 %v1340, 16
      %v1349 = vrot.slane %v1347, 3
      %v1350 = vshll.u32 %v1340, 16
      %v1352 = vrot.slane %v1350, 4
      %v1353 = vor.u32 %v1349, %v1352
      %v1355 = vshrl.u32 %v1341, 16
      %v1357 = vrot.slane %v1355, 3
      %v1358 = vshll.u32 %v1341, 16
      %v1360 = vrot.slane %v1358, 4
      %v1361 = vor.u32 %v1357, %v1360
      %v1362 = vsel %vm1345, %v1353, %v1361
      %v1364 = vshrl.u32 %v1342, 16
      %v1366 = vrot.slane %v1364, 3
      %v1367 = vshll.u32 %v1342, 16
      %v1369 = vrot.slane %v1367, 4
      %v1370 = vor.u32 %v1366, %v1369
      %v1371 = vsel %vm1345, %v1361, %v1370
      %v1373 = vshrl.u32 %v1343, 16
      %v1375 = vrot.slane %v1373, 3
      %v1376 = vshll.u32 %v1343, 16
      %v1378 = vrot.slane %v1376, 4
      %v1379 = vor.u32 %v1375, %v1378
      %v1380 = vsel %vm1345, %v1370, %v1379
      %v1382 = vshrl.u32 %v1344, 16
      %v1384 = vrot.slane %v1382, 3
      %v1385 = vshll.u32 %v1344, 16
      %v1387 = vrot.slane %v1385, 4
      %v1388 = vor.u32 %v1384, %v1387
      %v1389 = vsel %vm1345, %v1379, %v1388
      %v1394 = vunpack.c.l.b16 %v1203
      %v1395 = vunpack.c.l.b16 %v1204
      %v1396 = vunpack.c.l.b16 %v1205
      %v1397 = vunpack.c.l.b16 %v1206
      %v1398 = vpack.c.b16 %v1395, %v1394
      %v1399 = vpack.c.b16 %v1397, %v1396
      %v1403 = vsel %vm1244, %v1362, 0
      %v1406 = vsel %vm1244, %v1371, 0
      %v1409 = vsel %vm1244, %v1380, 0
      %v1412 = vsel %vm1244, %v1389, 0
      %1414 = vmatprep.subr.bf16.mxu0 0
      %1415 = vmatpush1.bf16.msra.mxu0 0
      %1416 = vmatprep.subr.bf16.mxu0 0
      %1417 = vmatpush1.bf16.msra.mxu0 0
      %1418 = vmatprep.subr.bf16.mxu0 0
      %1419 = vmatpush1.bf16.msra.mxu0 0
      %1420 = vmatprep.subr.bf16.mxu0 0
      %1421 = vmatpush1.bf16.msra.mxu0 0
      %1422 = vmatprep.subr.bf16.mxu0 0
      %1423 = vmatpush1.bf16.msra.mxu0 0
      %1424 = vmatprep.subr.bf16.mxu0 0
      %1425 = vmatpush1.bf16.msra.mxu0 0
      %1426 = vmatprep.subr.bf16.mxu0 0
      %1427 = vmatpush1.bf16.msra.mxu0 %v1399
      %1428 = vmatprep.subr.bf16.mxu0 0
      %1429 = vmatpush1.bf16.msra.mxu0 %v1398
      %1430 = vmatprep.subr.bf16.mxu0 0
      %1431 = vmatpush2.bf16.msra.mxu0 0
      %1432 = vmatprep.subr.bf16.mxu0 0
      %1433 = vmatpush2.bf16.msra.mxu0 0
      %1434 = vmatprep.subr.bf16.mxu0 0
      %1435 = vmatpush2.bf16.msra.mxu0 0
      %1436 = vmatprep.subr.bf16.mxu0 0
      %1437 = vmatpush2.bf16.msra.mxu0 0
      %1438 = vmatprep.subr.bf16.mxu0 0
      %1439 = vmatpush2.bf16.msra.mxu0 0
      %1440 = vmatprep.subr.bf16.mxu0 0
      %1441 = vmatpush2.bf16.msra.mxu0 0
      %1442 = vmatprep.subr.bf16.mxu0 0
      %1443 = vmatpush2.bf16.msra.mxu0 0
      %1444 = vmatprep.subr.bf16.mxu0 0
      %1445 = vmatpush2.bf16.msra.mxu0 0
      %1446 = vmatprep.mubr.bf16.mxu0 0
      %1447 = vmatmul.mubr.bf16.gmra.mxu0 %v1403
      %v1448 = vpop.f32.mrf.mxu0
      %v1449 = vadd.f32 %v1292, %v1448
      %v1450 = vpop.f32.mrf.mxu0
      %v1451 = vpop.f32.mrf.mxu0
      %v1452 = vadd.f32 %v1295, %v1451
      %v1453 = vpop.f32.mrf.mxu0
      %1454 = vmatprep.mubr.bf16.mxu0 0
      %1455 = vmatmul.mubr.bf16.gmra.mxu0 %v1406
      %v1456 = vpop.f32.mrf.mxu0
      %v1457 = vadd.f32 %v1300, %v1456
      %v1458 = vpop.f32.mrf.mxu0
      %v1459 = vpop.f32.mrf.mxu0
      %v1460 = vadd.f32 %v1303, %v1459
      %v1461 = vpop.f32.mrf.mxu0
      %1462 = vmatprep.mubr.bf16.mxu0 0
      %1463 = vmatmul.mubr.bf16.gmra.mxu0 %v1409
      %v1464 = vpop.f32.mrf.mxu0
      %v1465 = vadd.f32 %v1308, %v1464
      %v1466 = vpop.f32.mrf.mxu0
      %v1467 = vpop.f32.mrf.mxu0
      %v1468 = vadd.f32 %v1311, %v1467
      %v1469 = vpop.f32.mrf.mxu0
      %1470 = vmatprep.mubr.bf16.mxu0 0
      %1471 = vmatmul.mubr.bf16.gmra.mxu0 %v1412
      %v1472 = vpop.f32.mrf.mxu0
      %v1473 = vadd.f32 %v1316, %v1472
      %v1474 = vpop.f32.mrf.mxu0
      %v1475 = vpop.f32.mrf.mxu0
      %v1476 = vadd.f32 %v1319, %v1475
      %v1477 = vpop.f32.mrf.mxu0
      %1478 = vdwg.mxu0
      %v1479 = vld [vmem:[#allocation2 + $0x4] sm:$0xf]
      %v1480 = vld [vmem:[#allocation2 + $0x8] sm:$0xf]
      %v1481 = vld [vmem:[#allocation2 + $0xc] sm:$0xf]
      %v1482 = vld [vmem:[#allocation2 + $0x10] sm:$0xf]
      %v1483 = vld [vmem:[#allocation2 + $0x14] sm:$0xf]
      %v1484 = vld [vmem:[#allocation2 + $0x18] sm:$0xf]
      %v1485 = vld [vmem:[#allocation2 + $0x1c] sm:$0xf]
      %v1486 = vld [vmem:[#allocation2 + $0x20] sm:$0xf]
      %v1487 = vld [vmem:[#allocation2 + $0x24] sm:$0x1]
      %v1488 = vld [vmem:[%s12] sm:$0xf]
      %v1489 = vld [vmem:[%s12 + $0x4] sm:$0xf]
      %v1490 = vld [vmem:[%s12 + $0x8] sm:$0xf]
      %v1491 = vld [vmem:[%s12 + $0xc] sm:$0xf]
      %v1492 = vld [vmem:[%s12 + $0x10] sm:$0xf]
      %v1493 = vld [vmem:[%s12 + $0x14] sm:$0xf]
      %v1494 = vld [vmem:[%s12 + $0x18] sm:$0xf]
      %v1495 = vld [vmem:[%s12 + $0x1c] sm:$0xf]
      %1497 = vset.pattern.permute.xlu0 0
      %1498 = vperm.xlu0 %1497, %v1488
      %v1499 = vpop.permute.xlu0 %1498
      %v1502 = vunpack.c.l.s4 839922192
      %v1503 = vunpack.c.0.s8 %v1502
      %v1504 = vlaneseq
      %v1505 = vshrl.u32 %v1504, 7
      %v1506 = vsub.s32 %v1503, %v1505
      %v1507 = vrot.slane %v1499, %v1506
      %1509 = vset.pattern.permute.xlu0 0
      %1510 = vperm.xlu0 %1509, %v1489
      %v1511 = vpop.permute.xlu0 %1510
      %v1514 = vunpack.c.l.s4 839922192
      %v1515 = vunpack.c.0.s8 %v1514
      %v1516 = vlaneseq
      %v1517 = vshrl.u32 %v1516, 7
      %v1518 = vsub.s32 %v1515, %v1517
      %v1519 = vrot.slane %v1511, %v1518
      %1521 = vset.pattern.permute.xlu0 0
      %1522 = vperm.xlu0 %1521, %v1490
      %v1523 = vpop.permute.xlu0 %1522
      %v1526 = vunpack.c.l.s4 839922192
      %v1527 = vunpack.c.0.s8 %v1526
      %v1528 = vlaneseq
      %v1529 = vshrl.u32 %v1528, 7
      %v1530 = vsub.s32 %v1527, %v1529
      %v1531 = vrot.slane %v1523, %v1530
      %1533 = vset.pattern.permute.xlu0 0
      %1534 = vperm.xlu0 %1533, %v1491
      %v1535 = vpop.permute.xlu0 %1534
      %v1538 = vunpack.c.l.s4 839922192
      %v1539 = vunpack.c.0.s8 %v1538
      %v1540 = vlaneseq
      %v1541 = vshrl.u32 %v1540, 7
      %v1542 = vsub.s32 %v1539, %v1541
      %v1543 = vrot.slane %v1535, %v1542
      %1545 = vset.pattern.permute.xlu0 0
      %1546 = vperm.xlu0 %1545, %v1492
      %v1547 = vpop.permute.xlu0 %1546
      %v1550 = vunpack.c.l.s4 839922192
      %v1551 = vunpack.c.0.s8 %v1550
      %v1552 = vlaneseq
      %v1553 = vshrl.u32 %v1552, 7
      %v1554 = vsub.s32 %v1551, %v1553
      %v1555 = vrot.slane %v1547, %v1554
      %1557 = vset.pattern.permute.xlu0 0
      %1558 = vperm.xlu0 %1557, %v1493
      %v1559 = vpop.permute.xlu0 %1558
      %v1562 = vunpack.c.l.s4 839922192
      %v1563 = vunpack.c.0.s8 %v1562
      %v1564 = vlaneseq
      %v1565 = vshrl.u32 %v1564, 7
      %v1566 = vsub.s32 %v1563, %v1565
      %v1567 = vrot.slane %v1559, %v1566
      %1569 = vset.pattern.permute.xlu0 0
      %1570 = vperm.xlu0 %1569, %v1494
      %v1571 = vpop.permute.xlu0 %1570
      %v1574 = vunpack.c.l.s4 839922192
      %v1575 = vunpack.c.0.s8 %v1574
      %v1576 = vlaneseq
      %v1577 = vshrl.u32 %v1576, 7
      %v1578 = vsub.s32 %v1575, %v1577
      %v1579 = vrot.slane %v1571, %v1578
      %1581 = vset.pattern.permute.xlu0 0
      %1582 = vperm.xlu0 %1581, %v1495
      %v1583 = vpop.permute.xlu0 %1582
      %v1586 = vunpack.c.l.s4 839922192
      %v1587 = vunpack.c.0.s8 %v1586
      %v1588 = vlaneseq
      %v1589 = vshrl.u32 %v1588, 7
      %v1590 = vsub.s32 %v1587, %v1589
      %v1591 = vrot.slane %v1583, %v1590
      %vm1592 = vsmask.f32 256
      %vm1593 = vsmask.f32 4368
      %vm1594 = vmor %vm1592, %vm1593
      %v1596 = vshrl.u32 %v1507, 16
      %v1598 = vrot.slane %v1596, 7
      %v1599 = vshll.u32 %v1507, 16
      %v1601 = vor.u32 %v1598, %v1599
      %v1602 = vrot.slane %v1598, 4
      %v1604 = vshrl.u32 %v1519, 16
      %v1606 = vrot.slane %v1604, 7
      %v1607 = vshll.u32 %v1519, 16
      %v1609 = vor.u32 %v1606, %v1607
      %v1610 = vsel %vm1594, %v1602, %v1609
      %v1611 = vrot.slane %v1606, 4
      %v1613 = vshrl.u32 %v1531, 16
      %v1615 = vrot.slane %v1613, 7
      %v1616 = vshll.u32 %v1531, 16
      %v1618 = vor.u32 %v1615, %v1616
      %v1619 = vsel %vm1594, %v1611, %v1618
      %v1620 = vrot.slane %v1615, 4
      %v1622 = vshrl.u32 %v1543, 16
      %v1624 = vrot.slane %v1622, 7
      %v1625 = vshll.u32 %v1543, 16
      %v1627 = vor.u32 %v1624, %v1625
      %v1628 = vsel %vm1594, %v1620, %v1627
      %v1629 = vrot.slane %v1624, 4
      %v1631 = vshrl.u32 %v1555, 16
      %v1633 = vrot.slane %v1631, 7
      %v1634 = vshll.u32 %v1555, 16
      %v1636 = vor.u32 %v1633, %v1634
      %v1637 = vsel %vm1594, %v1629, %v1636
      %v1638 = vrot.slane %v1633, 4
      %v1640 = vshrl.u32 %v1567, 16
      %v1642 = vrot.slane %v1640, 7
      %v1643 = vshll.u32 %v1567, 16
      %v1645 = vor.u32 %v1642, %v1643
      %v1646 = vsel %vm1594, %v1638, %v1645
      %v1647 = vrot.slane %v1642, 4
      %v1649 = vshrl.u32 %v1579, 16
      %v1651 = vrot.slane %v1649, 7
      %v1652 = vshll.u32 %v1579, 16
      %v1654 = vor.u32 %v1651, %v1652
      %v1655 = vsel %vm1594, %v1647, %v1654
      %v1656 = vrot.slane %v1651, 4
      %v1658 = vshrl.u32 %v1591, 16
      %v1660 = vrot.slane %v1658, 7
      %v1661 = vshll.u32 %v1591, 16
      %v1663 = vor.u32 %v1660, %v1661
      %v1664 = vsel %vm1594, %v1656, %v1663
      %v1665 = vrot.slane %v1660, 4
      %v1675 = vmul.bf16 %v1479, %v1601
      %v1676 = vmul.bf16 %v1480, %v1610
      %v1677 = vmul.bf16 %v1481, %v1619
      %v1678 = vmul.bf16 %v1482, %v1628
      %v1679 = vmul.bf16 %v1483, %v1637
      %v1680 = vmul.bf16 %v1484, %v1646
      %v1681 = vmul.bf16 %v1485, %v1655
      %v1682 = vmul.bf16 %v1486, %v1664
      %v1683 = vmul.bf16 %v1487, %v1665
      %s1684 = scalar_lea.vmem %s7, 32
      %v1685 = vld [vmem:[%s1684] sm:$0xf]
      %v1686 = vld [vmem:[%s1684 + $0x4] sm:$0xf]
      %v1687 = vld [vmem:[%s1684 + $0x8] sm:$0xf]
      %v1688 = vld [vmem:[%s1684 + $0xc] sm:$0xf]
      %v1698 = vunpack.c.l.b16 %v1675
      %v1699 = vunpack.c.l.b16 %v1676
      %v1700 = vunpack.c.l.b16 %v1677
      %v1701 = vunpack.c.l.b16 %v1678
      %v1702 = vunpack.c.l.b16 %v1679
      %v1703 = vunpack.c.l.b16 %v1680
      %v1704 = vunpack.c.l.b16 %v1681
      %v1705 = vunpack.c.l.b16 %v1682
      %v1706 = vunpack.c.l.b16 %v1683
      %v1707 = vpack.c.b16 %v1699, %v1698
      %v1708 = vpack.c.b16 %v1701, %v1700
      %v1709 = vpack.c.b16 %v1703, %v1702
      %v1710 = vpack.c.b16 %v1705, %v1704
      %v1711 = vpack.c.b16 %v1706, %v1706
      %vm1712 = vsmask.f32 7424
      %v1714 = vshrl.u32 %v1707, 16
      %v1716 = vshll.u32 %v1707, 16
      %v1718 = vrot.slane %v1716, 1
      %v1719 = vor.u32 %v1714, %v1718
      %v1721 = vshll.u32 %v1708, 16
      %v1723 = vrot.slane %v1721, 1
      %v1724 = vsel %vm1712, %v1719, %v1723
      %v1725 = vshrl.u32 %v1708, 16
      %v1727 = vor.u32 %v1725, %v1723
      %v1729 = vshll.u32 %v1709, 16
      %v1731 = vrot.slane %v1729, 1
      %v1732 = vsel %vm1712, %v1727, %v1731
      %v1733 = vshrl.u32 %v1709, 16
      %v1735 = vor.u32 %v1733, %v1731
      %v1737 = vshll.u32 %v1710, 16
      %v1739 = vrot.slane %v1737, 1
      %v1740 = vsel %vm1712, %v1735, %v1739
      %v1741 = vshrl.u32 %v1710, 16
      %v1743 = vor.u32 %v1741, %v1739
      %v1745 = vshll.u32 %v1711, 16
      %v1747 = vrot.slane %v1745, 1
      %v1748 = vsel %vm1712, %v1743, %v1747
      %v1753 = vunpack.c.l.b16 %v1685
      %v1754 = vunpack.c.l.b16 %v1686
      %v1755 = vunpack.c.l.b16 %v1687
      %v1756 = vunpack.c.l.b16 %v1688
      %v1757 = vpack.c.b16 %v1754, %v1753
      %v1758 = vpack.c.b16 %v1756, %v1755
      %v1762 = vsel %vm1244, %v1724, 0
      %v1765 = vsel %vm1244, %v1732, 0
      %v1768 = vsel %vm1244, %v1740, 0
      %v1771 = vsel %vm1244, %v1748, 0
      %1773 = vmatprep.subr.bf16.mxu0 0
      %1774 = vmatpush1.bf16.msra.mxu0 0
      %1775 = vmatprep.subr.bf16.mxu0 0
      %1776 = vmatpush1.bf16.msra.mxu0 0
      %1777 = vmatprep.subr.bf16.mxu0 0
      %1778 = vmatpush1.bf16.msra.mxu0 0
      %1779 = vmatprep.subr.bf16.mxu0 0
      %1780 = vmatpush1.bf16.msra.mxu0 0
      %1781 = vmatprep.subr.bf16.mxu0 0
      %1782 = vmatpush1.bf16.msra.mxu0 0
      %1783 = vmatprep.subr.bf16.mxu0 0
      %1784 = vmatpush1.bf16.msra.mxu0 0
      %1785 = vmatprep.subr.bf16.mxu0 0
      %1786 = vmatpush1.bf16.msra.mxu0 %v1758
      %1787 = vmatprep.subr.bf16.mxu0 0
      %1788 = vmatpush1.bf16.msra.mxu0 %v1757
      %1789 = vmatprep.subr.bf16.mxu0 0
      %1790 = vmatpush2.bf16.msra.mxu0 0
      %1791 = vmatprep.subr.bf16.mxu0 0
      %1792 = vmatpush2.bf16.msra.mxu0 0
      %1793 = vmatprep.subr.bf16.mxu0 0
      %1794 = vmatpush2.bf16.msra.mxu0 0
      %1795 = vmatprep.subr.bf16.mxu0 0
      %1796 = vmatpush2.bf16.msra.mxu0 0
      %1797 = vmatprep.subr.bf16.mxu0 0
      %1798 = vmatpush2.bf16.msra.mxu0 0
      %1799 = vmatprep.subr.bf16.mxu0 0
      %1800 = vmatpush2.bf16.msra.mxu0 0
      %1801 = vmatprep.subr.bf16.mxu0 0
      %1802 = vmatpush2.bf16.msra.mxu0 0
      %1803 = vmatprep.subr.bf16.mxu0 0
      %1804 = vmatpush2.bf16.msra.mxu0 0
      %1805 = vmatprep.mubr.bf16.mxu0 0
      %1806 = vmatmul.mubr.bf16.gmra.mxu0 %v1762
      %v1807 = vpop.f32.mrf.mxu0
      %v1808 = vadd.f32 0.0, %v1807
      %v1809 = vpop.f32.mrf.mxu0
      %v1810 = vpop.f32.mrf.mxu0
      %v1811 = vadd.f32 0.0, %v1810
      %v1812 = vpop.f32.mrf.mxu0
      %1813 = vmatprep.mubr.bf16.mxu0 0
      %1814 = vmatmul.mubr.bf16.gmra.mxu0 %v1765
      %v1815 = vpop.f32.mrf.mxu0
      %v1816 = vadd.f32 0.0, %v1815
      %v1817 = vpop.f32.mrf.mxu0
      %v1818 = vpop.f32.mrf.mxu0
      %v1819 = vadd.f32 0.0, %v1818
      %v1820 = vpop.f32.mrf.mxu0
      %1821 = vmatprep.mubr.bf16.mxu0 0
      %1822 = vmatmul.mubr.bf16.gmra.mxu0 %v1768
      %v1823 = vpop.f32.mrf.mxu0
      %v1824 = vadd.f32 0.0, %v1823
      %v1825 = vpop.f32.mrf.mxu0
      %v1826 = vpop.f32.mrf.mxu0
      %v1827 = vadd.f32 0.0, %v1826
      %v1828 = vpop.f32.mrf.mxu0
      %1829 = vmatprep.mubr.bf16.mxu0 0
      %1830 = vmatmul.mubr.bf16.gmra.mxu0 %v1771
      %v1831 = vpop.f32.mrf.mxu0
      %v1832 = vadd.f32 0.0, %v1831
      %v1833 = vpop.f32.mrf.mxu0
      %v1834 = vpop.f32.mrf.mxu0
      %v1835 = vadd.f32 0.0, %v1834
      %v1836 = vpop.f32.mrf.mxu0
      %1837 = vdwg.mxu0
      %v1838 = vadd.f32 %v1449, %v1808
      %v1839 = vadd.f32 %v1452, %v1811
      %v1840 = vadd.f32 %v1457, %v1816
      %v1841 = vadd.f32 %v1460, %v1819
      %v1842 = vadd.f32 %v1465, %v1824
      %v1843 = vadd.f32 %v1468, %v1827
      %v1844 = vadd.f32 %v1473, %v1832
      %v1845 = vadd.f32 %v1476, %v1835
      %v1846 = vld [vmem:[#allocation2 + $0x4] sm:$0x8]
      %v1847 = vld [vmem:[#allocation2 + $0x24] sm:$0xf]
      %v1848 = vmul.bf16 %v1846, %v1109
      %v1849 = vmul.bf16 %v1480, %v1119
      %v1850 = vmul.bf16 %v1481, %v1129
      %v1851 = vmul.bf16 %v1482, %v1139
      %v1852 = vmul.bf16 %v1483, %v1149
      %v1853 = vmul.bf16 %v1484, %v1159
      %v1854 = vmul.bf16 %v1485, %v1169
      %v1855 = vmul.bf16 %v1486, %v1179
      %v1856 = vmul.bf16 %v1847, %v1184
      %s1857 = scalar_lea.vmem %s7, 48
      %v1858 = vld [vmem:[%s1857] sm:$0xf]
      %v1859 = vld [vmem:[%s1857 + $0x4] sm:$0xf]
      %v1860 = vld [vmem:[%s1857 + $0x8] sm:$0xf]
      %v1861 = vld [vmem:[%s1857 + $0xc] sm:$0xf]
      %v1871 = vunpack.c.l.b16 %v1848
      %v1872 = vunpack.c.l.b16 %v1849
      %v1873 = vunpack.c.l.b16 %v1850
      %v1874 = vunpack.c.l.b16 %v1851
      %v1875 = vunpack.c.l.b16 %v1852
      %v1876 = vunpack.c.l.b16 %v1853
      %v1877 = vunpack.c.l.b16 %v1854
      %v1878 = vunpack.c.l.b16 %v1855
      %v1879 = vunpack.c.l.b16 %v1856
      %v1880 = vpack.c.b16 %v1872, %v1871
      %v1881 = vpack.c.b16 %v1874, %v1873
      %v1882 = vpack.c.b16 %v1876, %v1875
      %v1883 = vpack.c.b16 %v1878, %v1877
      %v1884 = vpack.c.b16 %v1879, %v1879
      %v1886 = vshrl.u32 %v1880, 16
      %v1888 = vrot.slane %v1886, 3
      %v1889 = vshll.u32 %v1880, 16
      %v1891 = vrot.slane %v1889, 4
      %v1892 = vor.u32 %v1888, %v1891
      %v1894 = vshrl.u32 %v1881, 16
      %v1896 = vrot.slane %v1894, 3
      %v1897 = vshll.u32 %v1881, 16
      %v1899 = vrot.slane %v1897, 4
      %v1900 = vor.u32 %v1896, %v1899
      %v1901 = vsel %vm1345, %v1892, %v1900
      %v1903 = vshrl.u32 %v1882, 16
      %v1905 = vrot.slane %v1903, 3
      %v1906 = vshll.u32 %v1882, 16
      %v1908 = vrot.slane %v1906, 4
      %v1909 = vor.u32 %v1905, %v1908
      %v1910 = vsel %vm1345, %v1900, %v1909
      %v1912 = vshrl.u32 %v1883, 16
      %v1914 = vrot.slane %v1912, 3
      %v1915 = vshll.u32 %v1883, 16
      %v1917 = vrot.slane %v1915, 4
      %v1918 = vor.u32 %v1914, %v1917
      %v1919 = vsel %vm1345, %v1909, %v1918
      %v1921 = vshrl.u32 %v1884, 16
      %v1923 = vrot.slane %v1921, 3
      %v1924 = vshll.u32 %v1884, 16
      %v1926 = vrot.slane %v1924, 4
      %v1927 = vor.u32 %v1923, %v1926
      %v1928 = vsel %vm1345, %v1918, %v1927
      %v1933 = vunpack.c.l.b16 %v1858
      %v1934 = vunpack.c.l.b16 %v1859
      %v1935 = vunpack.c.l.b16 %v1860
      %v1936 = vunpack.c.l.b16 %v1861
      %v1937 = vpack.c.b16 %v1934, %v1933
      %v1938 = vpack.c.b16 %v1936, %v1935
      %v1942 = vsel %vm1244, %v1901, 0
      %v1945 = vsel %vm1244, %v1910, 0
      %v1948 = vsel %vm1244, %v1919, 0
      %v1951 = vsel %vm1244, %v1928, 0
      %1953 = vmatprep.subr.bf16.mxu0 0
      %1954 = vmatpush1.bf16.msra.mxu0 0
      %1955 = vmatprep.subr.bf16.mxu0 0
      %1956 = vmatpush1.bf16.msra.mxu0 0
      %1957 = vmatprep.subr.bf16.mxu0 0
      %1958 = vmatpush1.bf16.msra.mxu0 0
      %1959 = vmatprep.subr.bf16.mxu0 0
      %1960 = vmatpush1.bf16.msra.mxu0 0
      %1961 = vmatprep.subr.bf16.mxu0 0
      %1962 = vmatpush1.bf16.msra.mxu0 0
      %1963 = vmatprep.subr.bf16.mxu0 0
      %1964 = vmatpush1.bf16.msra.mxu0 0
      %1965 = vmatprep.subr.bf16.mxu0 0
      %1966 = vmatpush1.bf16.msra.mxu0 %v1938
      %1967 = vmatprep.subr.bf16.mxu0 0
      %1968 = vmatpush1.bf16.msra.mxu0 %v1937
      %1969 = vmatprep.subr.bf16.mxu0 0
      %1970 = vmatpush2.bf16.msra.mxu0 0
      %1971 = vmatprep.subr.bf16.mxu0 0
      %1972 = vmatpush2.bf16.msra.mxu0 0
      %1973 = vmatprep.subr.bf16.mxu0 0
      %1974 = vmatpush2.bf16.msra.mxu0 0
      %1975 = vmatprep.subr.bf16.mxu0 0
      %1976 = vmatpush2.bf16.msra.mxu0 0
      %1977 = vmatprep.subr.bf16.mxu0 0
      %1978 = vmatpush2.bf16.msra.mxu0 0
      %1979 = vmatprep.subr.bf16.mxu0 0
      %1980 = vmatpush2.bf16.msra.mxu0 0
      %1981 = vmatprep.subr.bf16.mxu0 0
      %1982 = vmatpush2.bf16.msra.mxu0 0
      %1983 = vmatprep.subr.bf16.mxu0 0
      %1984 = vmatpush2.bf16.msra.mxu0 0
      %1985 = vmatprep.mubr.bf16.mxu0 0
      %1986 = vmatmul.mubr.bf16.gmra.mxu0 %v1942
      %v1987 = vpop.f32.mrf.mxu0
      %v1988 = vadd.f32 0.0, %v1987
      %v1989 = vpop.f32.mrf.mxu0
      %v1990 = vpop.f32.mrf.mxu0
      %v1991 = vadd.f32 0.0, %v1990
      %v1992 = vpop.f32.mrf.mxu0
      %1993 = vmatprep.mubr.bf16.mxu0 0
      %1994 = vmatmul.mubr.bf16.gmra.mxu0 %v1945
      %v1995 = vpop.f32.mrf.mxu0
      %v1996 = vadd.f32 0.0, %v1995
      %v1997 = vpop.f32.mrf.mxu0
      %v1998 = vpop.f32.mrf.mxu0
      %v1999 = vadd.f32 0.0, %v1998
      %v2000 = vpop.f32.mrf.mxu0
      %2001 = vmatprep.mubr.bf16.mxu0 0
      %2002 = vmatmul.mubr.bf16.gmra.mxu0 %v1948
      %v2003 = vpop.f32.mrf.mxu0
      %v2004 = vadd.f32 0.0, %v2003
      %v2005 = vpop.f32.mrf.mxu0
      %v2006 = vpop.f32.mrf.mxu0
      %v2007 = vadd.f32 0.0, %v2006
      %v2008 = vpop.f32.mrf.mxu0
      %2009 = vmatprep.mubr.bf16.mxu0 0
      %2010 = vmatmul.mubr.bf16.gmra.mxu0 %v1951
      %v2011 = vpop.f32.mrf.mxu0
      %v2012 = vadd.f32 0.0, %v2011
      %v2013 = vpop.f32.mrf.mxu0
      %v2014 = vpop.f32.mrf.mxu0
      %v2015 = vadd.f32 0.0, %v2014
      %v2016 = vpop.f32.mrf.mxu0
      %2017 = vdwg.mxu0
      %v2018 = vadd.f32 %v1838, %v1988
      %v2019 = vadd.f32 %v1839, %v1991
      %v2020 = vadd.f32 %v1840, %v1996
      %v2021 = vadd.f32 %v1841, %v1999
      %v2022 = vadd.f32 %v1842, %v2004
      %v2023 = vadd.f32 %v1843, %v2007
      %v2024 = vadd.f32 %v1844, %v2012
      %v2025 = vadd.f32 %v1845, %v2015
      %s2026 = scalar_lea.vmem %s7, 64
      %v2027 = vld [vmem:[%s2026] sm:$0xf]
      %v2028 = vld [vmem:[%s2026 + $0x4] sm:$0xf]
      %v2029 = vld [vmem:[%s2026 + $0x8] sm:$0xf]
      %v2030 = vld [vmem:[%s2026 + $0xc] sm:$0xf]
      %v2039 = vunpack.c.l.b16 %v1480
      %v2040 = vunpack.c.l.b16 %v1481
      %v2041 = vunpack.c.l.b16 %v1482
      %v2042 = vunpack.c.l.b16 %v1483
      %v2043 = vunpack.c.l.b16 %v1484
      %v2044 = vunpack.c.l.b16 %v1485
      %v2045 = vunpack.c.l.b16 %v1486
      %v2046 = vunpack.c.l.b16 %v1847
      %v2047 = vpack.c.b16 %v2040, %v2039
      %v2048 = vpack.c.b16 %v2042, %v2041
      %v2049 = vpack.c.b16 %v2044, %v2043
      %v2050 = vpack.c.b16 %v2046, %v2045
      %v2055 = vunpack.c.l.b16 %v2027
      %v2056 = vunpack.c.l.b16 %v2028
      %v2057 = vunpack.c.l.b16 %v2029
      %v2058 = vunpack.c.l.b16 %v2030
      %v2059 = vpack.c.b16 %v2056, %v2055
      %v2060 = vpack.c.b16 %v2058, %v2057
      %v2064 = vsel %vm1244, %v2047, 0
      %v2067 = vsel %vm1244, %v2048, 0
      %v2070 = vsel %vm1244, %v2049, 0
      %v2073 = vsel %vm1244, %v2050, 0
      %2075 = vmatprep.subr.bf16.mxu0 0
      %2076 = vmatpush1.bf16.msra.mxu0 0
      %2077 = vmatprep.subr.bf16.mxu0 0
      %2078 = vmatpush1.bf16.msra.mxu0 0
      %2079 = vmatprep.subr.bf16.mxu0 0
      %2080 = vmatpush1.bf16.msra.mxu0 0
      %2081 = vmatprep.subr.bf16.mxu0 0
      %2082 = vmatpush1.bf16.msra.mxu0 0
      %2083 = vmatprep.subr.bf16.mxu0 0
      %2084 = vmatpush1.bf16.msra.mxu0 0
      %2085 = vmatprep.subr.bf16.mxu0 0
      %2086 = vmatpush1.bf16.msra.mxu0 0
      %2087 = vmatprep.subr.bf16.mxu0 0
      %2088 = vmatpush1.bf16.msra.mxu0 %v2060
      %2089 = vmatprep.subr.bf16.mxu0 0
      %2090 = vmatpush1.bf16.msra.mxu0 %v2059
      %2091 = vmatprep.subr.bf16.mxu0 0
      %2092 = vmatpush2.bf16.msra.mxu0 0
      %2093 = vmatprep.subr.bf16.mxu0 0
      %2094 = vmatpush2.bf16.msra.mxu0 0
      %2095 = vmatprep.subr.bf16.mxu0 0
      %2096 = vmatpush2.bf16.msra.mxu0 0
      %2097 = vmatprep.subr.bf16.mxu0 0
      %2098 = vmatpush2.bf16.msra.mxu0 0
      %2099 = vmatprep.subr.bf16.mxu0 0
      %2100 = vmatpush2.bf16.msra.mxu0 0
      %2101 = vmatprep.subr.bf16.mxu0 0
      %2102 = vmatpush2.bf16.msra.mxu0 0
      %2103 = vmatprep.subr.bf16.mxu0 0
      %2104 = vmatpush2.bf16.msra.mxu0 0
      %2105 = vmatprep.subr.bf16.mxu0 0
      %2106 = vmatpush2.bf16.msra.mxu0 0
      %2107 = vmatprep.mubr.bf16.mxu0 0
      %2108 = vmatmul.mubr.bf16.gmra.mxu0 %v2064
      %v2109 = vpop.f32.mrf.mxu0
      %v2110 = vadd.f32 0.0, %v2109
      %v2111 = vpop.f32.mrf.mxu0
      %v2112 = vpop.f32.mrf.mxu0
      %v2113 = vadd.f32 0.0, %v2112
      %v2114 = vpop.f32.mrf.mxu0
      %2115 = vmatprep.mubr.bf16.mxu0 0
      %2116 = vmatmul.mubr.bf16.gmra.mxu0 %v2067
      %v2117 = vpop.f32.mrf.mxu0
      %v2118 = vadd.f32 0.0, %v2117
      %v2119 = vpop.f32.mrf.mxu0
      %v2120 = vpop.f32.mrf.mxu0
      %v2121 = vadd.f32 0.0, %v2120
      %v2122 = vpop.f32.mrf.mxu0
      %2123 = vmatprep.mubr.bf16.mxu0 0
      %2124 = vmatmul.mubr.bf16.gmra.mxu0 %v2070
      %v2125 = vpop.f32.mrf.mxu0
      %v2126 = vadd.f32 0.0, %v2125
      %v2127 = vpop.f32.mrf.mxu0
      %v2128 = vpop.f32.mrf.mxu0
      %v2129 = vadd.f32 0.0, %v2128
      %v2130 = vpop.f32.mrf.mxu0
      %2131 = vmatprep.mubr.bf16.mxu0 0
      %2132 = vmatmul.mubr.bf16.gmra.mxu0 %v2073
      %v2133 = vpop.f32.mrf.mxu0
      %v2134 = vadd.f32 0.0, %v2133
      %v2135 = vpop.f32.mrf.mxu0
      %v2136 = vpop.f32.mrf.mxu0
      %v2137 = vadd.f32 0.0, %v2136
      %v2138 = vpop.f32.mrf.mxu0
      %2139 = vdwg.mxu0
      %v2140 = vadd.f32 %v2018, %v2110
      %v2141 = vadd.f32 %v2019, %v2113
      %v2142 = vadd.f32 %v2020, %v2118
      %v2143 = vadd.f32 %v2021, %v2121
      %v2144 = vadd.f32 %v2022, %v2126
      %v2145 = vadd.f32 %v2023, %v2129
      %v2146 = vadd.f32 %v2024, %v2134
      %v2147 = vadd.f32 %v2025, %v2137
      %v2148 = vld [vmem:[#allocation2 + $0x8] sm:$0xf]
      %v2149 = vld [vmem:[#allocation2 + $0xc] sm:$0xf]
      %v2150 = vld [vmem:[#allocation2 + $0x10] sm:$0xf]
      %v2151 = vld [vmem:[#allocation2 + $0x14] sm:$0xf]
      %v2152 = vld [vmem:[#allocation2 + $0x18] sm:$0xf]
      %v2153 = vld [vmem:[#allocation2 + $0x1c] sm:$0xf]
      %v2154 = vld [vmem:[#allocation2 + $0x20] sm:$0xf]
      %v2155 = vld [vmem:[#allocation2 + $0x24] sm:$0xf]
      %v2156 = vld [vmem:[#allocation2 + $0x28] sm:$0x1]
      %v2157 = vmul.bf16 %v2148, %v1601
      %v2158 = vmul.bf16 %v2149, %v1610
      %v2159 = vmul.bf16 %v2150, %v1619
      %v2160 = vmul.bf16 %v2151, %v1628
      %v2161 = vmul.bf16 %v2152, %v1637
      %v2162 = vmul.bf16 %v2153, %v1646
      %v2163 = vmul.bf16 %v2154, %v1655
      %v2164 = vmul.bf16 %v2155, %v1664
      %v2165 = vmul.bf16 %v2156, %v1665
      %s2166 = scalar_lea.vmem %s7, 80
      %v2167 = vld [vmem:[%s2166] sm:$0xf]
      %v2168 = vld [vmem:[%s2166 + $0x4] sm:$0xf]
      %v2169 = vld [vmem:[%s2166 + $0x8] sm:$0xf]
      %v2170 = vld [vmem:[%s2166 + $0xc] sm:$0xf]
      %v2180 = vunpack.c.l.b16 %v2157
      %v2181 = vunpack.c.l.b16 %v2158
      %v2182 = vunpack.c.l.b16 %v2159
      %v2183 = vunpack.c.l.b16 %v2160
      %v2184 = vunpack.c.l.b16 %v2161
      %v2185 = vunpack.c.l.b16 %v2162
      %v2186 = vunpack.c.l.b16 %v2163
      %v2187 = vunpack.c.l.b16 %v2164
      %v2188 = vunpack.c.l.b16 %v2165
      %v2189 = vpack.c.b16 %v2181, %v2180
      %v2190 = vpack.c.b16 %v2183, %v2182
      %v2191 = vpack.c.b16 %v2185, %v2184
      %v2192 = vpack.c.b16 %v2187, %v2186
      %v2193 = vpack.c.b16 %v2188, %v2188
      %v2195 = vshrl.u32 %v2189, 16
      %v2197 = vshll.u32 %v2189, 16
      %v2199 = vrot.slane %v2197, 1
      %v2200 = vor.u32 %v2195, %v2199
      %v2202 = vshll.u32 %v2190, 16
      %v2204 = vrot.slane %v2202, 1
      %v2205 = vsel %vm1712, %v2200, %v2204
      %v2206 = vshrl.u32 %v2190, 16
      %v2208 = vor.u32 %v2206, %v2204
      %v2210 = vshll.u32 %v2191, 16
      %v2212 = vrot.slane %v2210, 1
      %v2213 = vsel %vm1712, %v2208, %v2212
      %v2214 = vshrl.u32 %v2191, 16
      %v2216 = vor.u32 %v2214, %v2212
      %v2218 = vshll.u32 %v2192, 16
      %v2220 = vrot.slane %v2218, 1
      %v2221 = vsel %vm1712, %v2216, %v2220
      %v2222 = vshrl.u32 %v2192, 16
      %v2224 = vor.u32 %v2222, %v2220
      %v2226 = vshll.u32 %v2193, 16
      %v2228 = vrot.slane %v2226, 1
      %v2229 = vsel %vm1712, %v2224, %v2228
      %v2234 = vunpack.c.l.b16 %v2167
      %v2235 = vunpack.c.l.b16 %v2168
      %v2236 = vunpack.c.l.b16 %v2169
      %v2237 = vunpack.c.l.b16 %v2170
      %v2238 = vpack.c.b16 %v2235, %v2234
      %v2239 = vpack.c.b16 %v2237, %v2236
      %v2243 = vsel %vm1244, %v2205, 0
      %v2246 = vsel %vm1244, %v2213, 0
      %v2249 = vsel %vm1244, %v2221, 0
      %v2252 = vsel %vm1244, %v2229, 0
      %2254 = vmatprep.subr.bf16.mxu0 0
      %2255 = vmatpush1.bf16.msra.mxu0 0
      %2256 = vmatprep.subr.bf16.mxu0 0
      %2257 = vmatpush1.bf16.msra.mxu0 0
      %2258 = vmatprep.subr.bf16.mxu0 0
      %2259 = vmatpush1.bf16.msra.mxu0 0
      %2260 = vmatprep.subr.bf16.mxu0 0
      %2261 = vmatpush1.bf16.msra.mxu0 0
      %2262 = vmatprep.subr.bf16.mxu0 0
      %2263 = vmatpush1.bf16.msra.mxu0 0
      %2264 = vmatprep.subr.bf16.mxu0 0
      %2265 = vmatpush1.bf16.msra.mxu0 0
      %2266 = vmatprep.subr.bf16.mxu0 0
      %2267 = vmatpush1.bf16.msra.mxu0 %v2239
      %2268 = vmatprep.subr.bf16.mxu0 0
      %2269 = vmatpush1.bf16.msra.mxu0 %v2238
      %2270 = vmatprep.subr.bf16.mxu0 0
      %2271 = vmatpush2.bf16.msra.mxu0 0
      %2272 = vmatprep.subr.bf16.mxu0 0
      %2273 = vmatpush2.bf16.msra.mxu0 0
      %2274 = vmatprep.subr.bf16.mxu0 0
      %2275 = vmatpush2.bf16.msra.mxu0 0
      %2276 = vmatprep.subr.bf16.mxu0 0
      %2277 = vmatpush2.bf16.msra.mxu0 0
      %2278 = vmatprep.subr.bf16.mxu0 0
      %2279 = vmatpush2.bf16.msra.mxu0 0
      %2280 = vmatprep.subr.bf16.mxu0 0
      %2281 = vmatpush2.bf16.msra.mxu0 0
      %2282 = vmatprep.subr.bf16.mxu0 0
      %2283 = vmatpush2.bf16.msra.mxu0 0
      %2284 = vmatprep.subr.bf16.mxu0 0
      %2285 = vmatpush2.bf16.msra.mxu0 0
      %2286 = vmatprep.mubr.bf16.mxu0 0
      %2287 = vmatmul.mubr.bf16.gmra.mxu0 %v2243
      %v2288 = vpop.f32.mrf.mxu0
      %v2289 = vadd.f32 0.0, %v2288
      %v2290 = vpop.f32.mrf.mxu0
      %v2291 = vpop.f32.mrf.mxu0
      %v2292 = vadd.f32 0.0, %v2291
      %v2293 = vpop.f32.mrf.mxu0
      %2294 = vmatprep.mubr.bf16.mxu0 0
      %2295 = vmatmul.mubr.bf16.gmra.mxu0 %v2246
      %v2296 = vpop.f32.mrf.mxu0
      %v2297 = vadd.f32 0.0, %v2296
      %v2298 = vpop.f32.mrf.mxu0
      %v2299 = vpop.f32.mrf.mxu0
      %v2300 = vadd.f32 0.0, %v2299
      %v2301 = vpop.f32.mrf.mxu0
      %2302 = vmatprep.mubr.bf16.mxu0 0
      %2303 = vmatmul.mubr.bf16.gmra.mxu0 %v2249
      %v2304 = vpop.f32.mrf.mxu0
      %v2305 = vadd.f32 0.0, %v2304
      %v2306 = vpop.f32.mrf.mxu0
      %v2307 = vpop.f32.mrf.mxu0
      %v2308 = vadd.f32 0.0, %v2307
      %v2309 = vpop.f32.mrf.mxu0
      %2310 = vmatprep.mubr.bf16.mxu0 0
      %2311 = vmatmul.mubr.bf16.gmra.mxu0 %v2252
      %v2312 = vpop.f32.mrf.mxu0
      %v2313 = vadd.f32 0.0, %v2312
      %v2314 = vpop.f32.mrf.mxu0
      %v2315 = vpop.f32.mrf.mxu0
      %v2316 = vadd.f32 0.0, %v2315
      %v2317 = vpop.f32.mrf.mxu0
      %2318 = vdwg.mxu0
      %v2319 = vadd.f32 %v2140, %v2289
      %v2320 = vadd.f32 %v2141, %v2292
      %v2321 = vadd.f32 %v2142, %v2297
      %v2322 = vadd.f32 %v2143, %v2300
      %v2323 = vadd.f32 %v2144, %v2305
      %v2324 = vadd.f32 %v2145, %v2308
      %v2325 = vadd.f32 %v2146, %v2313
      %v2326 = vadd.f32 %v2147, %v2316
      %v2327 = vld [vmem:[#allocation2 + $0x8] sm:$0x8]
      %v2328 = vld [vmem:[#allocation2 + $0x28] sm:$0xf]
      %v2329 = vmul.bf16 %v2327, %v1109
      %v2330 = vmul.bf16 %v2149, %v1119
      %v2331 = vmul.bf16 %v2150, %v1129
      %v2332 = vmul.bf16 %v2151, %v1139
      %v2333 = vmul.bf16 %v2152, %v1149
      %v2334 = vmul.bf16 %v2153, %v1159
      %v2335 = vmul.bf16 %v2154, %v1169
      %v2336 = vmul.bf16 %v2155, %v1179
      %v2337 = vmul.bf16 %v2328, %v1184
      %s2338 = scalar_lea.vmem %s7, 96
      %v2339 = vld [vmem:[%s2338] sm:$0xf]
      %v2340 = vld [vmem:[%s2338 + $0x4] sm:$0xf]
      %v2341 = vld [vmem:[%s2338 + $0x8] sm:$0xf]
      %v2342 = vld [vmem:[%s2338 + $0xc] sm:$0xf]
      %v2352 = vunpack.c.l.b16 %v2329
      %v2353 = vunpack.c.l.b16 %v2330
      %v2354 = vunpack.c.l.b16 %v2331
      %v2355 = vunpack.c.l.b16 %v2332
      %v2356 = vunpack.c.l.b16 %v2333
      %v2357 = vunpack.c.l.b16 %v2334
      %v2358 = vunpack.c.l.b16 %v2335
      %v2359 = vunpack.c.l.b16 %v2336
      %v2360 = vunpack.c.l.b16 %v2337
      %v2361 = vpack.c.b16 %v2353, %v2352
      %v2362 = vpack.c.b16 %v2355, %v2354
      %v2363 = vpack.c.b16 %v2357, %v2356
      %v2364 = vpack.c.b16 %v2359, %v2358
      %v2365 = vpack.c.b16 %v2360, %v2360
      %v2367 = vshrl.u32 %v2361, 16
      %v2369 = vrot.slane %v2367, 3
      %v2370 = vshll.u32 %v2361, 16
      %v2372 = vrot.slane %v2370, 4
      %v2373 = vor.u32 %v2369, %v2372
      %v2375 = vshrl.u32 %v2362, 16
      %v2377 = vrot.slane %v2375, 3
      %v2378 = vshll.u32 %v2362, 16
      %v2380 = vrot.slane %v2378, 4
      %v2381 = vor.u32 %v2377, %v2380
      %v2382 = vsel %vm1345, %v2373, %v2381
      %v2384 = vshrl.u32 %v2363, 16
      %v2386 = vrot.slane %v2384, 3
      %v2387 = vshll.u32 %v2363, 16
      %v2389 = vrot.slane %v2387, 4
      %v2390 = vor.u32 %v2386, %v2389
      %v2391 = vsel %vm1345, %v2381, %v2390
      %v2393 = vshrl.u32 %v2364, 16
      %v2395 = vrot.slane %v2393, 3
      %v2396 = vshll.u32 %v2364, 16
      %v2398 = vrot.slane %v2396, 4
      %v2399 = vor.u32 %v2395, %v2398
      %v2400 = vsel %vm1345, %v2390, %v2399
      %v2402 = vshrl.u32 %v2365, 16
      %v2404 = vrot.slane %v2402, 3
      %v2405 = vshll.u32 %v2365, 16
      %v2407 = vrot.slane %v2405, 4
      %v2408 = vor.u32 %v2404, %v2407
      %v2409 = vsel %vm1345, %v2399, %v2408
      %v2414 = vunpack.c.l.b16 %v2339
      %v2415 = vunpack.c.l.b16 %v2340
      %v2416 = vunpack.c.l.b16 %v2341
      %v2417 = vunpack.c.l.b16 %v2342
      %v2418 = vpack.c.b16 %v2415, %v2414
      %v2419 = vpack.c.b16 %v2417, %v2416
      %v2423 = vsel %vm1244, %v2382, 0
      %v2426 = vsel %vm1244, %v2391, 0
      %v2429 = vsel %vm1244, %v2400, 0
      %v2432 = vsel %vm1244, %v2409, 0
      %2434 = vmatprep.subr.bf16.mxu0 0
      %2435 = vmatpush1.bf16.msra.mxu0 0
      %2436 = vmatprep.subr.bf16.mxu0 0
      %2437 = vmatpush1.bf16.msra.mxu0 0
      %2438 = vmatprep.subr.bf16.mxu0 0
      %2439 = vmatpush1.bf16.msra.mxu0 0
      %2440 = vmatprep.subr.bf16.mxu0 0
      %2441 = vmatpush1.bf16.msra.mxu0 0
      %2442 = vmatprep.subr.bf16.mxu0 0
      %2443 = vmatpush1.bf16.msra.mxu0 0
      %2444 = vmatprep.subr.bf16.mxu0 0
      %2445 = vmatpush1.bf16.msra.mxu0 0
      %2446 = vmatprep.subr.bf16.mxu0 0
      %2447 = vmatpush1.bf16.msra.mxu0 %v2419
      %2448 = vmatprep.subr.bf16.mxu0 0
      %2449 = vmatpush1.bf16.msra.mxu0 %v2418
      %2450 = vmatprep.subr.bf16.mxu0 0
      %2451 = vmatpush2.bf16.msra.mxu0 0
      %2452 = vmatprep.subr.bf16.mxu0 0
      %2453 = vmatpush2.bf16.msra.mxu0 0
      %2454 = vmatprep.subr.bf16.mxu0 0
      %2455 = vmatpush2.bf16.msra.mxu0 0
      %2456 = vmatprep.subr.bf16.mxu0 0
      %2457 = vmatpush2.bf16.msra.mxu0 0
      %2458 = vmatprep.subr.bf16.mxu0 0
      %2459 = vmatpush2.bf16.msra.mxu0 0
      %2460 = vmatprep.subr.bf16.mxu0 0
      %2461 = vmatpush2.bf16.msra.mxu0 0
      %2462 = vmatprep.subr.bf16.mxu0 0
      %2463 = vmatpush2.bf16.msra.mxu0 0
      %2464 = vmatprep.subr.bf16.mxu0 0
      %2465 = vmatpush2.bf16.msra.mxu0 0
      %2466 = vmatprep.mubr.bf16.mxu0 0
      %2467 = vmatmul.mubr.bf16.gmra.mxu0 %v2423
      %v2468 = vpop.f32.mrf.mxu0
      %v2469 = vadd.f32 0.0, %v2468
      %v2470 = vpop.f32.mrf.mxu0
      %v2471 = vpop.f32.mrf.mxu0
      %v2472 = vadd.f32 0.0, %v2471
      %v2473 = vpop.f32.mrf.mxu0
      %2474 = vmatprep.mubr.bf16.mxu0 0
      %2475 = vmatmul.mubr.bf16.gmra.mxu0 %v2426
      %v2476 = vpop.f32.mrf.mxu0
      %v2477 = vadd.f32 0.0, %v2476
      %v2478 = vpop.f32.mrf.mxu0
      %v2479 = vpop.f32.mrf.mxu0
      %v2480 = vadd.f32 0.0, %v2479
      %v2481 = vpop.f32.mrf.mxu0
      %2482 = vmatprep.mubr.bf16.mxu0 0
      %2483 = vmatmul.mubr.bf16.gmra.mxu0 %v2429
      %v2484 = vpop.f32.mrf.mxu0
      %v2485 = vadd.f32 0.0, %v2484
      %v2486 = vpop.f32.mrf.mxu0
      %v2487 = vpop.f32.mrf.mxu0
      %v2488 = vadd.f32 0.0, %v2487
      %v2489 = vpop.f32.mrf.mxu0
      %2490 = vmatprep.mubr.bf16.mxu0 0
      %2491 = vmatmul.mubr.bf16.gmra.mxu0 %v2432
      %v2492 = vpop.f32.mrf.mxu0
      %v2493 = vadd.f32 0.0, %v2492
      %v2494 = vpop.f32.mrf.mxu0
      %v2495 = vpop.f32.mrf.mxu0
      %v2496 = vadd.f32 0.0, %v2495
      %v2497 = vpop.f32.mrf.mxu0
      %2498 = vdwg.mxu0
      %v2499 = vadd.f32 %v2319, %v2469
      %v2500 = vadd.f32 %v2320, %v2472
      %v2501 = vadd.f32 %v2321, %v2477
      %v2502 = vadd.f32 %v2322, %v2480
      %v2503 = vadd.f32 %v2323, %v2485
      %v2504 = vadd.f32 %v2324, %v2488
      %v2505 = vadd.f32 %v2325, %v2493
      %v2506 = vadd.f32 %v2326, %v2496
      %s2507 = scalar_lea.vmem %s7, 112
      %v2508 = vld [vmem:[%s2507] sm:$0xf]
      %v2509 = vld [vmem:[%s2507 + $0x4] sm:$0xf]
      %v2510 = vld [vmem:[%s2507 + $0x8] sm:$0xf]
      %v2511 = vld [vmem:[%s2507 + $0xc] sm:$0xf]
      %v2520 = vunpack.c.l.b16 %v2149
      %v2521 = vunpack.c.l.b16 %v2150
      %v2522 = vunpack.c.l.b16 %v2151
      %v2523 = vunpack.c.l.b16 %v2152
      %v2524 = vunpack.c.l.b16 %v2153
      %v2525 = vunpack.c.l.b16 %v2154
      %v2526 = vunpack.c.l.b16 %v2155
      %v2527 = vunpack.c.l.b16 %v2328
      %v2528 = vpack.c.b16 %v2521, %v2520
      %v2529 = vpack.c.b16 %v2523, %v2522
      %v2530 = vpack.c.b16 %v2525, %v2524
      %v2531 = vpack.c.b16 %v2527, %v2526
      %v2536 = vunpack.c.l.b16 %v2508
      %v2537 = vunpack.c.l.b16 %v2509
      %v2538 = vunpack.c.l.b16 %v2510
      %v2539 = vunpack.c.l.b16 %v2511
      %v2540 = vpack.c.b16 %v2537, %v2536
      %v2541 = vpack.c.b16 %v2539, %v2538
      %v2545 = vsel %vm1244, %v2528, 0
      %v2548 = vsel %vm1244, %v2529, 0
      %v2551 = vsel %vm1244, %v2530, 0
      %v2554 = vsel %vm1244, %v2531, 0
      %2556 = vmatprep.subr.bf16.mxu0 0
      %2557 = vmatpush1.bf16.msra.mxu0 0
      %2558 = vmatprep.subr.bf16.mxu0 0
      %2559 = vmatpush1.bf16.msra.mxu0 0
      %2560 = vmatprep.subr.bf16.mxu0 0
      %2561 = vmatpush1.bf16.msra.mxu0 0
      %2562 = vmatprep.subr.bf16.mxu0 0
      %2563 = vmatpush1.bf16.msra.mxu0 0
      %2564 = vmatprep.subr.bf16.mxu0 0
      %2565 = vmatpush1.bf16.msra.mxu0 0
      %2566 = vmatprep.subr.bf16.mxu0 0
      %2567 = vmatpush1.bf16.msra.mxu0 0
      %2568 = vmatprep.subr.bf16.mxu0 0
      %2569 = vmatpush1.bf16.msra.mxu0 %v2541
      %2570 = vmatprep.subr.bf16.mxu0 0
      %2571 = vmatpush1.bf16.msra.mxu0 %v2540
      %2572 = vmatprep.subr.bf16.mxu0 0
      %2573 = vmatpush2.bf16.msra.mxu0 0
      %2574 = vmatprep.subr.bf16.mxu0 0
      %2575 = vmatpush2.bf16.msra.mxu0 0
      %2576 = vmatprep.subr.bf16.mxu0 0
      %2577 = vmatpush2.bf16.msra.mxu0 0
      %2578 = vmatprep.subr.bf16.mxu0 0
      %2579 = vmatpush2.bf16.msra.mxu0 0
      %2580 = vmatprep.subr.bf16.mxu0 0
      %2581 = vmatpush2.bf16.msra.mxu0 0
      %2582 = vmatprep.subr.bf16.mxu0 0
      %2583 = vmatpush2.bf16.msra.mxu0 0
      %2584 = vmatprep.subr.bf16.mxu0 0
      %2585 = vmatpush2.bf16.msra.mxu0 0
      %2586 = vmatprep.subr.bf16.mxu0 0
      %2587 = vmatpush2.bf16.msra.mxu0 0
      %2588 = vmatprep.mubr.bf16.mxu0 0
      %2589 = vmatmul.mubr.bf16.gmra.mxu0 %v2545
      %v2590 = vpop.f32.mrf.mxu0
      %v2591 = vadd.f32 0.0, %v2590
      %v2592 = vpop.f32.mrf.mxu0
      %v2593 = vpop.f32.mrf.mxu0
      %v2594 = vadd.f32 0.0, %v2593
      %v2595 = vpop.f32.mrf.mxu0
      %2596 = vmatprep.mubr.bf16.mxu0 0
      %2597 = vmatmul.mubr.bf16.gmra.mxu0 %v2548
      %v2598 = vpop.f32.mrf.mxu0
      %v2599 = vadd.f32 0.0, %v2598
      %v2600 = vpop.f32.mrf.mxu0
      %v2601 = vpop.f32.mrf.mxu0
      %v2602 = vadd.f32 0.0, %v2601
      %v2603 = vpop.f32.mrf.mxu0
      %2604 = vmatprep.mubr.bf16.mxu0 0
      %2605 = vmatmul.mubr.bf16.gmra.mxu0 %v2551
      %v2606 = vpop.f32.mrf.mxu0
      %v2607 = vadd.f32 0.0, %v2606
      %v2608 = vpop.f32.mrf.mxu0
      %v2609 = vpop.f32.mrf.mxu0
      %v2610 = vadd.f32 0.0, %v2609
      %v2611 = vpop.f32.mrf.mxu0
      %2612 = vmatprep.mubr.bf16.mxu0 0
      %2613 = vmatmul.mubr.bf16.gmra.mxu0 %v2554
      %v2614 = vpop.f32.mrf.mxu0
      %v2615 = vadd.f32 0.0, %v2614
      %v2616 = vpop.f32.mrf.mxu0
      %v2617 = vpop.f32.mrf.mxu0
      %v2618 = vadd.f32 0.0, %v2617
      %v2619 = vpop.f32.mrf.mxu0
      %2620 = vdwg.mxu0
      %v2621 = vadd.f32 %v2499, %v2591
      %v2622 = vadd.f32 %v2500, %v2594
      %v2623 = vadd.f32 %v2501, %v2599
      %v2624 = vadd.f32 %v2502, %v2602
      %v2625 = vadd.f32 %v2503, %v2607
      %v2626 = vadd.f32 %v2504, %v2610
      %v2627 = vadd.f32 %v2505, %v2615
      %v2628 = vadd.f32 %v2506, %v2618
      %v2629 = vld [vmem:[#allocation2 + $0xc] sm:$0xf]
      %v2630 = vld [vmem:[#allocation2 + $0x10] sm:$0xf]
      %v2631 = vld [vmem:[#allocation2 + $0x14] sm:$0xf]
      %v2632 = vld [vmem:[#allocation2 + $0x18] sm:$0xf]
      %v2633 = vld [vmem:[#allocation2 + $0x1c] sm:$0xf]
      %v2634 = vld [vmem:[#allocation2 + $0x20] sm:$0xf]
      %v2635 = vld [vmem:[#allocation2 + $0x24] sm:$0xf]
      %v2636 = vld [vmem:[#allocation2 + $0x28] sm:$0xf]
      %v2637 = vld [vmem:[#allocation2 + $0x2c] sm:$0x1]
      %v2638 = vmul.bf16 %v2629, %v1601
      %v2639 = vmul.bf16 %v2630, %v1610
      %v2640 = vmul.bf16 %v2631, %v1619
      %v2641 = vmul.bf16 %v2632, %v1628
      %v2642 = vmul.bf16 %v2633, %v1637
      %v2643 = vmul.bf16 %v2634, %v1646
      %v2644 = vmul.bf16 %v2635, %v1655
      %v2645 = vmul.bf16 %v2636, %v1664
      %v2646 = vmul.bf16 %v2637, %v1665
      %s2647 = scalar_lea.vmem %s7, 128
      %v2648 = vld [vmem:[%s2647] sm:$0xf]
      %v2649 = vld [vmem:[%s2647 + $0x4] sm:$0xf]
      %v2650 = vld [vmem:[%s2647 + $0x8] sm:$0xf]
      %v2651 = vld [vmem:[%s2647 + $0xc] sm:$0xf]
      %v2661 = vunpack.c.l.b16 %v2638
      %v2662 = vunpack.c.l.b16 %v2639
      %v2663 = vunpack.c.l.b16 %v2640
      %v2664 = vunpack.c.l.b16 %v2641
      %v2665 = vunpack.c.l.b16 %v2642
      %v2666 = vunpack.c.l.b16 %v2643
      %v2667 = vunpack.c.l.b16 %v2644
      %v2668 = vunpack.c.l.b16 %v2645
      %v2669 = vunpack.c.l.b16 %v2646
      %v2670 = vpack.c.b16 %v2662, %v2661
      %v2671 = vpack.c.b16 %v2664, %v2663
      %v2672 = vpack.c.b16 %v2666, %v2665
      %v2673 = vpack.c.b16 %v2668, %v2667
      %v2674 = vpack.c.b16 %v2669, %v2669
      %v2676 = vshrl.u32 %v2670, 16
      %v2678 = vshll.u32 %v2670, 16
      %v2680 = vrot.slane %v2678, 1
      %v2681 = vor.u32 %v2676, %v2680
      %v2683 = vshll.u32 %v2671, 16
      %v2685 = vrot.slane %v2683, 1
      %v2686 = vsel %vm1712, %v2681, %v2685
      %v2687 = vshrl.u32 %v2671, 16
      %v2689 = vor.u32 %v2687, %v2685
      %v2691 = vshll.u32 %v2672, 16
      %v2693 = vrot.slane %v2691, 1
      %v2694 = vsel %vm1712, %v2689, %v2693
      %v2695 = vshrl.u32 %v2672, 16
      %v2697 = vor.u32 %v2695, %v2693
      %v2699 = vshll.u32 %v2673, 16
      %v2701 = vrot.slane %v2699, 1
      %v2702 = vsel %vm1712, %v2697, %v2701
      %v2703 = vshrl.u32 %v2673, 16
      %v2705 = vor.u32 %v2703, %v2701
      %v2707 = vshll.u32 %v2674, 16
      %v2709 = vrot.slane %v2707, 1
      %v2710 = vsel %vm1712, %v2705, %v2709
      %v2715 = vunpack.c.l.b16 %v2648
      %v2716 = vunpack.c.l.b16 %v2649
      %v2717 = vunpack.c.l.b16 %v2650
      %v2718 = vunpack.c.l.b16 %v2651
      %v2719 = vpack.c.b16 %v2716, %v2715
      %v2720 = vpack.c.b16 %v2718, %v2717
      %v2724 = vsel %vm1244, %v2686, 0
      %v2727 = vsel %vm1244, %v2694, 0
      %v2730 = vsel %vm1244, %v2702, 0
      %v2733 = vsel %vm1244, %v2710, 0
      %2735 = vmatprep.subr.bf16.mxu0 0
      %2736 = vmatpush1.bf16.msra.mxu0 0
      %2737 = vmatprep.subr.bf16.mxu0 0
      %2738 = vmatpush1.bf16.msra.mxu0 0
      %2739 = vmatprep.subr.bf16.mxu0 0
      %2740 = vmatpush1.bf16.msra.mxu0 0
      %2741 = vmatprep.subr.bf16.mxu0 0
      %2742 = vmatpush1.bf16.msra.mxu0 0
      %2743 = vmatprep.subr.bf16.mxu0 0
      %2744 = vmatpush1.bf16.msra.mxu0 0
      %2745 = vmatprep.subr.bf16.mxu0 0
      %2746 = vmatpush1.bf16.msra.mxu0 0
      %2747 = vmatprep.subr.bf16.mxu0 0
      %2748 = vmatpush1.bf16.msra.mxu0 %v2720
      %2749 = vmatprep.subr.bf16.mxu0 0
      %2750 = vmatpush1.bf16.msra.mxu0 %v2719
      %2751 = vmatprep.subr.bf16.mxu0 0
      %2752 = vmatpush2.bf16.msra.mxu0 0
      %2753 = vmatprep.subr.bf16.mxu0 0
      %2754 = vmatpush2.bf16.msra.mxu0 0
      %2755 = vmatprep.subr.bf16.mxu0 0
      %2756 = vmatpush2.bf16.msra.mxu0 0
      %2757 = vmatprep.subr.bf16.mxu0 0
      %2758 = vmatpush2.bf16.msra.mxu0 0
      %2759 = vmatprep.subr.bf16.mxu0 0
      %2760 = vmatpush2.bf16.msra.mxu0 0
      %2761 = vmatprep.subr.bf16.mxu0 0
      %2762 = vmatpush2.bf16.msra.mxu0 0
      %2763 = vmatprep.subr.bf16.mxu0 0
      %2764 = vmatpush2.bf16.msra.mxu0 0
      %2765 = vmatprep.subr.bf16.mxu0 0
      %2766 = vmatpush2.bf16.msra.mxu0 0
      %2767 = vmatprep.mubr.bf16.mxu0 0
      %2768 = vmatmul.mubr.bf16.gmra.mxu0 %v2724
      %v2769 = vpop.f32.mrf.mxu0
      %v2770 = vadd.f32 0.0, %v2769
      %v2771 = vpop.f32.mrf.mxu0
      %v2772 = vpop.f32.mrf.mxu0
      %v2773 = vadd.f32 0.0, %v2772
      %v2774 = vpop.f32.mrf.mxu0
      %2775 = vmatprep.mubr.bf16.mxu0 0
      %2776 = vmatmul.mubr.bf16.gmra.mxu0 %v2727
      %v2777 = vpop.f32.mrf.mxu0
      %v2778 = vadd.f32 0.0, %v2777
      %v2779 = vpop.f32.mrf.mxu0
      %v2780 = vpop.f32.mrf.mxu0
      %v2781 = vadd.f32 0.0, %v2780
      %v2782 = vpop.f32.mrf.mxu0
      %2783 = vmatprep.mubr.bf16.mxu0 0
      %2784 = vmatmul.mubr.bf16.gmra.mxu0 %v2730
      %v2785 = vpop.f32.mrf.mxu0
      %v2786 = vadd.f32 0.0, %v2785
      %v2787 = vpop.f32.mrf.mxu0
      %v2788 = vpop.f32.mrf.mxu0
      %v2789 = vadd.f32 0.0, %v2788
      %v2790 = vpop.f32.mrf.mxu0
      %2791 = vmatprep.mubr.bf16.mxu0 0
      %2792 = vmatmul.mubr.bf16.gmra.mxu0 %v2733
      %v2793 = vpop.f32.mrf.mxu0
      %v2794 = vadd.f32 0.0, %v2793
      %v2795 = vpop.f32.mrf.mxu0
      %v2796 = vpop.f32.mrf.mxu0
      %v2797 = vadd.f32 0.0, %v2796
      %v2798 = vpop.f32.mrf.mxu0
      %2799 = vdwg.mxu0
      %v2800 = vadd.f32 %v2621, %v2770
      %v2801 = vadd.f32 %v2622, %v2773
      %v2802 = vadd.f32 %v2623, %v2778
      %v2803 = vadd.f32 %v2624, %v2781
      %v2804 = vadd.f32 %v2625, %v2786
      %v2805 = vadd.f32 %v2626, %v2789
      %v2806 = vadd.f32 %v2627, %v2794
      %v2807 = vadd.f32 %v2628, %v2797
      %v2808 = vld [vmem:[%s8] sm:$0x1]
      %v2810 = vlaneseq
      %v2811 = vshrl.u32 %v2810, 7
      %v2812 = vsub.s32 0, %v2811
      %v2813 = vrot.slane %v2808, %v2812
      %v2815 = vmul.f32 %v2800, %v2813
      %v2816 = vmul.f32 %v2801, %v2813
      %v2817 = vmul.f32 %v2802, %v2813
      %v2818 = vmul.f32 %v2803, %v2813
      %v2819 = vmul.f32 %v2804, %v2813
      %v2820 = vmul.f32 %v2805, %v2813
      %v2821 = vmul.f32 %v2806, %v2813
      %v2822 = vmul.f32 %v2807, %v2813
      %v2823 = vld [vmem:[%s9] sm:$0x1]
      %v2825 = vlaneseq
      %v2826 = vshrl.u32 %v2825, 7
      %v2827 = vsub.s32 0, %v2826
      %v2828 = vrot.slane %v2823, %v2827
      %v2830 = vadd.f32 %v2815, %v2828
      %v2831 = vadd.f32 %v2816, %v2828
      %v2832 = vadd.f32 %v2817, %v2828
      %v2833 = vadd.f32 %v2818, %v2828
      %v2834 = vadd.f32 %v2819, %v2828
      %v2835 = vadd.f32 %v2820, %v2828
      %v2836 = vadd.f32 %v2821, %v2828
      %v2837 = vadd.f32 %v2822, %v2828
      %v2838 = vmax.f32 %v2830, 0.0
      %v2839 = vmax.f32 %v2831, 0.0
      %v2840 = vmax.f32 %v2832, 0.0
      %v2841 = vmax.f32 %v2833, 0.0
      %v2842 = vmax.f32 %v2834, 0.0
      %v2843 = vmax.f32 %v2835, 0.0
      %v2844 = vmax.f32 %v2836, 0.0
      %v2845 = vmax.f32 %v2837, 0.0
      %v2846 = vpack.c.bf16 %v2839, %v2838
      %v2847 = vpack.c.bf16 %v2841, %v2840
      %v2848 = vpack.c.bf16 %v2843, %v2842
      %v2849 = vpack.c.bf16 %v2845, %v2844
      %v2850 = vld [vmem:[%s10] sm:$0xf]
      %v2851 = vld [vmem:[%s10 + $0x4] sm:$0xf]
      %v2852 = vld [vmem:[%s10 + $0x8] sm:$0xf]
      %v2853 = vld [vmem:[%s10 + $0xc] sm:$0xf]
      %v2858 = vunpack.c.l.b16 %v2850
      %v2859 = vunpack.c.l.b16 %v2851
      %v2860 = vunpack.c.l.b16 %v2852
      %v2861 = vunpack.c.l.b16 %v2853
      %v2862 = vpack.c.b16 %v2859, %v2858
      %v2863 = vpack.c.b16 %v2861, %v2860
      %v2867 = vsel %vm1244, %v2846, 0
      %v2870 = vsel %vm1244, %v2847, 0
      %v2873 = vsel %vm1244, %v2848, 0
      %v2876 = vsel %vm1244, %v2849, 0
      %2878 = vmatprep.subr.bf16.mxu0 0
      %2879 = vmatpush1.bf16.msra.mxu0 0
      %2880 = vmatprep.subr.bf16.mxu0 0
      %2881 = vmatpush1.bf16.msra.mxu0 0
      %2882 = vmatprep.subr.bf16.mxu0 0
      %2883 = vmatpush1.bf16.msra.mxu0 0
      %2884 = vmatprep.subr.bf16.mxu0 0
      %2885 = vmatpush1.bf16.msra.mxu0 0
      %2886 = vmatprep.subr.bf16.mxu0 0
      %2887 = vmatpush1.bf16.msra.mxu0 0
      %2888 = vmatprep.subr.bf16.mxu0 0
      %2889 = vmatpush1.bf16.msra.mxu0 0
      %2890 = vmatprep.subr.bf16.mxu0 0
      %2891 = vmatpush1.bf16.msra.mxu0 %v2863
      %2892 = vmatprep.subr.bf16.mxu0 0
      %2893 = vmatpush1.bf16.msra.mxu0 %v2862
      %2894 = vmatprep.subr.bf16.mxu0 0
      %2895 = vmatpush2.bf16.msra.mxu0 0
      %2896 = vmatprep.subr.bf16.mxu0 0
      %2897 = vmatpush2.bf16.msra.mxu0 0
      %2898 = vmatprep.subr.bf16.mxu0 0
      %2899 = vmatpush2.bf16.msra.mxu0 0
      %2900 = vmatprep.subr.bf16.mxu0 0
      %2901 = vmatpush2.bf16.msra.mxu0 0
      %2902 = vmatprep.subr.bf16.mxu0 0
      %2903 = vmatpush2.bf16.msra.mxu0 0
      %2904 = vmatprep.subr.bf16.mxu0 0
      %2905 = vmatpush2.bf16.msra.mxu0 0
      %2906 = vmatprep.subr.bf16.mxu0 0
      %2907 = vmatpush2.bf16.msra.mxu0 0
      %2908 = vmatprep.subr.bf16.mxu0 0
      %2909 = vmatpush2.bf16.msra.mxu0 0
      %2910 = vmatprep.mubr.bf16.mxu0 0
      %2911 = vmatmul.mubr.bf16.gmra.mxu0 %v2867
      %v2912 = vpop.f32.mrf.mxu0
      %v2913 = vadd.f32 0.0, %v2912
      %v2914 = vpop.f32.mrf.mxu0
      %v2915 = vpop.f32.mrf.mxu0
      %v2916 = vadd.f32 0.0, %v2915
      %v2917 = vpop.f32.mrf.mxu0
      %2918 = vmatprep.mubr.bf16.mxu0 0
      %2919 = vmatmul.mubr.bf16.gmra.mxu0 %v2870
      %v2920 = vpop.f32.mrf.mxu0
      %v2921 = vadd.f32 0.0, %v2920
      %v2922 = vpop.f32.mrf.mxu0
      %v2923 = vpop.f32.mrf.mxu0
      %v2924 = vadd.f32 0.0, %v2923
      %v2925 = vpop.f32.mrf.mxu0
      %2926 = vmatprep.mubr.bf16.mxu0 0
      %2927 = vmatmul.mubr.bf16.gmra.mxu0 %v2873
      %v2928 = vpop.f32.mrf.mxu0
      %v2929 = vadd.f32 0.0, %v2928
      %v2930 = vpop.f32.mrf.mxu0
      %v2931 = vpop.f32.mrf.mxu0
      %v2932 = vadd.f32 0.0, %v2931
      %v2933 = vpop.f32.mrf.mxu0
      %2934 = vmatprep.mubr.bf16.mxu0 0
      %2935 = vmatmul.mubr.bf16.gmra.mxu0 %v2876
      %v2936 = vpop.f32.mrf.mxu0
      %v2937 = vadd.f32 0.0, %v2936
      %v2938 = vpop.f32.mrf.mxu0
      %v2939 = vpop.f32.mrf.mxu0
      %v2940 = vadd.f32 0.0, %v2939
      %v2941 = vpop.f32.mrf.mxu0
      %2942 = vdwg.mxu0
      %v2943 = vpack.c.bf16 %v740, %v739
      %v2944 = vpack.c.bf16 %v742, %v741
      %v2945 = vpack.c.bf16 %v744, %v743
      %v2946 = vpack.c.bf16 %v746, %v745
      %v2947 = vld [vmem:[%s13] sm:$0xf]
      %v2948 = vld [vmem:[%s13 + $0x4] sm:$0xf]
      %v2949 = vld [vmem:[%s13 + $0x8] sm:$0xf]
      %v2950 = vld [vmem:[%s13 + $0xc] sm:$0xf]
      %v2951 = vld [vmem:[%s13 + $0x10] sm:$0xf]
      %v2952 = vld [vmem:[%s13 + $0x14] sm:$0xf]
      %v2953 = vld [vmem:[%s13 + $0x18] sm:$0xf]
      %v2954 = vld [vmem:[%s13 + $0x1c] sm:$0xf]
      %v2963 = vunpack.c.l.b16 %v2947
      %v2964 = vunpack.c.l.b16 %v2948
      %v2965 = vunpack.c.l.b16 %v2949
      %v2966 = vunpack.c.l.b16 %v2950
      %v2967 = vunpack.c.l.b16 %v2951
      %v2968 = vunpack.c.l.b16 %v2952
      %v2969 = vunpack.c.l.b16 %v2953
      %v2970 = vunpack.c.l.b16 %v2954
      %v2971 = vpack.c.b16 %v2964, %v2963
      %v2972 = vpack.c.b16 %v2966, %v2965
      %v2973 = vpack.c.b16 %v2968, %v2967
      %v2974 = vpack.c.b16 %v2970, %v2969
      %v2980 = vsel %vm821, %v2943, 0
      %v2983 = vsel %vm821, %v2944, 0
      %v2986 = vsel %vm821, %v2945, 0
      %v2989 = vsel %vm821, %v2946, 0
      %2991 = vmatprep.subr.bf16.mxu0 0
      %2992 = vmatpush1.bf16.msra.mxu0 0
      %2993 = vmatprep.subr.bf16.mxu0 0
      %2994 = vmatpush1.bf16.msra.mxu0 0
      %2995 = vmatprep.subr.bf16.mxu0 0
      %2996 = vmatpush1.bf16.msra.mxu0 0
      %2997 = vmatprep.subr.bf16.mxu0 0
      %2998 = vmatpush1.bf16.msra.mxu0 0
      %2999 = vmatprep.subr.bf16.mxu0 0
      %3000 = vmatpush1.bf16.msra.mxu0 %v2974
      %3001 = vmatprep.subr.bf16.mxu0 0
      %3002 = vmatpush1.bf16.msra.mxu0 %v2973
      %3003 = vmatprep.subr.bf16.mxu0 0
      %3004 = vmatpush1.bf16.msra.mxu0 %v2972
      %3005 = vmatprep.subr.bf16.mxu0 0
      %3006 = vmatpush1.bf16.msra.mxu0 %v2971
      %3007 = vmatprep.subr.bf16.mxu0 0
      %3008 = vmatpush2.bf16.msra.mxu0 0
      %3009 = vmatprep.subr.bf16.mxu0 0
      %3010 = vmatpush2.bf16.msra.mxu0 0
      %3011 = vmatprep.subr.bf16.mxu0 0
      %3012 = vmatpush2.bf16.msra.mxu0 0
      %3013 = vmatprep.subr.bf16.mxu0 0
      %3014 = vmatpush2.bf16.msra.mxu0 0
      %3015 = vmatprep.subr.bf16.mxu0 0
      %3016 = vmatpush2.bf16.msra.mxu0 0
      %3017 = vmatprep.subr.bf16.mxu0 0
      %3018 = vmatpush2.bf16.msra.mxu0 0
      %3019 = vmatprep.subr.bf16.mxu0 0
      %3020 = vmatpush2.bf16.msra.mxu0 0
      %3021 = vmatprep.subr.bf16.mxu0 0
      %3022 = vmatpush2.bf16.msra.mxu0 0
      %3023 = vmatprep.mubr.bf16.mxu0 0
      %3024 = vmatmul.mubr.bf16.gmra.mxu0 %v2980
      %v3025 = vpop.f32.mrf.mxu0
      %v3026 = vadd.f32 0.0, %v3025
      %v3027 = vpop.f32.mrf.mxu0
      %v3028 = vpop.f32.mrf.mxu0
      %v3029 = vadd.f32 0.0, %v3028
      %v3030 = vpop.f32.mrf.mxu0
      %3031 = vmatprep.mubr.bf16.mxu0 0
      %3032 = vmatmul.mubr.bf16.gmra.mxu0 %v2983
      %v3033 = vpop.f32.mrf.mxu0
      %v3034 = vadd.f32 0.0, %v3033
      %v3035 = vpop.f32.mrf.mxu0
      %v3036 = vpop.f32.mrf.mxu0
      %v3037 = vadd.f32 0.0, %v3036
      %v3038 = vpop.f32.mrf.mxu0
      %3039 = vmatprep.mubr.bf16.mxu0 0
      %3040 = vmatmul.mubr.bf16.gmra.mxu0 %v2986
      %v3041 = vpop.f32.mrf.mxu0
      %v3042 = vadd.f32 0.0, %v3041
      %v3043 = vpop.f32.mrf.mxu0
      %v3044 = vpop.f32.mrf.mxu0
      %v3045 = vadd.f32 0.0, %v3044
      %v3046 = vpop.f32.mrf.mxu0
      %3047 = vmatprep.mubr.bf16.mxu0 0
      %3048 = vmatmul.mubr.bf16.gmra.mxu0 %v2989
      %v3049 = vpop.f32.mrf.mxu0
      %v3050 = vadd.f32 0.0, %v3049
      %v3051 = vpop.f32.mrf.mxu0
      %v3052 = vpop.f32.mrf.mxu0
      %v3053 = vadd.f32 0.0, %v3052
      %v3054 = vpop.f32.mrf.mxu0
      %3055 = vdwg.mxu0
      %v3056 = vld [vmem:[%s14] sm:$0x1]
      %v3058 = vlaneseq
      %v3059 = vshrl.u32 %v3058, 7
      %v3060 = vsub.s32 0, %v3059
      %v3061 = vrot.slane %v3056, %v3060
      %v3063 = vmul.f32 %v3026, %v3061
      %v3064 = vmul.f32 %v3029, %v3061
      %v3065 = vmul.f32 %v3034, %v3061
      %v3066 = vmul.f32 %v3037, %v3061
      %v3067 = vmul.f32 %v3042, %v3061
      %v3068 = vmul.f32 %v3045, %v3061
      %v3069 = vmul.f32 %v3050, %v3061
      %v3070 = vmul.f32 %v3053, %v3061
      %v3071 = vld [vmem:[%s15] sm:$0x1]
      %v3073 = vlaneseq
      %v3074 = vshrl.u32 %v3073, 7
      %v3075 = vsub.s32 0, %v3074
      %v3076 = vrot.slane %v3071, %v3075
      %v3078 = vadd.f32 %v3063, %v3076
      %v3079 = vadd.f32 %v3064, %v3076
      %v3080 = vadd.f32 %v3065, %v3076
      %v3081 = vadd.f32 %v3066, %v3076
      %v3082 = vadd.f32 %v3067, %v3076
      %v3083 = vadd.f32 %v3068, %v3076
      %v3084 = vadd.f32 %v3069, %v3076
      %v3085 = vadd.f32 %v3070, %v3076
      %v3086 = vadd.f32 %v3078, %v2913
      %v3087 = vadd.f32 %v3079, %v2916
      %v3088 = vadd.f32 %v3080, %v2921
      %v3089 = vadd.f32 %v3081, %v2924
      %v3090 = vadd.f32 %v3082, %v2929
      %v3091 = vadd.f32 %v3083, %v2932
      %v3092 = vadd.f32 %v3084, %v2937
      %v3093 = vadd.f32 %v3085, %v2940
      %3094 = vst [vmem:[%s541] sm:$0xff] %v3086
      %3095 = vst [vmem:[%s541 + $0x8] sm:$0xff] %v3087
      %3096 = vst [vmem:[%s541 + $0x10] sm:$0xff] %v3088
      %3097 = vst [vmem:[%s541 + $0x18] sm:$0xff] %v3089
      %3098 = vst [vmem:[%s541 + $0x20] sm:$0xff] %v3090
      %3099 = vst [vmem:[%s541 + $0x28] sm:$0xff] %v3091
      %3100 = vst [vmem:[%s541 + $0x30] sm:$0xff] %v3092
      %3101 = vst [vmem:[%s541 + $0x38] sm:$0xff] %v3093
      %p3102 = scmp.lt.s32.totalorder %s27, 1
      %s3103 = scalar_select %p3102, %s27, 1
      %s3104 = smul.addr %s3103, 8
      %s3105 = smul.addr %s3104, 8
      %s3106 = scalar_lea.vmem %s16, %s3105
      // Predicated region
      $region85: #{downsample_forward.2} parent=83 // pred_check
        %p3107 = pneg %p391
      $region86: #{downsample_forward.2} parent=83 // pred_check_branch
        %3109 = sbr.rel (%p3107) target = $region88
      $region87: #{downsample_forward.2} parent=83 // pred_region
        _
      $region88: #{downsample_forward.2} parent=83 // pred_fallthru
        _
    $region84: #{downsample_forward.2} parent=5 // pred_fallthru
      _
    %p3110 = scmp.le.s32.totalorder 2, %s22
    // Predicated region
    $region89: #{downsample_forward.2} parent=5 // pred_check
      %p3111 = pneg %p3110
    $region90: #{downsample_forward.2} parent=5 // pred_check_branch
      %3113 = sbr.rel (%p3111) target = $region92
    $region91: #{downsample_forward.2} parent=5 // pred_region
      %s3114 = ssub.s32 %s22, 2
      // Predicated region
      $region93: #{downsample_forward.2} parent=91 // pred_check
        %p3115 = pneg %p397
      $region94: #{downsample_forward.2} parent=91 // pred_check_branch
        %3117 = sbr.rel (%p3115) target = $region96
      $region95: #{downsample_forward.2} parent=91 // pred_region
        %p3118 = scmp.lt.s32.totalorder %s28, 1
        %s3119 = scalar_select %p3118, %s28, 1
        %s3120 = smul.addr %s3119, 8
        %s3121 = smul.addr %s3120, 8
        %s3122 = scalar_lea.vmem %s16, %s3121
      $region96: #{downsample_forward.2} parent=91 // pred_fallthru
        _
    $region92: #{downsample_forward.2} parent=5 // pred_fallthru
      _
  $region6: #{downsample_forward.2} parent=0 // loop_footer
    %s26 = sadd.s32 1, %s22
  $region7: #{downsample_forward.2} parent=0 // loop_footer_branch
    %21 = sbr.rel target = $region3
  $region8: #{downsample_forward.2} parent=0 // loop_exit
    _

// kernel: downsample_forward.3
$region0: #{downsample_forward.3}
  #allocation0 [shape = 'u32[]', space=smem, size = 0x4, offset = 0x4, fixed_abs, tag = 'smem constant byte address 0x4 - core index']
  #allocation1 [shape = 'u32[144,128]{1,0:T(1,128)}', space=vmem, size = 0x12000, scoped, tag = 'internal scratch']
  #allocation2 [shape = 'bf16[96,32]{1,0:T(8,128)(2,1)}', space=vmem, size = 0x6000, scoped, tag = 'scratch operand']
  %s0 = inlined_call_operand.vmem [shape: f32[2,64,128], index: 0, kind: input, shape index: {}]
  %s1 = inlined_call_operand.vmem [shape: f32[1,128], index: 1, kind: input, shape index: {}]
  %s2 = inlined_call_operand.vmem [shape: f32[1,128], index: 2, kind: input, shape index: {}]
  %s3 = inlined_call_operand.vmem [shape: bf16[128,32], index: 3, kind: input, shape index: {}]
  %s4 = inlined_call_operand.vmem [shape: f32[1,32], index: 4, kind: input, shape index: {}]
  %s5 = inlined_call_operand.vmem [shape: f32[1,32], index: 5, kind: input, shape index: {}]
  %s6 = inlined_call_operand.vmem [shape: bf16[9,32,32], index: 6, kind: input, shape index: {}]
  %s7 = inlined_call_operand.vmem [shape: f32[1,32], index: 7, kind: input, shape index: {}]
  %s8 = inlined_call_operand.vmem [shape: f32[1,32], index: 8, kind: input, shape index: {}]
  %s9 = inlined_call_operand.vmem [shape: bf16[32,128], index: 9, kind: input, shape index: {}]
  %s10 = inlined_call_operand.vmem [shape: bf16[64,1], index: 10, kind: input, shape index: {}]
  %s11 = inlined_call_operand.vmem [shape: bf16[64,1], index: 11, kind: input, shape index: {}]
  %s12 = inlined_call_operand.hbm [shape: f32[2,64,128], index: 12, kind: output, shape index: {}]
  %s13 = sld [smem:[#allocation0]]
  $region81: #{downsample_forward.3} parent=0
    _
  %s15 = ssub.s32 1, %s13
  %s16 = scalar_select 0, %s15, %s13
  $region1: #{downsample_forward.3} parent=0
    #allocation3 [shape = 'u8[65536]{0}', space=vmem, size = 0x10000, scoped, tag = 'output window, operand 0']
    #allocation4 [shape = 's32[2]{0}', space=sflag, size = 0x8, scoped, tag = 'scoped memory for downsample_forward.3']
    %17 = vsyncpa [#allocation4], 0
    %s18 = scalar_lea.sflag [#allocation4], 1
    %19 = vsyncpa %s18, 0
    loop: start=0, step=1, limit=4
    $region2: #{downsample_forward.3} parent=1 // loop_pre_header
      _
    $region3: #{downsample_forward.3} parent=1 // loop_header
      %s21 = sphi 0, %s25
      %p22 = scmp.ge.s32.totalorder %s21, 4
      %s31 = sphi 0, %s33
      %s34 = sphi 0, %s31
      %s35 = sphi 0, %s34
      %s51 = sphi 0, %s35
      %s55 = sphi 0, %s55
      %s57 = sphi 0, %s55
      %s58 = sphi 0, %s57
      %s72 = sphi 0, %s58
      %s76 = sphi 0, %s76
      %s78 = sphi 0, %s76
      %s79 = sphi 0, %s78
      %s93 = sphi 0, %s79
      %s97 = sphi 0, %s97
      %s99 = sphi 0, %s97
      %s100 = sphi 0, %s99
      %s114 = sphi 0, %s100
      %s118 = sphi 0, %s118
      %s120 = sphi 0, %s118
      %s121 = sphi 0, %s120
      %s135 = sphi 0, %s121
      %s139 = sphi 0, %s139
      %s141 = sphi 0, %s139
      %s142 = sphi 0, %s141
      %s156 = sphi 0, %s142
      %s160 = sphi 0, %s160
      %s162 = sphi 0, %s160
      %s163 = sphi 0, %s162
      %s177 = sphi 0, %s163
      %s181 = sphi 0, %s181
      %s183 = sphi 0, %s181
      %s184 = sphi 0, %s183
      %s198 = sphi 0, %s184
      %s202 = sphi 0, %s202
      %s204 = sphi 0, %s202
      %s205 = sphi 0, %s204
      %s219 = sphi 0, %s205
      %s223 = sphi 0, %s223
      %s225 = sphi 0, %s223
      %s226 = sphi 0, %s225
      %s240 = sphi 0, %s226
      %s244 = sphi 0, %s244
      %s246 = sphi 0, %s244
      %s247 = sphi 0, %s246
      %s261 = sphi 0, %s247
      %s265 = sphi 0, %s265
      %s267 = sphi 0, %s265
      %s268 = sphi 0, %s267
      %s282 = sphi 0, %s268
      %s288 = sphi 0, %s290
      %s291 = sphi 0, %s288
      %s292 = sphi 0, %s291
      %s308 = sphi 0, %s292
    $region4: #{downsample_forward.3} parent=1 // loop_header_branch
      %24 = sbr.rel (%p22) target = $region8
    $region5: #{downsample_forward.3} parent=1 // loop_body
      %s26 = ssub.s32 %s21, 1
      %s27 = ssub.s32 %s21, 2
      %s28 = sadd.s32 %s21, 1
      %s29 = ssub.s32 %s21, %s28
      %p30 = scmp.eq.s32.totalorder %s29, 0
      %s32 = sadd.s32 %s31, 1
      %s33 = scalar_select %p30, %s31, %s32
      %p36 = pneg %p30
      %p37 = scmp.eq.s32.totalorder %s21, 1
      %p38 = por %p36, %p37
      %p39 = scmp.ne.s32.totalorder %s31, %s34
      %p40 = scmp.eq.s32.totalorder %s21, 0
      %p41 = por %p39, %p40
      %p42 = scmp.ne.s32.totalorder %s31, %s34
      %p43 = scmp.eq.s32.totalorder %s26, 1
      %p44 = por %p42, %p43
      %p45 = scmp.ne.s32.totalorder %s34, %s35
      %p46 = scmp.eq.s32.totalorder %s26, 0
      %p47 = por %p45, %p46
      %p48 = scmp.ne.s32.totalorder %s34, %s35
      %p49 = scmp.eq.s32.totalorder %s27, 1
      %p50 = por %p48, %p49
      %p52 = scmp.ne.s32.totalorder %s35, %s51
      %p53 = scmp.eq.s32.totalorder %s27, 0
      %p54 = por %p52, %p53
      %s56 = sadd.s32 %s55, 1
      %p59 = scmp.eq.s32.totalorder %s21, 1
      %p60 = scmp.ne.s32.totalorder %s55, %s57
      %p61 = scmp.eq.s32.totalorder %s21, 0
      %p62 = por %p60, %p61
      %p63 = scmp.ne.s32.totalorder %s55, %s57
      %p64 = scmp.eq.s32.totalorder %s26, 1
      %p65 = por %p63, %p64
      %p66 = scmp.ne.s32.totalorder %s57, %s58
      %p67 = scmp.eq.s32.totalorder %s26, 0
      %p68 = por %p66, %p67
      %p69 = scmp.ne.s32.totalorder %s57, %s58
      %p70 = scmp.eq.s32.totalorder %s27, 1
      %p71 = por %p69, %p70
      %p73 = scmp.ne.s32.totalorder %s58, %s72
      %p74 = scmp.eq.s32.totalorder %s27, 0
      %p75 = por %p73, %p74
      %s77 = sadd.s32 %s76, 1
      %p80 = scmp.eq.s32.totalorder %s21, 1
      %p81 = scmp.ne.s32.totalorder %s76, %s78
      %p82 = scmp.eq.s32.totalorder %s21, 0
      %p83 = por %p81, %p82
      %p84 = scmp.ne.s32.totalorder %s76, %s78
      %p85 = scmp.eq.s32.totalorder %s26, 1
      %p86 = por %p84, %p85
      %p87 = scmp.ne.s32.totalorder %s78, %s79
      %p88 = scmp.eq.s32.totalorder %s26, 0
      %p89 = por %p87, %p88
      %p90 = scmp.ne.s32.totalorder %s78, %s79
      %p91 = scmp.eq.s32.totalorder %s27, 1
      %p92 = por %p90, %p91
      %p94 = scmp.ne.s32.totalorder %s79, %s93
      %p95 = scmp.eq.s32.totalorder %s27, 0
      %p96 = por %p94, %p95
      %s98 = sadd.s32 %s97, 1
      %p101 = scmp.eq.s32.totalorder %s21, 1
      %p102 = scmp.ne.s32.totalorder %s97, %s99
      %p103 = scmp.eq.s32.totalorder %s21, 0
      %p104 = por %p102, %p103
      %p105 = scmp.ne.s32.totalorder %s97, %s99
      %p106 = scmp.eq.s32.totalorder %s26, 1
      %p107 = por %p105, %p106
      %p108 = scmp.ne.s32.totalorder %s99, %s100
      %p109 = scmp.eq.s32.totalorder %s26, 0
      %p110 = por %p108, %p109
      %p111 = scmp.ne.s32.totalorder %s99, %s100
      %p112 = scmp.eq.s32.totalorder %s27, 1
      %p113 = por %p111, %p112
      %p115 = scmp.ne.s32.totalorder %s100, %s114
      %p116 = scmp.eq.s32.totalorder %s27, 0
      %p117 = por %p115, %p116
      %s119 = sadd.s32 %s118, 1
      %p122 = scmp.eq.s32.totalorder %s21, 1
      %p123 = scmp.ne.s32.totalorder %s118, %s120
      %p124 = scmp.eq.s32.totalorder %s21, 0
      %p125 = por %p123, %p124
      %p126 = scmp.ne.s32.totalorder %s118, %s120
      %p127 = scmp.eq.s32.totalorder %s26, 1
      %p128 = por %p126, %p127
      %p129 = scmp.ne.s32.totalorder %s120, %s121
      %p130 = scmp.eq.s32.totalorder %s26, 0
      %p131 = por %p129, %p130
      %p132 = scmp.ne.s32.totalorder %s120, %s121
      %p133 = scmp.eq.s32.totalorder %s27, 1
      %p134 = por %p132, %p133
      %p136 = scmp.ne.s32.totalorder %s121, %s135
      %p137 = scmp.eq.s32.totalorder %s27, 0
      %p138 = por %p136, %p137
      %s140 = sadd.s32 %s139, 1
      %p143 = scmp.eq.s32.totalorder %s21, 1
      %p144 = scmp.ne.s32.totalorder %s139, %s141
      %p145 = scmp.eq.s32.totalorder %s21, 0
      %p146 = por %p144, %p145
      %p147 = scmp.ne.s32.totalorder %s139, %s141
      %p148 = scmp.eq.s32.totalorder %s26, 1
      %p149 = por %p147, %p148
      %p150 = scmp.ne.s32.totalorder %s141, %s142
      %p151 = scmp.eq.s32.totalorder %s26, 0
      %p152 = por %p150, %p151
      %p153 = scmp.ne.s32.totalorder %s141, %s142
      %p154 = scmp.eq.s32.totalorder %s27, 1
      %p155 = por %p153, %p154
      %p157 = scmp.ne.s32.totalorder %s142, %s156
      %p158 = scmp.eq.s32.totalorder %s27, 0
      %p159 = por %p157, %p158
      %s161 = sadd.s32 %s160, 1
      %p164 = scmp.eq.s32.totalorder %s21, 1
      %p165 = scmp.ne.s32.totalorder %s160, %s162
      %p166 = scmp.eq.s32.totalorder %s21, 0
      %p167 = por %p165, %p166
      %p168 = scmp.ne.s32.totalorder %s160, %s162
      %p169 = scmp.eq.s32.totalorder %s26, 1
      %p170 = por %p168, %p169
      %p171 = scmp.ne.s32.totalorder %s162, %s163
      %p172 = scmp.eq.s32.totalorder %s26, 0
      %p173 = por %p171, %p172
      %p174 = scmp.ne.s32.totalorder %s162, %s163
      %p175 = scmp.eq.s32.totalorder %s27, 1
      %p176 = por %p174, %p175
      %p178 = scmp.ne.s32.totalorder %s163, %s177
      %p179 = scmp.eq.s32.totalorder %s27, 0
      %p180 = por %p178, %p179
      %s182 = sadd.s32 %s181, 1
      %p185 = scmp.eq.s32.totalorder %s21, 1
      %p186 = scmp.ne.s32.totalorder %s181, %s183
      %p187 = scmp.eq.s32.totalorder %s21, 0
      %p188 = por %p186, %p187
      %p189 = scmp.ne.s32.totalorder %s181, %s183
      %p190 = scmp.eq.s32.totalorder %s26, 1
      %p191 = por %p189, %p190
      %p192 = scmp.ne.s32.totalorder %s183, %s184
      %p193 = scmp.eq.s32.totalorder %s26, 0
      %p194 = por %p192, %p193
      %p195 = scmp.ne.s32.totalorder %s183, %s184
      %p196 = scmp.eq.s32.totalorder %s27, 1
      %p197 = por %p195, %p196
      %p199 = scmp.ne.s32.totalorder %s184, %s198
      %p200 = scmp.eq.s32.totalorder %s27, 0
      %p201 = por %p199, %p200
      %s203 = sadd.s32 %s202, 1
      %p206 = scmp.eq.s32.totalorder %s21, 1
      %p207 = scmp.ne.s32.totalorder %s202, %s204
      %p208 = scmp.eq.s32.totalorder %s21, 0
      %p209 = por %p207, %p208
      %p210 = scmp.ne.s32.totalorder %s202, %s204
      %p211 = scmp.eq.s32.totalorder %s26, 1
      %p212 = por %p210, %p211
      %p213 = scmp.ne.s32.totalorder %s204, %s205
      %p214 = scmp.eq.s32.totalorder %s26, 0
      %p215 = por %p213, %p214
      %p216 = scmp.ne.s32.totalorder %s204, %s205
      %p217 = scmp.eq.s32.totalorder %s27, 1
      %p218 = por %p216, %p217
      %p220 = scmp.ne.s32.totalorder %s205, %s219
      %p221 = scmp.eq.s32.totalorder %s27, 0
      %p222 = por %p220, %p221
      %s224 = sadd.s32 %s223, 1
      %p227 = scmp.eq.s32.totalorder %s21, 1
      %p228 = scmp.ne.s32.totalorder %s223, %s225
      %p229 = scmp.eq.s32.totalorder %s21, 0
      %p230 = por %p228, %p229
      %p231 = scmp.ne.s32.totalorder %s223, %s225
      %p232 = scmp.eq.s32.totalorder %s26, 1
      %p233 = por %p231, %p232
      %p234 = scmp.ne.s32.totalorder %s225, %s226
      %p235 = scmp.eq.s32.totalorder %s26, 0
      %p236 = por %p234, %p235
      %p237 = scmp.ne.s32.totalorder %s225, %s226
      %p238 = scmp.eq.s32.totalorder %s27, 1
      %p239 = por %p237, %p238
      %p241 = scmp.ne.s32.totalorder %s226, %s240
      %p242 = scmp.eq.s32.totalorder %s27, 0
      %p243 = por %p241, %p242
      %s245 = sadd.s32 %s244, 1
      %p248 = scmp.eq.s32.totalorder %s21, 1
      %p249 = scmp.ne.s32.totalorder %s244, %s246
      %p250 = scmp.eq.s32.totalorder %s21, 0
      %p251 = por %p249, %p250
      %p252 = scmp.ne.s32.totalorder %s244, %s246
      %p253 = scmp.eq.s32.totalorder %s26, 1
      %p254 = por %p252, %p253
      %p255 = scmp.ne.s32.totalorder %s246, %s247
      %p256 = scmp.eq.s32.totalorder %s26, 0
      %p257 = por %p255, %p256
      %p258 = scmp.ne.s32.totalorder %s246, %s247
      %p259 = scmp.eq.s32.totalorder %s27, 1
      %p260 = por %p258, %p259
      %p262 = scmp.ne.s32.totalorder %s247, %s261
      %p263 = scmp.eq.s32.totalorder %s27, 0
      %p264 = por %p262, %p263
      %s266 = sadd.s32 %s265, 1
      %p269 = scmp.eq.s32.totalorder %s21, 1
      %p270 = scmp.ne.s32.totalorder %s265, %s267
      %p271 = scmp.eq.s32.totalorder %s21, 0
      %p272 = por %p270, %p271
      %p273 = scmp.ne.s32.totalorder %s265, %s267
      %p274 = scmp.eq.s32.totalorder %s26, 1
      %p275 = por %p273, %p274
      %p276 = scmp.ne.s32.totalorder %s267, %s268
      %p277 = scmp.eq.s32.totalorder %s26, 0
      %p278 = por %p276, %p277
      %p279 = scmp.ne.s32.totalorder %s267, %s268
      %p280 = scmp.eq.s32.totalorder %s27, 1
      %p281 = por %p279, %p280
      %p283 = scmp.ne.s32.totalorder %s268, %s282
      %p284 = scmp.eq.s32.totalorder %s27, 0
      %p285 = por %p283, %p284
      %s286 = ssub.s32 %s21, %s28
      %p287 = scmp.eq.s32.totalorder %s286, 0
      %s289 = sadd.s32 %s288, 1
      %s290 = scalar_select %p287, %s288, %s289
      %p293 = pneg %p287
      %p294 = scmp.eq.s32.totalorder %s21, 1
      %p295 = por %p293, %p294
      %p296 = scmp.ne.s32.totalorder %s288, %s291
      %p297 = scmp.eq.s32.totalorder %s21, 0
      %p298 = por %p296, %p297
      %p299 = scmp.ne.s32.totalorder %s288, %s291
      %p300 = scmp.eq.s32.totalorder %s26, 1
      %p301 = por %p299, %p300
      %p302 = scmp.ne.s32.totalorder %s291, %s292
      %p303 = scmp.eq.s32.totalorder %s26, 0
      %p304 = por %p302, %p303
      %p305 = scmp.ne.s32.totalorder %s291, %s292
      %p306 = scmp.eq.s32.totalorder %s27, 1
      %p307 = por %p305, %p306
      %p309 = scmp.ne.s32.totalorder %s292, %s308
      %p310 = scmp.eq.s32.totalorder %s27, 0
      %p311 = por %p309, %p310
      %p312 = scmp.le.s32.totalorder 1, %s21
      %p313 = scmp.lt.s32.totalorder %s21, 3
      %p314 = pnand %p312, %p313
      %p315 = pneg %p314
      // Predicated region
      $region9: #{downsample_forward.3} parent=5 // pred_check
        _
      $region10: #{downsample_forward.3} parent=5 // pred_check_branch
        %317 = sbr.rel (%p314) target = $region12
      $region11: #{downsample_forward.3} parent=5 // pred_region
        %s318 = ssub.s32 %s21, 1
        // Predicated region
        $region13: #{downsample_forward.3} parent=11 // pred_check
          %p319 = pneg %p68
        $region14: #{downsample_forward.3} parent=11 // pred_check_branch
          %321 = sbr.rel (%p319) target = $region16
        $region15: #{downsample_forward.3} parent=11 // pred_region
          _
        $region16: #{downsample_forward.3} parent=11 // pred_fallthru
          _
        // Predicated region
        $region17: #{downsample_forward.3} parent=11 // pred_check
          %p322 = pneg %p89
        $region18: #{downsample_forward.3} parent=11 // pred_check_branch
          %324 = sbr.rel (%p322) target = $region20
        $region19: #{downsample_forward.3} parent=11 // pred_region
          _
        $region20: #{downsample_forward.3} parent=11 // pred_fallthru
          _
        // Predicated region
        $region21: #{downsample_forward.3} parent=11 // pred_check
          %p325 = pneg %p110
        $region22: #{downsample_forward.3} parent=11 // pred_check_branch
          %327 = sbr.rel (%p325) target = $region24
        $region23: #{downsample_forward.3} parent=11 // pred_region
          _
        $region24: #{downsample_forward.3} parent=11 // pred_fallthru
          _
        // Predicated region
        $region25: #{downsample_forward.3} parent=11 // pred_check
          %p328 = pneg %p131
        $region26: #{downsample_forward.3} parent=11 // pred_check_branch
          %330 = sbr.rel (%p328) target = $region28
        $region27: #{downsample_forward.3} parent=11 // pred_region
          _
        $region28: #{downsample_forward.3} parent=11 // pred_fallthru
          _
        // Predicated region
        $region29: #{downsample_forward.3} parent=11 // pred_check
          %p331 = pneg %p152
        $region30: #{downsample_forward.3} parent=11 // pred_check_branch
          %333 = sbr.rel (%p331) target = $region32
        $region31: #{downsample_forward.3} parent=11 // pred_region
          _
        $region32: #{downsample_forward.3} parent=11 // pred_fallthru
          _
        // Predicated region
        $region33: #{downsample_forward.3} parent=11 // pred_check
          %p334 = pneg %p173
        $region34: #{downsample_forward.3} parent=11 // pred_check_branch
          %336 = sbr.rel (%p334) target = $region36
        $region35: #{downsample_forward.3} parent=11 // pred_region
          _
        $region36: #{downsample_forward.3} parent=11 // pred_fallthru
          _
        // Predicated region
        $region37: #{downsample_forward.3} parent=11 // pred_check
          %p337 = pneg %p194
        $region38: #{downsample_forward.3} parent=11 // pred_check_branch
          %339 = sbr.rel (%p337) target = $region40
        $region39: #{downsample_forward.3} parent=11 // pred_region
          _
        $region40: #{downsample_forward.3} parent=11 // pred_fallthru
          _
        // Predicated region
        $region41: #{downsample_forward.3} parent=11 // pred_check
          %p340 = pneg %p215
        $region42: #{downsample_forward.3} parent=11 // pred_check_branch
          %342 = sbr.rel (%p340) target = $region44
        $region43: #{downsample_forward.3} parent=11 // pred_region
          _
        $region44: #{downsample_forward.3} parent=11 // pred_fallthru
          _
        // Predicated region
        $region45: #{downsample_forward.3} parent=11 // pred_check
          %p343 = pneg %p236
        $region46: #{downsample_forward.3} parent=11 // pred_check_branch
          %345 = sbr.rel (%p343) target = $region48
        $region47: #{downsample_forward.3} parent=11 // pred_region
          _
        $region48: #{downsample_forward.3} parent=11 // pred_fallthru
          _
        // Predicated region
        $region49: #{downsample_forward.3} parent=11 // pred_check
          %p346 = pneg %p257
        $region50: #{downsample_forward.3} parent=11 // pred_check_branch
          %348 = sbr.rel (%p346) target = $region52
        $region51: #{downsample_forward.3} parent=11 // pred_region
          _
        $region52: #{downsample_forward.3} parent=11 // pred_fallthru
          _
        // Predicated region
        $region53: #{downsample_forward.3} parent=11 // pred_check
          %p349 = pneg %p278
        $region54: #{downsample_forward.3} parent=11 // pred_check_branch
          %351 = sbr.rel (%p349) target = $region56
        $region55: #{downsample_forward.3} parent=11 // pred_region
          _
        $region56: #{downsample_forward.3} parent=11 // pred_fallthru
          _
      $region12: #{downsample_forward.3} parent=5 // pred_fallthru
        _
      %p352 = scmp.lt.s32.totalorder %s21, 2
      // Predicated region
      $region57: #{downsample_forward.3} parent=5 // pred_check
        %p353 = pneg %p352
      $region58: #{downsample_forward.3} parent=5 // pred_check_branch
        %355 = sbr.rel (%p353) target = $region60
      $region59: #{downsample_forward.3} parent=5 // pred_region
        // Predicated region
        $region61: #{downsample_forward.3} parent=59 // pred_check
          %p356 = pneg %p41
        $region62: #{downsample_forward.3} parent=59 // pred_check_branch
          %358 = sbr.rel (%p356) target = $region64
        $region63: #{downsample_forward.3} parent=59 // pred_region
          %p359 = scmp.lt.s32.totalorder %s21, 1
          %s360 = scalar_select %p359, %s21, 1
          %s361 = smul.addr %s360, 8
          %s362 = smul.addr %s361, 8
          %s363 = scalar_lea.vmem %s0, %s362
        $region64: #{downsample_forward.3} parent=59 // pred_fallthru
          _
      $region60: #{downsample_forward.3} parent=5 // pred_fallthru
        _
      %p364 = scmp.le.s32.totalorder 1, %s21
      %p365 = scmp.lt.s32.totalorder %s21, 3
      %p366 = pnand %p364, %p365
      %p367 = pneg %p366
      // Predicated region
      $region65: #{downsample_forward.3} parent=5 // pred_check
        _
      $region66: #{downsample_forward.3} parent=5 // pred_check_branch
        %369 = sbr.rel (%p366) target = $region68
      $region67: #{downsample_forward.3} parent=5 // pred_region
        %s370 = ssub.s32 %s21, 1
        %p371 = scmp.lt.s32.totalorder %s26, 1
        %s372 = scalar_select %p371, %s26, 1
        %s373 = smul.addr %s372, 8
        %s374 = smul.addr %s373, 8
        %s375 = scalar_lea.vmem %s0, %s374
        %p376 = pneg %p47
        %p377 = pneg %p44
        %p378 = pneg %p68
        %p379 = pneg %p65
        %p380 = pneg %p89
        %p381 = pneg %p86
        %p382 = pneg %p110
        %p383 = pneg %p107
        %p384 = pneg %p131
        %p385 = pneg %p128
        %p386 = pneg %p152
        %p387 = pneg %p149
        %p388 = pneg %p173
        %p389 = pneg %p170
        %p390 = pneg %p194
        %p391 = pneg %p191
        %p392 = pneg %p215
        %p393 = pneg %p212
        %p394 = pneg %p236
        %p395 = pneg %p233
        %p396 = pneg %p257
        %p397 = pneg %p254
        %p398 = pneg %p278
        %p399 = pneg %p275
        %p400 = pneg %p304
        %p401 = pneg %p301
        %s402 = sand.u32 %s291, 1
        %s403 = scalar_lea.sflag [#allocation4], %s402
        %s404 = sand.u32 %s291, 1
        %s405 = smul.addr %s404, 64
        %s406 = scalar_lea.vmem [#allocation3], %s405
        %p407 = scmp.lt.s32.totalorder %s26, 1
        %s408 = scalar_select %p407, %s26, 1
        %s409 = smul.addr %s408, 8
        %s410 = smul.addr %s409, 8
        %s411 = scalar_lea.vmem %s0, %s410
        %v413 = vld [vmem:[%s411] sm:$0xff]
        %v414 = vld [vmem:[%s411 + $0x8] sm:$0xff]
        %v415 = vld [vmem:[%s411 + $0x10] sm:$0xff]
        %v416 = vld [vmem:[%s411 + $0x18] sm:$0xff]
        %v417 = vld [vmem:[%s411 + $0x20] sm:$0xff]
        %v418 = vld [vmem:[%s411 + $0x28] sm:$0xff]
        %v419 = vld [vmem:[%s411 + $0x30] sm:$0xff]
        %v420 = vld [vmem:[%s411 + $0x38] sm:$0xff]
        %v421 = vld [vmem:[%s1] sm:$0x1]
        %v423 = vlaneseq
        %v424 = vshrl.u32 %v423, 7
        %v425 = vsub.s32 0, %v424
        %v426 = vrot.slane %v421, %v425
        %v428 = vmul.f32 %v413, %v426
        %v429 = vmul.f32 %v414, %v426
        %v430 = vmul.f32 %v415, %v426
        %v431 = vmul.f32 %v416, %v426
        %v432 = vmul.f32 %v417, %v426
        %v433 = vmul.f32 %v418, %v426
        %v434 = vmul.f32 %v419, %v426
        %v435 = vmul.f32 %v420, %v426
        %v436 = vld [vmem:[%s2] sm:$0x1]
        %v438 = vlaneseq
        %v439 = vshrl.u32 %v438, 7
        %v440 = vsub.s32 0, %v439
        %v441 = vrot.slane %v436, %v440
        %v443 = vadd.f32 %v428, %v441
        %v444 = vadd.f32 %v429, %v441
        %v445 = vadd.f32 %v430, %v441
        %v446 = vadd.f32 %v431, %v441
        %v447 = vadd.f32 %v432, %v441
        %v448 = vadd.f32 %v433, %v441
        %v449 = vadd.f32 %v434, %v441
        %v450 = vadd.f32 %v435, %v441
        %v451 = vmax.f32 %v443, 0.0
        %v452 = vmax.f32 %v444, 0.0
        %v453 = vmax.f32 %v445, 0.0
        %v454 = vmax.f32 %v446, 0.0
        %v455 = vmax.f32 %v447, 0.0
        %v456 = vmax.f32 %v448, 0.0
        %v457 = vmax.f32 %v449, 0.0
        %v458 = vmax.f32 %v450, 0.0
        %v459 = vpack.c.bf16 %v452, %v451
        %v460 = vpack.c.bf16 %v454, %v453
        %v461 = vpack.c.bf16 %v456, %v455
        %v462 = vpack.c.bf16 %v458, %v457
        %v463 = vld [vmem:[%s3] sm:$0xf]
        %v464 = vld [vmem:[%s3 + $0x4] sm:$0xf]
        %v465 = vld [vmem:[%s3 + $0x8] sm:$0xf]
        %v466 = vld [vmem:[%s3 + $0xc] sm:$0xf]
        %v467 = vld [vmem:[%s3 + $0x10] sm:$0xf]
        %v468 = vld [vmem:[%s3 + $0x14] sm:$0xf]
        %v469 = vld [vmem:[%s3 + $0x18] sm:$0xf]
        %v470 = vld [vmem:[%s3 + $0x1c] sm:$0xf]
        %v471 = vld [vmem:[%s3 + $0x20] sm:$0xf]
        %v472 = vld [vmem:[%s3 + $0x24] sm:$0xf]
        %v473 = vld [vmem:[%s3 + $0x28] sm:$0xf]
        %v474 = vld [vmem:[%s3 + $0x2c] sm:$0xf]
        %v475 = vld [vmem:[%s3 + $0x30] sm:$0xf]
        %v476 = vld [vmem:[%s3 + $0x34] sm:$0xf]
        %v477 = vld [vmem:[%s3 + $0x38] sm:$0xf]
        %v478 = vld [vmem:[%s3 + $0x3c] sm:$0xf]
        %v495 = vunpack.c.l.b16 %v463
        %v496 = vunpack.c.l.b16 %v464
        %v497 = vunpack.c.l.b16 %v465
        %v498 = vunpack.c.l.b16 %v466
        %v499 = vunpack.c.l.b16 %v467
        %v500 = vunpack.c.l.b16 %v468
        %v501 = vunpack.c.l.b16 %v469
        %v502 = vunpack.c.l.b16 %v470
        %v503 = vunpack.c.l.b16 %v471
        %v504 = vunpack.c.l.b16 %v472
        %v505 = vunpack.c.l.b16 %v473
        %v506 = vunpack.c.l.b16 %v474
        %v507 = vunpack.c.l.b16 %v475
        %v508 = vunpack.c.l.b16 %v476
        %v509 = vunpack.c.l.b16 %v477
        %v510 = vunpack.c.l.b16 %v478
        %v511 = vpack.c.b16 %v496, %v495
        %v512 = vpack.c.b16 %v498, %v497
        %v513 = vpack.c.b16 %v500, %v499
        %v514 = vpack.c.b16 %v502, %v501
        %v515 = vpack.c.b16 %v504, %v503
        %v516 = vpack.c.b16 %v506, %v505
        %v517 = vpack.c.b16 %v508, %v507
        %v518 = vpack.c.b16 %v510, %v509
        %527 = vmatprep.subr.bf16.mxu0 0
        %528 = vmatpush1.bf16.msra.mxu0 %v518
        %529 = vmatprep.subr.bf16.mxu0 0
        %530 = vmatpush1.bf16.msra.mxu0 %v517
        %531 = vmatprep.subr.bf16.mxu0 0
        %532 = vmatpush1.bf16.msra.mxu0 %v516
        %533 = vmatprep.subr.bf16.mxu0 0
        %534 = vmatpush1.bf16.msra.mxu0 %v515
        %535 = vmatprep.subr.bf16.mxu0 0
        %536 = vmatpush1.bf16.msra.mxu0 %v514
        %537 = vmatprep.subr.bf16.mxu0 0
        %538 = vmatpush1.bf16.msra.mxu0 %v513
        %539 = vmatprep.subr.bf16.mxu0 0
        %540 = vmatpush1.bf16.msra.mxu0 %v512
        %541 = vmatprep.subr.bf16.mxu0 0
        %542 = vmatpush1.bf16.msra.mxu0 %v511
        %543 = vmatprep.subr.bf16.mxu0 0
        %544 = vmatpush2.bf16.msra.mxu0 0
        %545 = vmatprep.subr.bf16.mxu0 0
        %546 = vmatpush2.bf16.msra.mxu0 0
        %547 = vmatprep.subr.bf16.mxu0 0
        %548 = vmatpush2.bf16.msra.mxu0 0
        %549 = vmatprep.subr.bf16.mxu0 0
        %550 = vmatpush2.bf16.msra.mxu0 0
        %551 = vmatprep.subr.bf16.mxu0 0
        %552 = vmatpush2.bf16.msra.mxu0 0
        %553 = vmatprep.subr.bf16.mxu0 0
        %554 = vmatpush2.bf16.msra.mxu0 0
        %555 = vmatprep.subr.bf16.mxu0 0
        %556 = vmatpush2.bf16.msra.mxu0 0
        %557 = vmatprep.subr.bf16.mxu0 0
        %558 = vmatpush2.bf16.msra.mxu0 0
        %559 = vmatprep.mubr.bf16.mxu0 0
        %560 = vmatmul.mubr.bf16.gmra.mxu0 %v459
        %v561 = vpop.f32.mrf.mxu0
        %v562 = vadd.f32 0.0, %v561
        %v563 = vpop.f32.mrf.mxu0
        %v564 = vpop.f32.mrf.mxu0
        %v565 = vadd.f32 0.0, %v564
        %v566 = vpop.f32.mrf.mxu0
        %567 = vmatprep.mubr.bf16.mxu0 0
        %568 = vmatmul.mubr.bf16.gmra.mxu0 %v460
        %v569 = vpop.f32.mrf.mxu0
        %v570 = vadd.f32 0.0, %v569
        %v571 = vpop.f32.mrf.mxu0
        %v572 = vpop.f32.mrf.mxu0
        %v573 = vadd.f32 0.0, %v572
        %v574 = vpop.f32.mrf.mxu0
        %575 = vmatprep.mubr.bf16.mxu0 0
        %576 = vmatmul.mubr.bf16.gmra.mxu0 %v461
        %v577 = vpop.f32.mrf.mxu0
        %v578 = vadd.f32 0.0, %v577
        %v579 = vpop.f32.mrf.mxu0
        %v580 = vpop.f32.mrf.mxu0
        %v581 = vadd.f32 0.0, %v580
        %v582 = vpop.f32.mrf.mxu0
        %583 = vmatprep.mubr.bf16.mxu0 0
        %584 = vmatmul.mubr.bf16.gmra.mxu0 %v462
        %v585 = vpop.f32.mrf.mxu0
        %v586 = vadd.f32 0.0, %v585
        %v587 = vpop.f32.mrf.mxu0
        %v588 = vpop.f32.mrf.mxu0
        %v589 = vadd.f32 0.0, %v588
        %v590 = vpop.f32.mrf.mxu0
        %591 = vdwg.mxu0
        %v592 = vld [vmem:[%s4] sm:$0x1]
        %v594 = vlaneseq
        %v595 = vshrl.u32 %v594, 7
        %v596 = vsub.s32 0, %v595
        %v597 = vrot.slane %v592, %v596
        %v599 = vmul.f32 %v562, %v597
        %v600 = vmul.f32 %v565, %v597
        %v601 = vmul.f32 %v570, %v597
        %v602 = vmul.f32 %v573, %v597
        %v603 = vmul.f32 %v578, %v597
        %v604 = vmul.f32 %v581, %v597
        %v605 = vmul.f32 %v586, %v597
        %v606 = vmul.f32 %v589, %v597
        %v607 = vld [vmem:[%s5] sm:$0x1]
        %v609 = vlaneseq
        %v610 = vshrl.u32 %v609, 7
        %v611 = vsub.s32 0, %v610
        %v612 = vrot.slane %v607, %v611
        %v614 = vadd.f32 %v599, %v612
        %v615 = vadd.f32 %v600, %v612
        %v616 = vadd.f32 %v601, %v612
        %v617 = vadd.f32 %v602, %v612
        %v618 = vadd.f32 %v603, %v612
        %v619 = vadd.f32 %v604, %v612
        %v620 = vadd.f32 %v605, %v612
        %v621 = vadd.f32 %v606, %v612
        %v622 = vmax.f32 %v614, 0.0
        %v623 = vmax.f32 %v615, 0.0
        %v624 = vmax.f32 %v616, 0.0
        %v625 = vmax.f32 %v617, 0.0
        %v626 = vmax.f32 %v618, 0.0
        %v627 = vmax.f32 %v619, 0.0
        %v628 = vmax.f32 %v620, 0.0
        %v629 = vmax.f32 %v621, 0.0
        %vm630 = vcmask 257024
        %631 = vst.msk [vmem:[#allocation2] sm:$0xf] %vm630, 0
        %632 = vst.msk [vmem:[#allocation2 + $0x4] sm:$0xf] %vm630, 0
        %633 = vst.msk [vmem:[#allocation2 + $0x8] sm:$0xf] %vm630, 0
        %634 = vst.msk [vmem:[#allocation2 + $0xc] sm:$0xf] %vm630, 0
        %635 = vst.msk [vmem:[#allocation2 + $0x10] sm:$0xf] %vm630, 0
        %636 = vst.msk [vmem:[#allocation2 + $0x14] sm:$0xf] %vm630, 0
        %637 = vst.msk [vmem:[#allocation2 + $0x18] sm:$0xf] %vm630, 0
        %638 = vst.msk [vmem:[#allocation2 + $0x1c] sm:$0xf] %vm630, 0
        %639 = vst.msk [vmem:[#allocation2 + $0x20] sm:$0xf] %vm630, 0
        %640 = vst.msk [vmem:[#allocation2 + $0x24] sm:$0xf] %vm630, 0
        %641 = vst.msk [vmem:[#allocation2 + $0x28] sm:$0xf] %vm630, 0
        %642 = vst.msk [vmem:[#allocation2 + $0x2c] sm:$0xf] %vm630, 0
        %v643 = vpack.c.bf16 %v623, %v622
        %v644 = vpack.c.bf16 %v625, %v624
        %v645 = vpack.c.bf16 %v627, %v626
        %v646 = vpack.c.bf16 %v629, %v628
        %v651 = vunpack.c.l.b16 %v643
        %v652 = vunpack.c.h.b16 %v643
        %v653 = vunpack.c.l.b16 %v644
        %v654 = vunpack.c.h.b16 %v644
        %v655 = vunpack.c.l.b16 %v645
        %v656 = vunpack.c.h.b16 %v645
        %v657 = vunpack.c.l.b16 %v646
        %v658 = vunpack.c.h.b16 %v646
        %v659 = vpack.c.b16 %v651, %v651
        %v660 = vpack.c.b16 %v652, %v652
        %v661 = vpack.c.b16 %v653, %v653
        %v662 = vpack.c.b16 %v654, %v654
        %v663 = vpack.c.b16 %v655, %v655
        %v664 = vpack.c.b16 %v656, %v656
        %v665 = vpack.c.b16 %v657, %v657
        %v666 = vpack.c.b16 %v658, %v658
        %675 = vst.msk [vmem:[#allocation2 + $0x8] sm:$0xf] %vm630, %v659
        %676 = vst.msk [vmem:[#allocation2 + $0xc] sm:$0xf] %vm630, %v660
        %677 = vst.msk [vmem:[#allocation2 + $0x10] sm:$0xf] %vm630, %v661
        %678 = vst.msk [vmem:[#allocation2 + $0x14] sm:$0xf] %vm630, %v662
        %679 = vst.msk [vmem:[#allocation2 + $0x18] sm:$0xf] %vm630, %v663
        %680 = vst.msk [vmem:[#allocation2 + $0x1c] sm:$0xf] %vm630, %v664
        %681 = vst.msk [vmem:[#allocation2 + $0x20] sm:$0xf] %vm630, %v665
        %682 = vst.msk [vmem:[#allocation2 + $0x24] sm:$0xf] %vm630, %v666
        %v683 = vld [vmem:[#allocation2] sm:$0x8]
        %v684 = vld [vmem:[#allocation2 + $0x4] sm:$0xf]
        %v685 = vld [vmem:[#allocation2 + $0x8] sm:$0xf]
        %v686 = vld [vmem:[#allocation2 + $0xc] sm:$0xf]
        %v687 = vld [vmem:[#allocation2 + $0x10] sm:$0xf]
        %v688 = vld [vmem:[#allocation2 + $0x14] sm:$0xf]
        %v689 = vld [vmem:[#allocation2 + $0x18] sm:$0xf]
        %v690 = vld [vmem:[#allocation2 + $0x1c] sm:$0xf]
        %v691 = vld [vmem:[#allocation2 + $0x20] sm:$0xf]
        %v692 = vld [vmem:[%s10] sm:$0xf]
        %v693 = vld [vmem:[%s10 + $0x4] sm:$0xf]
        %v694 = vld [vmem:[%s10 + $0x8] sm:$0xf]
        %v695 = vld [vmem:[%s10 + $0xc] sm:$0xf]
        %v696 = vld [vmem:[%s10 + $0x10] sm:$0xf]
        %v697 = vld [vmem:[%s10 + $0x14] sm:$0xf]
        %v698 = vld [vmem:[%s10 + $0x18] sm:$0xf]
        %v699 = vld [vmem:[%s10 + $0x1c] sm:$0xf]
        %701 = vset.pattern.permute.xlu0 0
        %702 = vperm.xlu0 %701, %v692
        %v703 = vpop.permute.xlu0 %702
        %v706 = vunpack.c.l.s4 839922192
        %v707 = vunpack.c.0.s8 %v706
        %v708 = vlaneseq
        %v709 = vshrl.u32 %v708, 7
        %v710 = vsub.s32 %v707, %v709
        %v711 = vrot.slane %v703, %v710
        %713 = vset.pattern.permute.xlu0 0
        %714 = vperm.xlu0 %713, %v693
        %v715 = vpop.permute.xlu0 %714
        %v718 = vunpack.c.l.s4 839922192
        %v719 = vunpack.c.0.s8 %v718
        %v720 = vlaneseq
        %v721 = vshrl.u32 %v720, 7
        %v722 = vsub.s32 %v719, %v721
        %v723 = vrot.slane %v715, %v722
        %725 = vset.pattern.permute.xlu0 0
        %726 = vperm.xlu0 %725, %v694
        %v727 = vpop.permute.xlu0 %726
        %v730 = vunpack.c.l.s4 839922192
        %v731 = vunpack.c.0.s8 %v730
        %v732 = vlaneseq
        %v733 = vshrl.u32 %v732, 7
        %v734 = vsub.s32 %v731, %v733
        %v735 = vrot.slane %v727, %v734
        %737 = vset.pattern.permute.xlu0 0
        %738 = vperm.xlu0 %737, %v695
        %v739 = vpop.permute.xlu0 %738
        %v742 = vunpack.c.l.s4 839922192
        %v743 = vunpack.c.0.s8 %v742
        %v744 = vlaneseq
        %v745 = vshrl.u32 %v744, 7
        %v746 = vsub.s32 %v743, %v745
        %v747 = vrot.slane %v739, %v746
        %749 = vset.pattern.permute.xlu0 0
        %750 = vperm.xlu0 %749, %v696
        %v751 = vpop.permute.xlu0 %750
        %v754 = vunpack.c.l.s4 839922192
        %v755 = vunpack.c.0.s8 %v754
        %v756 = vlaneseq
        %v757 = vshrl.u32 %v756, 7
        %v758 = vsub.s32 %v755, %v757
        %v759 = vrot.slane %v751, %v758
        %761 = vset.pattern.permute.xlu0 0
        %762 = vperm.xlu0 %761, %v697
        %v763 = vpop.permute.xlu0 %762
        %v766 = vunpack.c.l.s4 839922192
        %v767 = vunpack.c.0.s8 %v766
        %v768 = vlaneseq
        %v769 = vshrl.u32 %v768, 7
        %v770 = vsub.s32 %v767, %v769
        %v771 = vrot.slane %v763, %v770
        %773 = vset.pattern.permute.xlu0 0
        %774 = vperm.xlu0 %773, %v698
        %v775 = vpop.permute.xlu0 %774
        %v778 = vunpack.c.l.s4 839922192
        %v779 = vunpack.c.0.s8 %v778
        %v780 = vlaneseq
        %v781 = vshrl.u32 %v780, 7
        %v782 = vsub.s32 %v779, %v781
        %v783 = vrot.slane %v775, %v782
        %785 = vset.pattern.permute.xlu0 0
        %786 = vperm.xlu0 %785, %v699
        %v787 = vpop.permute.xlu0 %786
        %v790 = vunpack.c.l.s4 839922192
        %v791 = vunpack.c.0.s8 %v790
        %v792 = vlaneseq
        %v793 = vshrl.u32 %v792, 7
        %v794 = vsub.s32 %v791, %v793
        %v795 = vrot.slane %v787, %v794
        %vm796 = vsmask.f32 3328
        %vm797 = vsmask.f32 7440
        %vm798 = vmor %vm796, %vm797
        %v800 = vshll.u32 %v711, 16
        %v802 = vrot.slane %v800, 5
        %v803 = vshrl.u32 %v711, 16
        %v805 = vrot.slane %v803, 4
        %v806 = vor.u32 %v805, %v802
        %v807 = vrot.slane %v806, 4
        %v809 = vshll.u32 %v723, 16
        %v811 = vrot.slane %v809, 5
        %v812 = vsel %vm798, %v807, %v811
        %v813 = vshrl.u32 %v723, 16
        %v815 = vrot.slane %v813, 4
        %v816 = vor.u32 %v815, %v811
        %v817 = vrot.slane %v816, 4
        %v819 = vshll.u32 %v735, 16
        %v821 = vrot.slane %v819, 5
        %v822 = vsel %vm798, %v817, %v821
        %v823 = vshrl.u32 %v735, 16
        %v825 = vrot.slane %v823, 4
        %v826 = vor.u32 %v825, %v821
        %v827 = vrot.slane %v826, 4
        %v829 = vshll.u32 %v747, 16
        %v831 = vrot.slane %v829, 5
        %v832 = vsel %vm798, %v827, %v831
        %v833 = vshrl.u32 %v747, 16
        %v835 = vrot.slane %v833, 4
        %v836 = vor.u32 %v835, %v831
        %v837 = vrot.slane %v836, 4
        %v839 = vshll.u32 %v759, 16
        %v841 = vrot.slane %v839, 5
        %v842 = vsel %vm798, %v837, %v841
        %v843 = vshrl.u32 %v759, 16
        %v845 = vrot.slane %v843, 4
        %v846 = vor.u32 %v845, %v841
        %v847 = vrot.slane %v846, 4
        %v849 = vshll.u32 %v771, 16
        %v851 = vrot.slane %v849, 5
        %v852 = vsel %vm798, %v847, %v851
        %v853 = vshrl.u32 %v771, 16
        %v855 = vrot.slane %v853, 4
        %v856 = vor.u32 %v855, %v851
        %v857 = vrot.slane %v856, 4
        %v859 = vshll.u32 %v783, 16
        %v861 = vrot.slane %v859, 5
        %v862 = vsel %vm798, %v857, %v861
        %v863 = vshrl.u32 %v783, 16
        %v865 = vrot.slane %v863, 4
        %v866 = vor.u32 %v865, %v861
        %v867 = vrot.slane %v866, 4
        %v869 = vshll.u32 %v795, 16
        %v871 = vrot.slane %v869, 5
        %v872 = vsel %vm798, %v867, %v871
        %v873 = vshrl.u32 %v795, 16
        %v875 = vrot.slane %v873, 4
        %v876 = vor.u32 %v875, %v871
        %v877 = vrot.slane %v876, 4
        %v887 = vmul.bf16 %v683, %v802
        %v888 = vmul.bf16 %v684, %v812
        %v889 = vmul.bf16 %v685, %v822
        %v890 = vmul.bf16 %v686, %v832
        %v891 = vmul.bf16 %v687, %v842
        %v892 = vmul.bf16 %v688, %v852
        %v893 = vmul.bf16 %v689, %v862
        %v894 = vmul.bf16 %v690, %v872
        %v895 = vmul.bf16 %v691, %v877
        %v896 = vld [vmem:[%s6] sm:$0xf]
        %v897 = vld [vmem:[%s6 + $0x4] sm:$0xf]
        %v898 = vld [vmem:[%s6 + $0x8] sm:$0xf]
        %v899 = vld [vmem:[%s6 + $0xc] sm:$0xf]
        %s900 = scalar_lea.vmem %s6, 16
        %v901 = vld [vmem:[%s900] sm:$0xf]
        %v902 = vld [vmem:[%s900 + $0x4] sm:$0xf]
        %v903 = vld [vmem:[%s900 + $0x8] sm:$0xf]
        %v904 = vld [vmem:[%s900 + $0xc] sm:$0xf]
        %v913 = vunpack.c.l.b16 %v684
        %v914 = vunpack.c.l.b16 %v685
        %v915 = vunpack.c.l.b16 %v686
        %v916 = vunpack.c.l.b16 %v687
        %v917 = vunpack.c.l.b16 %v688
        %v918 = vunpack.c.l.b16 %v689
        %v919 = vunpack.c.l.b16 %v690
        %v920 = vunpack.c.l.b16 %v691
        %v921 = vpack.c.b16 %v914, %v913
        %v922 = vpack.c.b16 %v916, %v915
        %v923 = vpack.c.b16 %v918, %v917
        %v924 = vpack.c.b16 %v920, %v919
        %v929 = vunpack.c.l.b16 %v901
        %v930 = vunpack.c.l.b16 %v902
        %v931 = vunpack.c.l.b16 %v903
        %v932 = vunpack.c.l.b16 %v904
        %v933 = vpack.c.b16 %v930, %v929
        %v934 = vpack.c.b16 %v932, %v931
        %vm937 = vcmask 261120
        %v939 = vsel %vm937, %v921, 0
        %v942 = vsel %vm937, %v922, 0
        %v945 = vsel %vm937, %v923, 0
        %v948 = vsel %vm937, %v924, 0
        %950 = vmatprep.subr.bf16.mxu0 0
        %951 = vmatpush1.bf16.msra.mxu0 0
        %952 = vmatprep.subr.bf16.mxu0 0
        %953 = vmatpush1.bf16.msra.mxu0 0
        %954 = vmatprep.subr.bf16.mxu0 0
        %955 = vmatpush1.bf16.msra.mxu0 0
        %956 = vmatprep.subr.bf16.mxu0 0
        %957 = vmatpush1.bf16.msra.mxu0 0
        %958 = vmatprep.subr.bf16.mxu0 0
        %959 = vmatpush1.bf16.msra.mxu0 0
        %960 = vmatprep.subr.bf16.mxu0 0
        %961 = vmatpush1.bf16.msra.mxu0 0
        %962 = vmatprep.subr.bf16.mxu0 0
        %963 = vmatpush1.bf16.msra.mxu0 %v934
        %964 = vmatprep.subr.bf16.mxu0 0
        %965 = vmatpush1.bf16.msra.mxu0 %v933
        %966 = vmatprep.subr.bf16.mxu0 0
        %967 = vmatpush2.bf16.msra.mxu0 0
        %968 = vmatprep.subr.bf16.mxu0 0
        %969 = vmatpush2.bf16.msra.mxu0 0
        %970 = vmatprep.subr.bf16.mxu0 0
        %971 = vmatpush2.bf16.msra.mxu0 0
        %972 = vmatprep.subr.bf16.mxu0 0
        %973 = vmatpush2.bf16.msra.mxu0 0
        %974 = vmatprep.subr.bf16.mxu0 0
        %975 = vmatpush2.bf16.msra.mxu0 0
        %976 = vmatprep.subr.bf16.mxu0 0
        %977 = vmatpush2.bf16.msra.mxu0 0
        %978 = vmatprep.subr.bf16.mxu0 0
        %979 = vmatpush2.bf16.msra.mxu0 0
        %980 = vmatprep.subr.bf16.mxu0 0
        %981 = vmatpush2.bf16.msra.mxu0 0
        %982 = vmatprep.mubr.bf16.mxu0 0
        %983 = vmatmul.mubr.bf16.gmra.mxu0 %v939
        %v984 = vpop.f32.mrf.mxu0
        %v985 = vadd.f32 0.0, %v984
        %v986 = vpop.f32.mrf.mxu0
        %v987 = vpop.f32.mrf.mxu0
        %v988 = vadd.f32 0.0, %v987
        %v989 = vpop.f32.mrf.mxu0
        %990 = vmatprep.mubr.bf16.mxu0 0
        %991 = vmatmul.mubr.bf16.gmra.mxu0 %v942
        %v992 = vpop.f32.mrf.mxu0
        %v993 = vadd.f32 0.0, %v992
        %v994 = vpop.f32.mrf.mxu0
        %v995 = vpop.f32.mrf.mxu0
        %v996 = vadd.f32 0.0, %v995
        %v997 = vpop.f32.mrf.mxu0
        %998 = vmatprep.mubr.bf16.mxu0 0
        %999 = vmatmul.mubr.bf16.gmra.mxu0 %v945
        %v1000 = vpop.f32.mrf.mxu0
        %v1001 = vadd.f32 0.0, %v1000
        %v1002 = vpop.f32.mrf.mxu0
        %v1003 = vpop.f32.mrf.mxu0
        %v1004 = vadd.f32 0.0, %v1003
        %v1005 = vpop.f32.mrf.mxu0
        %1006 = vmatprep.mubr.bf16.mxu0 0
        %1007 = vmatmul.mubr.bf16.gmra.mxu0 %v948
        %v1008 = vpop.f32.mrf.mxu0
        %v1009 = vadd.f32 0.0, %v1008
        %v1010 = vpop.f32.mrf.mxu0
        %v1011 = vpop.f32.mrf.mxu0
        %v1012 = vadd.f32 0.0, %v1011
        %v1013 = vpop.f32.mrf.mxu0
        %1014 = vdwg.mxu0
        %v1024 = vunpack.c.l.b16 %v887
        %v1025 = vunpack.c.l.b16 %v888
        %v1026 = vunpack.c.l.b16 %v889
        %v1027 = vunpack.c.l.b16 %v890
        %v1028 = vunpack.c.l.b16 %v891
        %v1029 = vunpack.c.l.b16 %v892
        %v1030 = vunpack.c.l.b16 %v893
        %v1031 = vunpack.c.l.b16 %v894
        %v1032 = vunpack.c.l.b16 %v895
        %v1033 = vpack.c.b16 %v1025, %v1024
        %v1034 = vpack.c.b16 %v1027, %v1026
        %v1035 = vpack.c.b16 %v1029, %v1028
        %v1036 = vpack.c.b16 %v1031, %v1030
        %v1037 = vpack.c.b16 %v1032, %v1032
        %vm1038 = vsmask.f32 4352
        %v1040 = vshrl.u32 %v1033, 16
        %v1042 = vrot.slane %v1040, 3
        %v1043 = vshll.u32 %v1033, 16
        %v1045 = vrot.slane %v1043, 4
        %v1046 = vor.u32 %v1042, %v1045
        %v1048 = vshrl.u32 %v1034, 16
        %v1050 = vrot.slane %v1048, 3
        %v1051 = vshll.u32 %v1034, 16
        %v1053 = vrot.slane %v1051, 4
        %v1054 = vor.u32 %v1050, %v1053
        %v1055 = vsel %vm1038, %v1046, %v1054
        %v1057 = vshrl.u32 %v1035, 16
        %v1059 = vrot.slane %v1057, 3
        %v1060 = vshll.u32 %v1035, 16
        %v1062 = vrot.slane %v1060, 4
        %v1063 = vor.u32 %v1059, %v1062
        %v1064 = vsel %vm1038, %v1054, %v1063
        %v1066 = vshrl.u32 %v1036, 16
        %v1068 = vrot.slane %v1066, 3
        %v1069 = vshll.u32 %v1036, 16
        %v1071 = vrot.slane %v1069, 4
        %v1072 = vor.u32 %v1068, %v1071
        %v1073 = vsel %vm1038, %v1063, %v1072
        %v1075 = vshrl.u32 %v1037, 16
        %v1077 = vrot.slane %v1075, 3
        %v1078 = vshll.u32 %v1037, 16
        %v1080 = vrot.slane %v1078, 4
        %v1081 = vor.u32 %v1077, %v1080
        %v1082 = vsel %vm1038, %v1072, %v1081
        %v1087 = vunpack.c.l.b16 %v896
        %v1088 = vunpack.c.l.b16 %v897
        %v1089 = vunpack.c.l.b16 %v898
        %v1090 = vunpack.c.l.b16 %v899
        %v1091 = vpack.c.b16 %v1088, %v1087
        %v1092 = vpack.c.b16 %v1090, %v1089
        %v1096 = vsel %vm937, %v1055, 0
        %v1099 = vsel %vm937, %v1064, 0
        %v1102 = vsel %vm937, %v1073, 0
        %v1105 = vsel %vm937, %v1082, 0
        %1107 = vmatprep.subr.bf16.mxu0 0
        %1108 = vmatpush1.bf16.msra.mxu0 0
        %1109 = vmatprep.subr.bf16.mxu0 0
        %1110 = vmatpush1.bf16.msra.mxu0 0
        %1111 = vmatprep.subr.bf16.mxu0 0
        %1112 = vmatpush1.bf16.msra.mxu0 0
        %1113 = vmatprep.subr.bf16.mxu0 0
        %1114 = vmatpush1.bf16.msra.mxu0 0
        %1115 = vmatprep.subr.bf16.mxu0 0
        %1116 = vmatpush1.bf16.msra.mxu0 0
        %1117 = vmatprep.subr.bf16.mxu0 0
        %1118 = vmatpush1.bf16.msra.mxu0 0
        %1119 = vmatprep.subr.bf16.mxu0 0
        %1120 = vmatpush1.bf16.msra.mxu0 %v1092
        %1121 = vmatprep.subr.bf16.mxu0 0
        %1122 = vmatpush1.bf16.msra.mxu0 %v1091
        %1123 = vmatprep.subr.bf16.mxu0 0
        %1124 = vmatpush2.bf16.msra.mxu0 0
        %1125 = vmatprep.subr.bf16.mxu0 0
        %1126 = vmatpush2.bf16.msra.mxu0 0
        %1127 = vmatprep.subr.bf16.mxu0 0
        %1128 = vmatpush2.bf16.msra.mxu0 0
        %1129 = vmatprep.subr.bf16.mxu0 0
        %1130 = vmatpush2.bf16.msra.mxu0 0
        %1131 = vmatprep.subr.bf16.mxu0 0
        %1132 = vmatpush2.bf16.msra.mxu0 0
        %1133 = vmatprep.subr.bf16.mxu0 0
        %1134 = vmatpush2.bf16.msra.mxu0 0
        %1135 = vmatprep.subr.bf16.mxu0 0
        %1136 = vmatpush2.bf16.msra.mxu0 0
        %1137 = vmatprep.subr.bf16.mxu0 0
        %1138 = vmatpush2.bf16.msra.mxu0 0
        %1139 = vmatprep.mubr.bf16.mxu0 0
        %1140 = vmatmul.mubr.bf16.gmra.mxu0 %v1096
        %v1141 = vpop.f32.mrf.mxu0
        %v1142 = vadd.f32 %v985, %v1141
        %v1143 = vpop.f32.mrf.mxu0
        %v1144 = vpop.f32.mrf.mxu0
        %v1145 = vadd.f32 %v988, %v1144
        %v1146 = vpop.f32.mrf.mxu0
        %1147 = vmatprep.mubr.bf16.mxu0 0
        %1148 = vmatmul.mubr.bf16.gmra.mxu0 %v1099
        %v1149 = vpop.f32.mrf.mxu0
        %v1150 = vadd.f32 %v993, %v1149
        %v1151 = vpop.f32.mrf.mxu0
        %v1152 = vpop.f32.mrf.mxu0
        %v1153 = vadd.f32 %v996, %v1152
        %v1154 = vpop.f32.mrf.mxu0
        %1155 = vmatprep.mubr.bf16.mxu0 0
        %1156 = vmatmul.mubr.bf16.gmra.mxu0 %v1102
        %v1157 = vpop.f32.mrf.mxu0
        %v1158 = vadd.f32 %v1001, %v1157
        %v1159 = vpop.f32.mrf.mxu0
        %v1160 = vpop.f32.mrf.mxu0
        %v1161 = vadd.f32 %v1004, %v1160
        %v1162 = vpop.f32.mrf.mxu0
        %1163 = vmatprep.mubr.bf16.mxu0 0
        %1164 = vmatmul.mubr.bf16.gmra.mxu0 %v1105
        %v1165 = vpop.f32.mrf.mxu0
        %v1166 = vadd.f32 %v1009, %v1165
        %v1167 = vpop.f32.mrf.mxu0
        %v1168 = vpop.f32.mrf.mxu0
        %v1169 = vadd.f32 %v1012, %v1168
        %v1170 = vpop.f32.mrf.mxu0
        %1171 = vdwg.mxu0
        %v1172 = vld [vmem:[#allocation2 + $0x4] sm:$0xf]
        %v1173 = vld [vmem:[#allocation2 + $0x8] sm:$0xf]
        %v1174 = vld [vmem:[#allocation2 + $0xc] sm:$0xf]
        %v1175 = vld [vmem:[#allocation2 + $0x10] sm:$0xf]
        %v1176 = vld [vmem:[#allocation2 + $0x14] sm:$0xf]
        %v1177 = vld [vmem:[#allocation2 + $0x18] sm:$0xf]
        %v1178 = vld [vmem:[#allocation2 + $0x1c] sm:$0xf]
        %v1179 = vld [vmem:[#allocation2 + $0x20] sm:$0xf]
        %v1180 = vld [vmem:[#allocation2 + $0x24] sm:$0x1]
        %v1181 = vld [vmem:[%s11] sm:$0xf]
        %v1182 = vld [vmem:[%s11 + $0x4] sm:$0xf]
        %v1183 = vld [vmem:[%s11 + $0x8] sm:$0xf]
        %v1184 = vld [vmem:[%s11 + $0xc] sm:$0xf]
        %v1185 = vld [vmem:[%s11 + $0x10] sm:$0xf]
        %v1186 = vld [vmem:[%s11 + $0x14] sm:$0xf]
        %v1187 = vld [vmem:[%s11 + $0x18] sm:$0xf]
        %v1188 = vld [vmem:[%s11 + $0x1c] sm:$0xf]
        %1190 = vset.pattern.permute.xlu0 0
        %1191 = vperm.xlu0 %1190, %v1181
        %v1192 = vpop.permute.xlu0 %1191
        %v1195 = vunpack.c.l.s4 839922192
        %v1196 = vunpack.c.0.s8 %v1195
        %v1197 = vlaneseq
        %v1198 = vshrl.u32 %v1197, 7
        %v1199 = vsub.s32 %v1196, %v1198
        %v1200 = vrot.slane %v1192, %v1199
        %1202 = vset.pattern.permute.xlu0 0
        %1203 = vperm.xlu0 %1202, %v1182
        %v1204 = vpop.permute.xlu0 %1203
        %v1207 = vunpack.c.l.s4 839922192
        %v1208 = vunpack.c.0.s8 %v1207
        %v1209 = vlaneseq
        %v1210 = vshrl.u32 %v1209, 7
        %v1211 = vsub.s32 %v1208, %v1210
        %v1212 = vrot.slane %v1204, %v1211
        %1214 = vset.pattern.permute.xlu0 0
        %1215 = vperm.xlu0 %1214, %v1183
        %v1216 = vpop.permute.xlu0 %1215
        %v1219 = vunpack.c.l.s4 839922192
        %v1220 = vunpack.c.0.s8 %v1219
        %v1221 = vlaneseq
        %v1222 = vshrl.u32 %v1221, 7
        %v1223 = vsub.s32 %v1220, %v1222
        %v1224 = vrot.slane %v1216, %v1223
        %1226 = vset.pattern.permute.xlu0 0
        %1227 = vperm.xlu0 %1226, %v1184
        %v1228 = vpop.permute.xlu0 %1227
        %v1231 = vunpack.c.l.s4 839922192
        %v1232 = vunpack.c.0.s8 %v1231
        %v1233 = vlaneseq
        %v1234 = vshrl.u32 %v1233, 7
        %v1235 = vsub.s32 %v1232, %v1234
        %v1236 = vrot.slane %v1228, %v1235
        %1238 = vset.pattern.permute.xlu0 0
        %1239 = vperm.xlu0 %1238, %v1185
        %v1240 = vpop.permute.xlu0 %1239
        %v1243 = vunpack.c.l.s4 839922192
        %v1244 = vunpack.c.0.s8 %v1243
        %v1245 = vlaneseq
        %v1246 = vshrl.u32 %v1245, 7
        %v1247 = vsub.s32 %v1244, %v1246
        %v1248 = vrot.slane %v1240, %v1247
        %1250 = vset.pattern.permute.xlu0 0
        %1251 = vperm.xlu0 %1250, %v1186
        %v1252 = vpop.permute.xlu0 %1251
        %v1255 = vunpack.c.l.s4 839922192
        %v1256 = vunpack.c.0.s8 %v1255
        %v1257 = vlaneseq
        %v1258 = vshrl.u32 %v1257, 7
        %v1259 = vsub.s32 %v1256, %v1258
        %v1260 = vrot.slane %v1252, %v1259
        %1262 = vset.pattern.permute.xlu0 0
        %1263 = vperm.xlu0 %1262, %v1187
        %v1264 = vpop.permute.xlu0 %1263
        %v1267 = vunpack.c.l.s4 839922192
        %v1268 = vunpack.c.0.s8 %v1267
        %v1269 = vlaneseq
        %v1270 = vshrl.u32 %v1269, 7
        %v1271 = vsub.s32 %v1268, %v1270
        %v1272 = vrot.slane %v1264, %v1271
        %1274 = vset.pattern.permute.xlu0 0
        %1275 = vperm.xlu0 %1274, %v1188
        %v1276 = vpop.permute.xlu0 %1275
        %v1279 = vunpack.c.l.s4 839922192
        %v1280 = vunpack.c.0.s8 %v1279
        %v1281 = vlaneseq
        %v1282 = vshrl.u32 %v1281, 7
        %v1283 = vsub.s32 %v1280, %v1282
        %v1284 = vrot.slane %v1276, %v1283
        %vm1285 = vsmask.f32 256
        %vm1286 = vsmask.f32 4368
        %vm1287 = vmor %vm1285, %vm1286
        %v1289 = vshrl.u32 %v1200, 16
        %v1291 = vrot.slane %v1289, 7
        %v1292 = vshll.u32 %v1200, 16
        %v1294 = vor.u32 %v1291, %v1292
        %v1295 = vrot.slane %v1291, 4
        %v1297 = vshrl.u32 %v1212, 16
        %v1299 = vrot.slane %v1297, 7
        %v1300 = vshll.u32 %v1212, 16
        %v1302 = vor.u32 %v1299, %v1300
        %v1303 = vsel %vm1287, %v1295, %v1302
        %v1304 = vrot.slane %v1299, 4
        %v1306 = vshrl.u32 %v1224, 16
        %v1308 = vrot.slane %v1306, 7
        %v1309 = vshll.u32 %v1224, 16
        %v1311 = vor.u32 %v1308, %v1309
        %v1312 = vsel %vm1287, %v1304, %v1311
        %v1313 = vrot.slane %v1308, 4
        %v1315 = vshrl.u32 %v1236, 16
        %v1317 = vrot.slane %v1315, 7
        %v1318 = vshll.u32 %v1236, 16
        %v1320 = vor.u32 %v1317, %v1318
        %v1321 = vsel %vm1287, %v1313, %v1320
        %v1322 = vrot.slane %v1317, 4
        %v1324 = vshrl.u32 %v1248, 16
        %v1326 = vrot.slane %v1324, 7
        %v1327 = vshll.u32 %v1248, 16
        %v1329 = vor.u32 %v1326, %v1327
        %v1330 = vsel %vm1287, %v1322, %v1329
        %v1331 = vrot.slane %v1326, 4
        %v1333 = vshrl.u32 %v1260, 16
        %v1335 = vrot.slane %v1333, 7
        %v1336 = vshll.u32 %v1260, 16
        %v1338 = vor.u32 %v1335, %v1336
        %v1339 = vsel %vm1287, %v1331, %v1338
        %v1340 = vrot.slane %v1335, 4
        %v1342 = vshrl.u32 %v1272, 16
        %v1344 = vrot.slane %v1342, 7
        %v1345 = vshll.u32 %v1272, 16
        %v1347 = vor.u32 %v1344, %v1345
        %v1348 = vsel %vm1287, %v1340, %v1347
        %v1349 = vrot.slane %v1344, 4
        %v1351 = vshrl.u32 %v1284, 16
        %v1353 = vrot.slane %v1351, 7
        %v1354 = vshll.u32 %v1284, 16
        %v1356 = vor.u32 %v1353, %v1354
        %v1357 = vsel %vm1287, %v1349, %v1356
        %v1358 = vrot.slane %v1353, 4
        %v1368 = vmul.bf16 %v1172, %v1294
        %v1369 = vmul.bf16 %v1173, %v1303
        %v1370 = vmul.bf16 %v1174, %v1312
        %v1371 = vmul.bf16 %v1175, %v1321
        %v1372 = vmul.bf16 %v1176, %v1330
        %v1373 = vmul.bf16 %v1177, %v1339
        %v1374 = vmul.bf16 %v1178, %v1348
        %v1375 = vmul.bf16 %v1179, %v1357
        %v1376 = vmul.bf16 %v1180, %v1358
        %s1377 = scalar_lea.vmem %s6, 32
        %v1378 = vld [vmem:[%s1377] sm:$0xf]
        %v1379 = vld [vmem:[%s1377 + $0x4] sm:$0xf]
        %v1380 = vld [vmem:[%s1377 + $0x8] sm:$0xf]
        %v1381 = vld [vmem:[%s1377 + $0xc] sm:$0xf]
        %v1391 = vunpack.c.l.b16 %v1368
        %v1392 = vunpack.c.l.b16 %v1369
        %v1393 = vunpack.c.l.b16 %v1370
        %v1394 = vunpack.c.l.b16 %v1371
        %v1395 = vunpack.c.l.b16 %v1372
        %v1396 = vunpack.c.l.b16 %v1373
        %v1397 = vunpack.c.l.b16 %v1374
        %v1398 = vunpack.c.l.b16 %v1375
        %v1399 = vunpack.c.l.b16 %v1376
        %v1400 = vpack.c.b16 %v1392, %v1391
        %v1401 = vpack.c.b16 %v1394, %v1393
        %v1402 = vpack.c.b16 %v1396, %v1395
        %v1403 = vpack.c.b16 %v1398, %v1397
        %v1404 = vpack.c.b16 %v1399, %v1399
        %vm1405 = vsmask.f32 7424
        %v1407 = vshrl.u32 %v1400, 16
        %v1409 = vshll.u32 %v1400, 16
        %v1411 = vrot.slane %v1409, 1
        %v1412 = vor.u32 %v1407, %v1411
        %v1414 = vshll.u32 %v1401, 16
        %v1416 = vrot.slane %v1414, 1
        %v1417 = vsel %vm1405, %v1412, %v1416
        %v1418 = vshrl.u32 %v1401, 16
        %v1420 = vor.u32 %v1418, %v1416
        %v1422 = vshll.u32 %v1402, 16
        %v1424 = vrot.slane %v1422, 1
        %v1425 = vsel %vm1405, %v1420, %v1424
        %v1426 = vshrl.u32 %v1402, 16
        %v1428 = vor.u32 %v1426, %v1424
        %v1430 = vshll.u32 %v1403, 16
        %v1432 = vrot.slane %v1430, 1
        %v1433 = vsel %vm1405, %v1428, %v1432
        %v1434 = vshrl.u32 %v1403, 16
        %v1436 = vor.u32 %v1434, %v1432
        %v1438 = vshll.u32 %v1404, 16
        %v1440 = vrot.slane %v1438, 1
        %v1441 = vsel %vm1405, %v1436, %v1440
        %v1446 = vunpack.c.l.b16 %v1378
        %v1447 = vunpack.c.l.b16 %v1379
        %v1448 = vunpack.c.l.b16 %v1380
        %v1449 = vunpack.c.l.b16 %v1381
        %v1450 = vpack.c.b16 %v1447, %v1446
        %v1451 = vpack.c.b16 %v1449, %v1448
        %v1455 = vsel %vm937, %v1417, 0
        %v1458 = vsel %vm937, %v1425, 0
        %v1461 = vsel %vm937, %v1433, 0
        %v1464 = vsel %vm937, %v1441, 0
        %1466 = vmatprep.subr.bf16.mxu0 0
        %1467 = vmatpush1.bf16.msra.mxu0 0
        %1468 = vmatprep.subr.bf16.mxu0 0
        %1469 = vmatpush1.bf16.msra.mxu0 0
        %1470 = vmatprep.subr.bf16.mxu0 0
        %1471 = vmatpush1.bf16.msra.mxu0 0
        %1472 = vmatprep.subr.bf16.mxu0 0
        %1473 = vmatpush1.bf16.msra.mxu0 0
        %1474 = vmatprep.subr.bf16.mxu0 0
        %1475 = vmatpush1.bf16.msra.mxu0 0
        %1476 = vmatprep.subr.bf16.mxu0 0
        %1477 = vmatpush1.bf16.msra.mxu0 0
        %1478 = vmatprep.subr.bf16.mxu0 0
        %1479 = vmatpush1.bf16.msra.mxu0 %v1451
        %1480 = vmatprep.subr.bf16.mxu0 0
        %1481 = vmatpush1.bf16.msra.mxu0 %v1450
        %1482 = vmatprep.subr.bf16.mxu0 0
        %1483 = vmatpush2.bf16.msra.mxu0 0
        %1484 = vmatprep.subr.bf16.mxu0 0
        %1485 = vmatpush2.bf16.msra.mxu0 0
        %1486 = vmatprep.subr.bf16.mxu0 0
        %1487 = vmatpush2.bf16.msra.mxu0 0
        %1488 = vmatprep.subr.bf16.mxu0 0
        %1489 = vmatpush2.bf16.msra.mxu0 0
        %1490 = vmatprep.subr.bf16.mxu0 0
        %1491 = vmatpush2.bf16.msra.mxu0 0
        %1492 = vmatprep.subr.bf16.mxu0 0
        %1493 = vmatpush2.bf16.msra.mxu0 0
        %1494 = vmatprep.subr.bf16.mxu0 0
        %1495 = vmatpush2.bf16.msra.mxu0 0
        %1496 = vmatprep.subr.bf16.mxu0 0
        %1497 = vmatpush2.bf16.msra.mxu0 0
        %1498 = vmatprep.mubr.bf16.mxu0 0
        %1499 = vmatmul.mubr.bf16.gmra.mxu0 %v1455
        %v1500 = vpop.f32.mrf.mxu0
        %v1501 = vadd.f32 0.0, %v1500
        %v1502 = vpop.f32.mrf.mxu0
        %v1503 = vpop.f32.mrf.mxu0
        %v1504 = vadd.f32 0.0, %v1503
        %v1505 = vpop.f32.mrf.mxu0
        %1506 = vmatprep.mubr.bf16.mxu0 0
        %1507 = vmatmul.mubr.bf16.gmra.mxu0 %v1458
        %v1508 = vpop.f32.mrf.mxu0
        %v1509 = vadd.f32 0.0, %v1508
        %v1510 = vpop.f32.mrf.mxu0
        %v1511 = vpop.f32.mrf.mxu0
        %v1512 = vadd.f32 0.0, %v1511
        %v1513 = vpop.f32.mrf.mxu0
        %1514 = vmatprep.mubr.bf16.mxu0 0
        %1515 = vmatmul.mubr.bf16.gmra.mxu0 %v1461
        %v1516 = vpop.f32.mrf.mxu0
        %v1517 = vadd.f32 0.0, %v1516
        %v1518 = vpop.f32.mrf.mxu0
        %v1519 = vpop.f32.mrf.mxu0
        %v1520 = vadd.f32 0.0, %v1519
        %v1521 = vpop.f32.mrf.mxu0
        %1522 = vmatprep.mubr.bf16.mxu0 0
        %1523 = vmatmul.mubr.bf16.gmra.mxu0 %v1464
        %v1524 = vpop.f32.mrf.mxu0
        %v1525 = vadd.f32 0.0, %v1524
        %v1526 = vpop.f32.mrf.mxu0
        %v1527 = vpop.f32.mrf.mxu0
        %v1528 = vadd.f32 0.0, %v1527
        %v1529 = vpop.f32.mrf.mxu0
        %1530 = vdwg.mxu0
        %v1531 = vadd.f32 %v1142, %v1501
        %v1532 = vadd.f32 %v1145, %v1504
        %v1533 = vadd.f32 %v1150, %v1509
        %v1534 = vadd.f32 %v1153, %v1512
        %v1535 = vadd.f32 %v1158, %v1517
        %v1536 = vadd.f32 %v1161, %v1520
        %v1537 = vadd.f32 %v1166, %v1525
        %v1538 = vadd.f32 %v1169, %v1528
        %v1539 = vld [vmem:[#allocation2 + $0x4] sm:$0x8]
        %v1540 = vld [vmem:[#allocation2 + $0x24] sm:$0xf]
        %v1541 = vmul.bf16 %v1539, %v802
        %v1542 = vmul.bf16 %v1173, %v812
        %v1543 = vmul.bf16 %v1174, %v822
        %v1544 = vmul.bf16 %v1175, %v832
        %v1545 = vmul.bf16 %v1176, %v842
        %v1546 = vmul.bf16 %v1177, %v852
        %v1547 = vmul.bf16 %v1178, %v862
        %v1548 = vmul.bf16 %v1179, %v872
        %v1549 = vmul.bf16 %v1540, %v877
        %s1550 = scalar_lea.vmem %s6, 48
        %v1551 = vld [vmem:[%s1550] sm:$0xf]
        %v1552 = vld [vmem:[%s1550 + $0x4] sm:$0xf]
        %v1553 = vld [vmem:[%s1550 + $0x8] sm:$0xf]
        %v1554 = vld [vmem:[%s1550 + $0xc] sm:$0xf]
        %v1564 = vunpack.c.l.b16 %v1541
        %v1565 = vunpack.c.l.b16 %v1542
        %v1566 = vunpack.c.l.b16 %v1543
        %v1567 = vunpack.c.l.b16 %v1544
        %v1568 = vunpack.c.l.b16 %v1545
        %v1569 = vunpack.c.l.b16 %v1546
        %v1570 = vunpack.c.l.b16 %v1547
        %v1571 = vunpack.c.l.b16 %v1548
        %v1572 = vunpack.c.l.b16 %v1549
        %v1573 = vpack.c.b16 %v1565, %v1564
        %v1574 = vpack.c.b16 %v1567, %v1566
        %v1575 = vpack.c.b16 %v1569, %v1568
        %v1576 = vpack.c.b16 %v1571, %v1570
        %v1577 = vpack.c.b16 %v1572, %v1572
        %v1579 = vshrl.u32 %v1573, 16
        %v1581 = vrot.slane %v1579, 3
        %v1582 = vshll.u32 %v1573, 16
        %v1584 = vrot.slane %v1582, 4
        %v1585 = vor.u32 %v1581, %v1584
        %v1587 = vshrl.u32 %v1574, 16
        %v1589 = vrot.slane %v1587, 3
        %v1590 = vshll.u32 %v1574, 16
        %v1592 = vrot.slane %v1590, 4
        %v1593 = vor.u32 %v1589, %v1592
        %v1594 = vsel %vm1038, %v1585, %v1593
        %v1596 = vshrl.u32 %v1575, 16
        %v1598 = vrot.slane %v1596, 3
        %v1599 = vshll.u32 %v1575, 16
        %v1601 = vrot.slane %v1599, 4
        %v1602 = vor.u32 %v1598, %v1601
        %v1603 = vsel %vm1038, %v1593, %v1602
        %v1605 = vshrl.u32 %v1576, 16
        %v1607 = vrot.slane %v1605, 3
        %v1608 = vshll.u32 %v1576, 16
        %v1610 = vrot.slane %v1608, 4
        %v1611 = vor.u32 %v1607, %v1610
        %v1612 = vsel %vm1038, %v1602, %v1611
        %v1614 = vshrl.u32 %v1577, 16
        %v1616 = vrot.slane %v1614, 3
        %v1617 = vshll.u32 %v1577, 16
        %v1619 = vrot.slane %v1617, 4
        %v1620 = vor.u32 %v1616, %v1619
        %v1621 = vsel %vm1038, %v1611, %v1620
        %v1626 = vunpack.c.l.b16 %v1551
        %v1627 = vunpack.c.l.b16 %v1552
        %v1628 = vunpack.c.l.b16 %v1553
        %v1629 = vunpack.c.l.b16 %v1554
        %v1630 = vpack.c.b16 %v1627, %v1626
        %v1631 = vpack.c.b16 %v1629, %v1628
        %v1635 = vsel %vm937, %v1594, 0
        %v1638 = vsel %vm937, %v1603, 0
        %v1641 = vsel %vm937, %v1612, 0
        %v1644 = vsel %vm937, %v1621, 0
        %1646 = vmatprep.subr.bf16.mxu0 0
        %1647 = vmatpush1.bf16.msra.mxu0 0
        %1648 = vmatprep.subr.bf16.mxu0 0
        %1649 = vmatpush1.bf16.msra.mxu0 0
        %1650 = vmatprep.subr.bf16.mxu0 0
        %1651 = vmatpush1.bf16.msra.mxu0 0
        %1652 = vmatprep.subr.bf16.mxu0 0
        %1653 = vmatpush1.bf16.msra.mxu0 0
        %1654 = vmatprep.subr.bf16.mxu0 0
        %1655 = vmatpush1.bf16.msra.mxu0 0
        %1656 = vmatprep.subr.bf16.mxu0 0
        %1657 = vmatpush1.bf16.msra.mxu0 0
        %1658 = vmatprep.subr.bf16.mxu0 0
        %1659 = vmatpush1.bf16.msra.mxu0 %v1631
        %1660 = vmatprep.subr.bf16.mxu0 0
        %1661 = vmatpush1.bf16.msra.mxu0 %v1630
        %1662 = vmatprep.subr.bf16.mxu0 0
        %1663 = vmatpush2.bf16.msra.mxu0 0
        %1664 = vmatprep.subr.bf16.mxu0 0
        %1665 = vmatpush2.bf16.msra.mxu0 0
        %1666 = vmatprep.subr.bf16.mxu0 0
        %1667 = vmatpush2.bf16.msra.mxu0 0
        %1668 = vmatprep.subr.bf16.mxu0 0
        %1669 = vmatpush2.bf16.msra.mxu0 0
        %1670 = vmatprep.subr.bf16.mxu0 0
        %1671 = vmatpush2.bf16.msra.mxu0 0
        %1672 = vmatprep.subr.bf16.mxu0 0
        %1673 = vmatpush2.bf16.msra.mxu0 0
        %1674 = vmatprep.subr.bf16.mxu0 0
        %1675 = vmatpush2.bf16.msra.mxu0 0
        %1676 = vmatprep.subr.bf16.mxu0 0
        %1677 = vmatpush2.bf16.msra.mxu0 0
        %1678 = vmatprep.mubr.bf16.mxu0 0
        %1679 = vmatmul.mubr.bf16.gmra.mxu0 %v1635
        %v1680 = vpop.f32.mrf.mxu0
        %v1681 = vadd.f32 0.0, %v1680
        %v1682 = vpop.f32.mrf.mxu0
        %v1683 = vpop.f32.mrf.mxu0
        %v1684 = vadd.f32 0.0, %v1683
        %v1685 = vpop.f32.mrf.mxu0
        %1686 = vmatprep.mubr.bf16.mxu0 0
        %1687 = vmatmul.mubr.bf16.gmra.mxu0 %v1638
        %v1688 = vpop.f32.mrf.mxu0
        %v1689 = vadd.f32 0.0, %v1688
        %v1690 = vpop.f32.mrf.mxu0
        %v1691 = vpop.f32.mrf.mxu0
        %v1692 = vadd.f32 0.0, %v1691
        %v1693 = vpop.f32.mrf.mxu0
        %1694 = vmatprep.mubr.bf16.mxu0 0
        %1695 = vmatmul.mubr.bf16.gmra.mxu0 %v1641
        %v1696 = vpop.f32.mrf.mxu0
        %v1697 = vadd.f32 0.0, %v1696
        %v1698 = vpop.f32.mrf.mxu0
        %v1699 = vpop.f32.mrf.mxu0
        %v1700 = vadd.f32 0.0, %v1699
        %v1701 = vpop.f32.mrf.mxu0
        %1702 = vmatprep.mubr.bf16.mxu0 0
        %1703 = vmatmul.mubr.bf16.gmra.mxu0 %v1644
        %v1704 = vpop.f32.mrf.mxu0
        %v1705 = vadd.f32 0.0, %v1704
        %v1706 = vpop.f32.mrf.mxu0
        %v1707 = vpop.f32.mrf.mxu0
        %v1708 = vadd.f32 0.0, %v1707
        %v1709 = vpop.f32.mrf.mxu0
        %1710 = vdwg.mxu0
        %v1711 = vadd.f32 %v1531, %v1681
        %v1712 = vadd.f32 %v1532, %v1684
        %v1713 = vadd.f32 %v1533, %v1689
        %v1714 = vadd.f32 %v1534, %v1692
        %v1715 = vadd.f32 %v1535, %v1697
        %v1716 = vadd.f32 %v1536, %v1700
        %v1717 = vadd.f32 %v1537, %v1705
        %v1718 = vadd.f32 %v1538, %v1708
        %s1719 = scalar_lea.vmem %s6, 64
        %v1720 = vld [vmem:[%s1719] sm:$0xf]
        %v1721 = vld [vmem:[%s1719 + $0x4] sm:$0xf]
        %v1722 = vld [vmem:[%s1719 + $0x8] sm:$0xf]
        %v1723 = vld [vmem:[%s1719 + $0xc] sm:$0xf]
        %v1732 = vunpack.c.l.b16 %v1173
        %v1733 = vunpack.c.l.b16 %v1174
        %v1734 = vunpack.c.l.b16 %v1175
        %v1735 = vunpack.c.l.b16 %v1176
        %v1736 = vunpack.c.l.b16 %v1177
        %v1737 = vunpack.c.l.b16 %v1178
        %v1738 = vunpack.c.l.b16 %v1179
        %v1739 = vunpack.c.l.b16 %v1540
        %v1740 = vpack.c.b16 %v1733, %v1732
        %v1741 = vpack.c.b16 %v1735, %v1734
        %v1742 = vpack.c.b16 %v1737, %v1736
        %v1743 = vpack.c.b16 %v1739, %v1738
        %v1748 = vunpack.c.l.b16 %v1720
        %v1749 = vunpack.c.l.b16 %v1721
        %v1750 = vunpack.c.l.b16 %v1722
        %v1751 = vunpack.c.l.b16 %v1723
        %v1752 = vpack.c.b16 %v1749, %v1748
        %v1753 = vpack.c.b16 %v1751, %v1750
        %v1757 = vsel %vm937, %v1740, 0
        %v1760 = vsel %vm937, %v1741, 0
        %v1763 = vsel %vm937, %v1742, 0
        %v1766 = vsel %vm937, %v1743, 0
        %1768 = vmatprep.subr.bf16.mxu0 0
        %1769 = vmatpush1.bf16.msra.mxu0 0
        %1770 = vmatprep.subr.bf16.mxu0 0
        %1771 = vmatpush1.bf16.msra.mxu0 0
        %1772 = vmatprep.subr.bf16.mxu0 0
        %1773 = vmatpush1.bf16.msra.mxu0 0
        %1774 = vmatprep.subr.bf16.mxu0 0
        %1775 = vmatpush1.bf16.msra.mxu0 0
        %1776 = vmatprep.subr.bf16.mxu0 0
        %1777 = vmatpush1.bf16.msra.mxu0 0
        %1778 = vmatprep.subr.bf16.mxu0 0
        %1779 = vmatpush1.bf16.msra.mxu0 0
        %1780 = vmatprep.subr.bf16.mxu0 0
        %1781 = vmatpush1.bf16.msra.mxu0 %v1753
        %1782 = vmatprep.subr.bf16.mxu0 0
        %1783 = vmatpush1.bf16.msra.mxu0 %v1752
        %1784 = vmatprep.subr.bf16.mxu0 0
        %1785 = vmatpush2.bf16.msra.mxu0 0
        %1786 = vmatprep.subr.bf16.mxu0 0
        %1787 = vmatpush2.bf16.msra.mxu0 0
        %1788 = vmatprep.subr.bf16.mxu0 0
        %1789 = vmatpush2.bf16.msra.mxu0 0
        %1790 = vmatprep.subr.bf16.mxu0 0
        %1791 = vmatpush2.bf16.msra.mxu0 0
        %1792 = vmatprep.subr.bf16.mxu0 0
        %1793 = vmatpush2.bf16.msra.mxu0 0
        %1794 = vmatprep.subr.bf16.mxu0 0
        %1795 = vmatpush2.bf16.msra.mxu0 0
        %1796 = vmatprep.subr.bf16.mxu0 0
        %1797 = vmatpush2.bf16.msra.mxu0 0
        %1798 = vmatprep.subr.bf16.mxu0 0
        %1799 = vmatpush2.bf16.msra.mxu0 0
        %1800 = vmatprep.mubr.bf16.mxu0 0
        %1801 = vmatmul.mubr.bf16.gmra.mxu0 %v1757
        %v1802 = vpop.f32.mrf.mxu0
        %v1803 = vadd.f32 0.0, %v1802
        %v1804 = vpop.f32.mrf.mxu0
        %v1805 = vpop.f32.mrf.mxu0
        %v1806 = vadd.f32 0.0, %v1805
        %v1807 = vpop.f32.mrf.mxu0
        %1808 = vmatprep.mubr.bf16.mxu0 0
        %1809 = vmatmul.mubr.bf16.gmra.mxu0 %v1760
        %v1810 = vpop.f32.mrf.mxu0
        %v1811 = vadd.f32 0.0, %v1810
        %v1812 = vpop.f32.mrf.mxu0
        %v1813 = vpop.f32.mrf.mxu0
        %v1814 = vadd.f32 0.0, %v1813
        %v1815 = vpop.f32.mrf.mxu0
        %1816 = vmatprep.mubr.bf16.mxu0 0
        %1817 = vmatmul.mubr.bf16.gmra.mxu0 %v1763
        %v1818 = vpop.f32.mrf.mxu0
        %v1819 = vadd.f32 0.0, %v1818
        %v1820 = vpop.f32.mrf.mxu0
        %v1821 = vpop.f32.mrf.mxu0
        %v1822 = vadd.f32 0.0, %v1821
        %v1823 = vpop.f32.mrf.mxu0
        %1824 = vmatprep.mubr.bf16.mxu0 0
        %1825 = vmatmul.mubr.bf16.gmra.mxu0 %v1766
        %v1826 = vpop.f32.mrf.mxu0
        %v1827 = vadd.f32 0.0, %v1826
        %v1828 = vpop.f32.mrf.mxu0
        %v1829 = vpop.f32.mrf.mxu0
        %v1830 = vadd.f32 0.0, %v1829
        %v1831 = vpop.f32.mrf.mxu0
        %1832 = vdwg.mxu0
        %v1833 = vadd.f32 %v1711, %v1803
        %v1834 = vadd.f32 %v1712, %v1806
        %v1835 = vadd.f32 %v1713, %v1811
        %v1836 = vadd.f32 %v1714, %v1814
        %v1837 = vadd.f32 %v1715, %v1819
        %v1838 = vadd.f32 %v1716, %v1822
        %v1839 = vadd.f32 %v1717, %v1827
        %v1840 = vadd.f32 %v1718, %v1830
        %v1841 = vld [vmem:[#allocation2 + $0x8] sm:$0xf]
        %v1842 = vld [vmem:[#allocation2 + $0xc] sm:$0xf]
        %v1843 = vld [vmem:[#allocation2 + $0x10] sm:$0xf]
        %v1844 = vld [vmem:[#allocation2 + $0x14] sm:$0xf]
        %v1845 = vld [vmem:[#allocation2 + $0x18] sm:$0xf]
        %v1846 = vld [vmem:[#allocation2 + $0x1c] sm:$0xf]
        %v1847 = vld [vmem:[#allocation2 + $0x20] sm:$0xf]
        %v1848 = vld [vmem:[#allocation2 + $0x24] sm:$0xf]
        %v1849 = vld [vmem:[#allocation2 + $0x28] sm:$0x1]
        %v1850 = vmul.bf16 %v1841, %v1294
        %v1851 = vmul.bf16 %v1842, %v1303
        %v1852 = vmul.bf16 %v1843, %v1312
        %v1853 = vmul.bf16 %v1844, %v1321
        %v1854 = vmul.bf16 %v1845, %v1330
        %v1855 = vmul.bf16 %v1846, %v1339
        %v1856 = vmul.bf16 %v1847, %v1348
        %v1857 = vmul.bf16 %v1848, %v1357
        %v1858 = vmul.bf16 %v1849, %v1358
        %s1859 = scalar_lea.vmem %s6, 80
        %v1860 = vld [vmem:[%s1859] sm:$0xf]
        %v1861 = vld [vmem:[%s1859 + $0x4] sm:$0xf]
        %v1862 = vld [vmem:[%s1859 + $0x8] sm:$0xf]
        %v1863 = vld [vmem:[%s1859 + $0xc] sm:$0xf]
        %v1873 = vunpack.c.l.b16 %v1850
        %v1874 = vunpack.c.l.b16 %v1851
        %v1875 = vunpack.c.l.b16 %v1852
        %v1876 = vunpack.c.l.b16 %v1853
        %v1877 = vunpack.c.l.b16 %v1854
        %v1878 = vunpack.c.l.b16 %v1855
        %v1879 = vunpack.c.l.b16 %v1856
        %v1880 = vunpack.c.l.b16 %v1857
        %v1881 = vunpack.c.l.b16 %v1858
        %v1882 = vpack.c.b16 %v1874, %v1873
        %v1883 = vpack.c.b16 %v1876, %v1875
        %v1884 = vpack.c.b16 %v1878, %v1877
        %v1885 = vpack.c.b16 %v1880, %v1879
        %v1886 = vpack.c.b16 %v1881, %v1881
        %v1888 = vshrl.u32 %v1882, 16
        %v1890 = vshll.u32 %v1882, 16
        %v1892 = vrot.slane %v1890, 1
        %v1893 = vor.u32 %v1888, %v1892
        %v1895 = vshll.u32 %v1883, 16
        %v1897 = vrot.slane %v1895, 1
        %v1898 = vsel %vm1405, %v1893, %v1897
        %v1899 = vshrl.u32 %v1883, 16
        %v1901 = vor.u32 %v1899, %v1897
        %v1903 = vshll.u32 %v1884, 16
        %v1905 = vrot.slane %v1903, 1
        %v1906 = vsel %vm1405, %v1901, %v1905
        %v1907 = vshrl.u32 %v1884, 16
        %v1909 = vor.u32 %v1907, %v1905
        %v1911 = vshll.u32 %v1885, 16
        %v1913 = vrot.slane %v1911, 1
        %v1914 = vsel %vm1405, %v1909, %v1913
        %v1915 = vshrl.u32 %v1885, 16
        %v1917 = vor.u32 %v1915, %v1913
        %v1919 = vshll.u32 %v1886, 16
        %v1921 = vrot.slane %v1919, 1
        %v1922 = vsel %vm1405, %v1917, %v1921
        %v1927 = vunpack.c.l.b16 %v1860
        %v1928 = vunpack.c.l.b16 %v1861
        %v1929 = vunpack.c.l.b16 %v1862
        %v1930 = vunpack.c.l.b16 %v1863
        %v1931 = vpack.c.b16 %v1928, %v1927
        %v1932 = vpack.c.b16 %v1930, %v1929
        %v1936 = vsel %vm937, %v1898, 0
        %v1939 = vsel %vm937, %v1906, 0
        %v1942 = vsel %vm937, %v1914, 0
        %v1945 = vsel %vm937, %v1922, 0
        %1947 = vmatprep.subr.bf16.mxu0 0
        %1948 = vmatpush1.bf16.msra.mxu0 0
        %1949 = vmatprep.subr.bf16.mxu0 0
        %1950 = vmatpush1.bf16.msra.mxu0 0
        %1951 = vmatprep.subr.bf16.mxu0 0
        %1952 = vmatpush1.bf16.msra.mxu0 0
        %1953 = vmatprep.subr.bf16.mxu0 0
        %1954 = vmatpush1.bf16.msra.mxu0 0
        %1955 = vmatprep.subr.bf16.mxu0 0
        %1956 = vmatpush1.bf16.msra.mxu0 0
        %1957 = vmatprep.subr.bf16.mxu0 0
        %1958 = vmatpush1.bf16.msra.mxu0 0
        %1959 = vmatprep.subr.bf16.mxu0 0
        %1960 = vmatpush1.bf16.msra.mxu0 %v1932
        %1961 = vmatprep.subr.bf16.mxu0 0
        %1962 = vmatpush1.bf16.msra.mxu0 %v1931
        %1963 = vmatprep.subr.bf16.mxu0 0
        %1964 = vmatpush2.bf16.msra.mxu0 0
        %1965 = vmatprep.subr.bf16.mxu0 0
        %1966 = vmatpush2.bf16.msra.mxu0 0
        %1967 = vmatprep.subr.bf16.mxu0 0
        %1968 = vmatpush2.bf16.msra.mxu0 0
        %1969 = vmatprep.subr.bf16.mxu0 0
        %1970 = vmatpush2.bf16.msra.mxu0 0
        %1971 = vmatprep.subr.bf16.mxu0 0
        %1972 = vmatpush2.bf16.msra.mxu0 0
        %1973 = vmatprep.subr.bf16.mxu0 0
        %1974 = vmatpush2.bf16.msra.mxu0 0
        %1975 = vmatprep.subr.bf16.mxu0 0
        %1976 = vmatpush2.bf16.msra.mxu0 0
        %1977 = vmatprep.subr.bf16.mxu0 0
        %1978 = vmatpush2.bf16.msra.mxu0 0
        %1979 = vmatprep.mubr.bf16.mxu0 0
        %1980 = vmatmul.mubr.bf16.gmra.mxu0 %v1936
        %v1981 = vpop.f32.mrf.mxu0
        %v1982 = vadd.f32 0.0, %v1981
        %v1983 = vpop.f32.mrf.mxu0
        %v1984 = vpop.f32.mrf.mxu0
        %v1985 = vadd.f32 0.0, %v1984
        %v1986 = vpop.f32.mrf.mxu0
        %1987 = vmatprep.mubr.bf16.mxu0 0
        %1988 = vmatmul.mubr.bf16.gmra.mxu0 %v1939
        %v1989 = vpop.f32.mrf.mxu0
        %v1990 = vadd.f32 0.0, %v1989
        %v1991 = vpop.f32.mrf.mxu0
        %v1992 = vpop.f32.mrf.mxu0
        %v1993 = vadd.f32 0.0, %v1992
        %v1994 = vpop.f32.mrf.mxu0
        %1995 = vmatprep.mubr.bf16.mxu0 0
        %1996 = vmatmul.mubr.bf16.gmra.mxu0 %v1942
        %v1997 = vpop.f32.mrf.mxu0
        %v1998 = vadd.f32 0.0, %v1997
        %v1999 = vpop.f32.mrf.mxu0
        %v2000 = vpop.f32.mrf.mxu0
        %v2001 = vadd.f32 0.0, %v2000
        %v2002 = vpop.f32.mrf.mxu0
        %2003 = vmatprep.mubr.bf16.mxu0 0
        %2004 = vmatmul.mubr.bf16.gmra.mxu0 %v1945
        %v2005 = vpop.f32.mrf.mxu0
        %v2006 = vadd.f32 0.0, %v2005
        %v2007 = vpop.f32.mrf.mxu0
        %v2008 = vpop.f32.mrf.mxu0
        %v2009 = vadd.f32 0.0, %v2008
        %v2010 = vpop.f32.mrf.mxu0
        %2011 = vdwg.mxu0
        %v2012 = vadd.f32 %v1833, %v1982
        %v2013 = vadd.f32 %v1834, %v1985
        %v2014 = vadd.f32 %v1835, %v1990
        %v2015 = vadd.f32 %v1836, %v1993
        %v2016 = vadd.f32 %v1837, %v1998
        %v2017 = vadd.f32 %v1838, %v2001
        %v2018 = vadd.f32 %v1839, %v2006
        %v2019 = vadd.f32 %v1840, %v2009
        %v2020 = vld [vmem:[#allocation2 + $0x8] sm:$0x8]
        %v2021 = vld [vmem:[#allocation2 + $0x28] sm:$0xf]
        %v2022 = vmul.bf16 %v2020, %v802
        %v2023 = vmul.bf16 %v1842, %v812
        %v2024 = vmul.bf16 %v1843, %v822
        %v2025 = vmul.bf16 %v1844, %v832
        %v2026 = vmul.bf16 %v1845, %v842
        %v2027 = vmul.bf16 %v1846, %v852
        %v2028 = vmul.bf16 %v1847, %v862
        %v2029 = vmul.bf16 %v1848, %v872
        %v2030 = vmul.bf16 %v2021, %v877
        %s2031 = scalar_lea.vmem %s6, 96
        %v2032 = vld [vmem:[%s2031] sm:$0xf]
        %v2033 = vld [vmem:[%s2031 + $0x4] sm:$0xf]
        %v2034 = vld [vmem:[%s2031 + $0x8] sm:$0xf]
        %v2035 = vld [vmem:[%s2031 + $0xc] sm:$0xf]
        %v2045 = vunpack.c.l.b16 %v2022
        %v2046 = vunpack.c.l.b16 %v2023
        %v2047 = vunpack.c.l.b16 %v2024
        %v2048 = vunpack.c.l.b16 %v2025
        %v2049 = vunpack.c.l.b16 %v2026
        %v2050 = vunpack.c.l.b16 %v2027
        %v2051 = vunpack.c.l.b16 %v2028
        %v2052 = vunpack.c.l.b16 %v2029
        %v2053 = vunpack.c.l.b16 %v2030
        %v2054 = vpack.c.b16 %v2046, %v2045
        %v2055 = vpack.c.b16 %v2048, %v2047
        %v2056 = vpack.c.b16 %v2050, %v2049
        %v2057 = vpack.c.b16 %v2052, %v2051
        %v2058 = vpack.c.b16 %v2053, %v2053
        %v2060 = vshrl.u32 %v2054, 16
        %v2062 = vrot.slane %v2060, 3
        %v2063 = vshll.u32 %v2054, 16
        %v2065 = vrot.slane %v2063, 4
        %v2066 = vor.u32 %v2062, %v2065
        %v2068 = vshrl.u32 %v2055, 16
        %v2070 = vrot.slane %v2068, 3
        %v2071 = vshll.u32 %v2055, 16
        %v2073 = vrot.slane %v2071, 4
        %v2074 = vor.u32 %v2070, %v2073
        %v2075 = vsel %vm1038, %v2066, %v2074
        %v2077 = vshrl.u32 %v2056, 16
        %v2079 = vrot.slane %v2077, 3
        %v2080 = vshll.u32 %v2056, 16
        %v2082 = vrot.slane %v2080, 4
        %v2083 = vor.u32 %v2079, %v2082
        %v2084 = vsel %vm1038, %v2074, %v2083
        %v2086 = vshrl.u32 %v2057, 16
        %v2088 = vrot.slane %v2086, 3
        %v2089 = vshll.u32 %v2057, 16
        %v2091 = vrot.slane %v2089, 4
        %v2092 = vor.u32 %v2088, %v2091
        %v2093 = vsel %vm1038, %v2083, %v2092
        %v2095 = vshrl.u32 %v2058, 16
        %v2097 = vrot.slane %v2095, 3
        %v2098 = vshll.u32 %v2058, 16
        %v2100 = vrot.slane %v2098, 4
        %v2101 = vor.u32 %v2097, %v2100
        %v2102 = vsel %vm1038, %v2092, %v2101
        %v2107 = vunpack.c.l.b16 %v2032
        %v2108 = vunpack.c.l.b16 %v2033
        %v2109 = vunpack.c.l.b16 %v2034
        %v2110 = vunpack.c.l.b16 %v2035
        %v2111 = vpack.c.b16 %v2108, %v2107
        %v2112 = vpack.c.b16 %v2110, %v2109
        %v2116 = vsel %vm937, %v2075, 0
        %v2119 = vsel %vm937, %v2084, 0
        %v2122 = vsel %vm937, %v2093, 0
        %v2125 = vsel %vm937, %v2102, 0
        %2127 = vmatprep.subr.bf16.mxu0 0
        %2128 = vmatpush1.bf16.msra.mxu0 0
        %2129 = vmatprep.subr.bf16.mxu0 0
        %2130 = vmatpush1.bf16.msra.mxu0 0
        %2131 = vmatprep.subr.bf16.mxu0 0
        %2132 = vmatpush1.bf16.msra.mxu0 0
        %2133 = vmatprep.subr.bf16.mxu0 0
        %2134 = vmatpush1.bf16.msra.mxu0 0
        %2135 = vmatprep.subr.bf16.mxu0 0
        %2136 = vmatpush1.bf16.msra.mxu0 0
        %2137 = vmatprep.subr.bf16.mxu0 0
        %2138 = vmatpush1.bf16.msra.mxu0 0
        %2139 = vmatprep.subr.bf16.mxu0 0
        %2140 = vmatpush1.bf16.msra.mxu0 %v2112
        %2141 = vmatprep.subr.bf16.mxu0 0
        %2142 = vmatpush1.bf16.msra.mxu0 %v2111
        %2143 = vmatprep.subr.bf16.mxu0 0
        %2144 = vmatpush2.bf16.msra.mxu0 0
        %2145 = vmatprep.subr.bf16.mxu0 0
        %2146 = vmatpush2.bf16.msra.mxu0 0
        %2147 = vmatprep.subr.bf16.mxu0 0
        %2148 = vmatpush2.bf16.msra.mxu0 0
        %2149 = vmatprep.subr.bf16.mxu0 0
        %2150 = vmatpush2.bf16.msra.mxu0 0
        %2151 = vmatprep.subr.bf16.mxu0 0
        %2152 = vmatpush2.bf16.msra.mxu0 0
        %2153 = vmatprep.subr.bf16.mxu0 0
        %2154 = vmatpush2.bf16.msra.mxu0 0
        %2155 = vmatprep.subr.bf16.mxu0 0
        %2156 = vmatpush2.bf16.msra.mxu0 0
        %2157 = vmatprep.subr.bf16.mxu0 0
        %2158 = vmatpush2.bf16.msra.mxu0 0
        %2159 = vmatprep.mubr.bf16.mxu0 0
        %2160 = vmatmul.mubr.bf16.gmra.mxu0 %v2116
        %v2161 = vpop.f32.mrf.mxu0
        %v2162 = vadd.f32 0.0, %v2161
        %v2163 = vpop.f32.mrf.mxu0
        %v2164 = vpop.f32.mrf.mxu0
        %v2165 = vadd.f32 0.0, %v2164
        %v2166 = vpop.f32.mrf.mxu0
        %2167 = vmatprep.mubr.bf16.mxu0 0
        %2168 = vmatmul.mubr.bf16.gmra.mxu0 %v2119
        %v2169 = vpop.f32.mrf.mxu0
        %v2170 = vadd.f32 0.0, %v2169
        %v2171 = vpop.f32.mrf.mxu0
        %v2172 = vpop.f32.mrf.mxu0
        %v2173 = vadd.f32 0.0, %v2172
        %v2174 = vpop.f32.mrf.mxu0
        %2175 = vmatprep.mubr.bf16.mxu0 0
        %2176 = vmatmul.mubr.bf16.gmra.mxu0 %v2122
        %v2177 = vpop.f32.mrf.mxu0
        %v2178 = vadd.f32 0.0, %v2177
        %v2179 = vpop.f32.mrf.mxu0
        %v2180 = vpop.f32.mrf.mxu0
        %v2181 = vadd.f32 0.0, %v2180
        %v2182 = vpop.f32.mrf.mxu0
        %2183 = vmatprep.mubr.bf16.mxu0 0
        %2184 = vmatmul.mubr.bf16.gmra.mxu0 %v2125
        %v2185 = vpop.f32.mrf.mxu0
        %v2186 = vadd.f32 0.0, %v2185
        %v2187 = vpop.f32.mrf.mxu0
        %v2188 = vpop.f32.mrf.mxu0
        %v2189 = vadd.f32 0.0, %v2188
        %v2190 = vpop.f32.mrf.mxu0
        %2191 = vdwg.mxu0
        %v2192 = vadd.f32 %v2012, %v2162
        %v2193 = vadd.f32 %v2013, %v2165
        %v2194 = vadd.f32 %v2014, %v2170
        %v2195 = vadd.f32 %v2015, %v2173
        %v2196 = vadd.f32 %v2016, %v2178
        %v2197 = vadd.f32 %v2017, %v2181
        %v2198 = vadd.f32 %v2018, %v2186
        %v2199 = vadd.f32 %v2019, %v2189
        %s2200 = scalar_lea.vmem %s6, 112
        %v2201 = vld [vmem:[%s2200] sm:$0xf]
        %v2202 = vld [vmem:[%s2200 + $0x4] sm:$0xf]
        %v2203 = vld [vmem:[%s2200 + $0x8] sm:$0xf]
        %v2204 = vld [vmem:[%s2200 + $0xc] sm:$0xf]
        %v2213 = vunpack.c.l.b16 %v1842
        %v2214 = vunpack.c.l.b16 %v1843
        %v2215 = vunpack.c.l.b16 %v1844
        %v2216 = vunpack.c.l.b16 %v1845
        %v2217 = vunpack.c.l.b16 %v1846
        %v2218 = vunpack.c.l.b16 %v1847
        %v2219 = vunpack.c.l.b16 %v1848
        %v2220 = vunpack.c.l.b16 %v2021
        %v2221 = vpack.c.b16 %v2214, %v2213
        %v2222 = vpack.c.b16 %v2216, %v2215
        %v2223 = vpack.c.b16 %v2218, %v2217
        %v2224 = vpack.c.b16 %v2220, %v2219
        %v2229 = vunpack.c.l.b16 %v2201
        %v2230 = vunpack.c.l.b16 %v2202
        %v2231 = vunpack.c.l.b16 %v2203
        %v2232 = vunpack.c.l.b16 %v2204
        %v2233 = vpack.c.b16 %v2230, %v2229
        %v2234 = vpack.c.b16 %v2232, %v2231
        %v2238 = vsel %vm937, %v2221, 0
        %v2241 = vsel %vm937, %v2222, 0
        %v2244 = vsel %vm937, %v2223, 0
        %v2247 = vsel %vm937, %v2224, 0
        %2249 = vmatprep.subr.bf16.mxu0 0
        %2250 = vmatpush1.bf16.msra.mxu0 0
        %2251 = vmatprep.subr.bf16.mxu0 0
        %2252 = vmatpush1.bf16.msra.mxu0 0
        %2253 = vmatprep.subr.bf16.mxu0 0
        %2254 = vmatpush1.bf16.msra.mxu0 0
        %2255 = vmatprep.subr.bf16.mxu0 0
        %2256 = vmatpush1.bf16.msra.mxu0 0
        %2257 = vmatprep.subr.bf16.mxu0 0
        %2258 = vmatpush1.bf16.msra.mxu0 0
        %2259 = vmatprep.subr.bf16.mxu0 0
        %2260 = vmatpush1.bf16.msra.mxu0 0
        %2261 = vmatprep.subr.bf16.mxu0 0
        %2262 = vmatpush1.bf16.msra.mxu0 %v2234
        %2263 = vmatprep.subr.bf16.mxu0 0
        %2264 = vmatpush1.bf16.msra.mxu0 %v2233
        %2265 = vmatprep.subr.bf16.mxu0 0
        %2266 = vmatpush2.bf16.msra.mxu0 0
        %2267 = vmatprep.subr.bf16.mxu0 0
        %2268 = vmatpush2.bf16.msra.mxu0 0
        %2269 = vmatprep.subr.bf16.mxu0 0
        %2270 = vmatpush2.bf16.msra.mxu0 0
        %2271 = vmatprep.subr.bf16.mxu0 0
        %2272 = vmatpush2.bf16.msra.mxu0 0
        %2273 = vmatprep.subr.bf16.mxu0 0
        %2274 = vmatpush2.bf16.msra.mxu0 0
        %2275 = vmatprep.subr.bf16.mxu0 0
        %2276 = vmatpush2.bf16.msra.mxu0 0
        %2277 = vmatprep.subr.bf16.mxu0 0
        %2278 = vmatpush2.bf16.msra.mxu0 0
        %2279 = vmatprep.subr.bf16.mxu0 0
        %2280 = vmatpush2.bf16.msra.mxu0 0
        %2281 = vmatprep.mubr.bf16.mxu0 0
        %2282 = vmatmul.mubr.bf16.gmra.mxu0 %v2238
        %v2283 = vpop.f32.mrf.mxu0
        %v2284 = vadd.f32 0.0, %v2283
        %v2285 = vpop.f32.mrf.mxu0
        %v2286 = vpop.f32.mrf.mxu0
        %v2287 = vadd.f32 0.0, %v2286
        %v2288 = vpop.f32.mrf.mxu0
        %2289 = vmatprep.mubr.bf16.mxu0 0
        %2290 = vmatmul.mubr.bf16.gmra.mxu0 %v2241
        %v2291 = vpop.f32.mrf.mxu0
        %v2292 = vadd.f32 0.0, %v2291
        %v2293 = vpop.f32.mrf.mxu0
        %v2294 = vpop.f32.mrf.mxu0
        %v2295 = vadd.f32 0.0, %v2294
        %v2296 = vpop.f32.mrf.mxu0
        %2297 = vmatprep.mubr.bf16.mxu0 0
        %2298 = vmatmul.mubr.bf16.gmra.mxu0 %v2244
        %v2299 = vpop.f32.mrf.mxu0
        %v2300 = vadd.f32 0.0, %v2299
        %v2301 = vpop.f32.mrf.mxu0
        %v2302 = vpop.f32.mrf.mxu0
        %v2303 = vadd.f32 0.0, %v2302
        %v2304 = vpop.f32.mrf.mxu0
        %2305 = vmatprep.mubr.bf16.mxu0 0
        %2306 = vmatmul.mubr.bf16.gmra.mxu0 %v2247
        %v2307 = vpop.f32.mrf.mxu0
        %v2308 = vadd.f32 0.0, %v2307
        %v2309 = vpop.f32.mrf.mxu0
        %v2310 = vpop.f32.mrf.mxu0
        %v2311 = vadd.f32 0.0, %v2310
        %v2312 = vpop.f32.mrf.mxu0
        %2313 = vdwg.mxu0
        %v2314 = vadd.f32 %v2192, %v2284
        %v2315 = vadd.f32 %v2193, %v2287
        %v2316 = vadd.f32 %v2194, %v2292
        %v2317 = vadd.f32 %v2195, %v2295
        %v2318 = vadd.f32 %v2196, %v2300
        %v2319 = vadd.f32 %v2197, %v2303
        %v2320 = vadd.f32 %v2198, %v2308
        %v2321 = vadd.f32 %v2199, %v2311
        %v2322 = vld [vmem:[#allocation2 + $0xc] sm:$0xf]
        %v2323 = vld [vmem:[#allocation2 + $0x10] sm:$0xf]
        %v2324 = vld [vmem:[#allocation2 + $0x14] sm:$0xf]
        %v2325 = vld [vmem:[#allocation2 + $0x18] sm:$0xf]
        %v2326 = vld [vmem:[#allocation2 + $0x1c] sm:$0xf]
        %v2327 = vld [vmem:[#allocation2 + $0x20] sm:$0xf]
        %v2328 = vld [vmem:[#allocation2 + $0x24] sm:$0xf]
        %v2329 = vld [vmem:[#allocation2 + $0x28] sm:$0xf]
        %v2330 = vld [vmem:[#allocation2 + $0x2c] sm:$0x1]
        %v2331 = vmul.bf16 %v2322, %v1294
        %v2332 = vmul.bf16 %v2323, %v1303
        %v2333 = vmul.bf16 %v2324, %v1312
        %v2334 = vmul.bf16 %v2325, %v1321
        %v2335 = vmul.bf16 %v2326, %v1330
        %v2336 = vmul.bf16 %v2327, %v1339
        %v2337 = vmul.bf16 %v2328, %v1348
        %v2338 = vmul.bf16 %v2329, %v1357
        %v2339 = vmul.bf16 %v2330, %v1358
        %s2340 = scalar_lea.vmem %s6, 128
        %v2341 = vld [vmem:[%s2340] sm:$0xf]
        %v2342 = vld [vmem:[%s2340 + $0x4] sm:$0xf]
        %v2343 = vld [vmem:[%s2340 + $0x8] sm:$0xf]
        %v2344 = vld [vmem:[%s2340 + $0xc] sm:$0xf]
        %v2354 = vunpack.c.l.b16 %v2331
        %v2355 = vunpack.c.l.b16 %v2332
        %v2356 = vunpack.c.l.b16 %v2333
        %v2357 = vunpack.c.l.b16 %v2334
        %v2358 = vunpack.c.l.b16 %v2335
        %v2359 = vunpack.c.l.b16 %v2336
        %v2360 = vunpack.c.l.b16 %v2337
        %v2361 = vunpack.c.l.b16 %v2338
        %v2362 = vunpack.c.l.b16 %v2339
        %v2363 = vpack.c.b16 %v2355, %v2354
        %v2364 = vpack.c.b16 %v2357, %v2356
        %v2365 = vpack.c.b16 %v2359, %v2358
        %v2366 = vpack.c.b16 %v2361, %v2360
        %v2367 = vpack.c.b16 %v2362, %v2362
        %v2369 = vshrl.u32 %v2363, 16
        %v2371 = vshll.u32 %v2363, 16
        %v2373 = vrot.slane %v2371, 1
        %v2374 = vor.u32 %v2369, %v2373
        %v2376 = vshll.u32 %v2364, 16
        %v2378 = vrot.slane %v2376, 1
        %v2379 = vsel %vm1405, %v2374, %v2378
        %v2380 = vshrl.u32 %v2364, 16
        %v2382 = vor.u32 %v2380, %v2378
        %v2384 = vshll.u32 %v2365, 16
        %v2386 = vrot.slane %v2384, 1
        %v2387 = vsel %vm1405, %v2382, %v2386
        %v2388 = vshrl.u32 %v2365, 16
        %v2390 = vor.u32 %v2388, %v2386
        %v2392 = vshll.u32 %v2366, 16
        %v2394 = vrot.slane %v2392, 1
        %v2395 = vsel %vm1405, %v2390, %v2394
        %v2396 = vshrl.u32 %v2366, 16
        %v2398 = vor.u32 %v2396, %v2394
        %v2400 = vshll.u32 %v2367, 16
        %v2402 = vrot.slane %v2400, 1
        %v2403 = vsel %vm1405, %v2398, %v2402
        %v2408 = vunpack.c.l.b16 %v2341
        %v2409 = vunpack.c.l.b16 %v2342
        %v2410 = vunpack.c.l.b16 %v2343
        %v2411 = vunpack.c.l.b16 %v2344
        %v2412 = vpack.c.b16 %v2409, %v2408
        %v2413 = vpack.c.b16 %v2411, %v2410
        %v2417 = vsel %vm937, %v2379, 0
        %v2420 = vsel %vm937, %v2387, 0
        %v2423 = vsel %vm937, %v2395, 0
        %v2426 = vsel %vm937, %v2403, 0
        %2428 = vmatprep.subr.bf16.mxu0 0
        %2429 = vmatpush1.bf16.msra.mxu0 0
        %2430 = vmatprep.subr.bf16.mxu0 0
        %2431 = vmatpush1.bf16.msra.mxu0 0
        %2432 = vmatprep.subr.bf16.mxu0 0
        %2433 = vmatpush1.bf16.msra.mxu0 0
        %2434 = vmatprep.subr.bf16.mxu0 0
        %2435 = vmatpush1.bf16.msra.mxu0 0
        %2436 = vmatprep.subr.bf16.mxu0 0
        %2437 = vmatpush1.bf16.msra.mxu0 0
        %2438 = vmatprep.subr.bf16.mxu0 0
        %2439 = vmatpush1.bf16.msra.mxu0 0
        %2440 = vmatprep.subr.bf16.mxu0 0
        %2441 = vmatpush1.bf16.msra.mxu0 %v2413
        %2442 = vmatprep.subr.bf16.mxu0 0
        %2443 = vmatpush1.bf16.msra.mxu0 %v2412
        %2444 = vmatprep.subr.bf16.mxu0 0
        %2445 = vmatpush2.bf16.msra.mxu0 0
        %2446 = vmatprep.subr.bf16.mxu0 0
        %2447 = vmatpush2.bf16.msra.mxu0 0
        %2448 = vmatprep.subr.bf16.mxu0 0
        %2449 = vmatpush2.bf16.msra.mxu0 0
        %2450 = vmatprep.subr.bf16.mxu0 0
        %2451 = vmatpush2.bf16.msra.mxu0 0
        %2452 = vmatprep.subr.bf16.mxu0 0
        %2453 = vmatpush2.bf16.msra.mxu0 0
        %2454 = vmatprep.subr.bf16.mxu0 0
        %2455 = vmatpush2.bf16.msra.mxu0 0
        %2456 = vmatprep.subr.bf16.mxu0 0
        %2457 = vmatpush2.bf16.msra.mxu0 0
        %2458 = vmatprep.subr.bf16.mxu0 0
        %2459 = vmatpush2.bf16.msra.mxu0 0
        %2460 = vmatprep.mubr.bf16.mxu0 0
        %2461 = vmatmul.mubr.bf16.gmra.mxu0 %v2417
        %v2462 = vpop.f32.mrf.mxu0
        %v2463 = vadd.f32 0.0, %v2462
        %v2464 = vpop.f32.mrf.mxu0
        %v2465 = vpop.f32.mrf.mxu0
        %v2466 = vadd.f32 0.0, %v2465
        %v2467 = vpop.f32.mrf.mxu0
        %2468 = vmatprep.mubr.bf16.mxu0 0
        %2469 = vmatmul.mubr.bf16.gmra.mxu0 %v2420
        %v2470 = vpop.f32.mrf.mxu0
        %v2471 = vadd.f32 0.0, %v2470
        %v2472 = vpop.f32.mrf.mxu0
        %v2473 = vpop.f32.mrf.mxu0
        %v2474 = vadd.f32 0.0, %v2473
        %v2475 = vpop.f32.mrf.mxu0
        %2476 = vmatprep.mubr.bf16.mxu0 0
        %2477 = vmatmul.mubr.bf16.gmra.mxu0 %v2423
        %v2478 = vpop.f32.mrf.mxu0
        %v2479 = vadd.f32 0.0, %v2478
        %v2480 = vpop.f32.mrf.mxu0
        %v2481 = vpop.f32.mrf.mxu0
        %v2482 = vadd.f32 0.0, %v2481
        %v2483 = vpop.f32.mrf.mxu0
        %2484 = vmatprep.mubr.bf16.mxu0 0
        %2485 = vmatmul.mubr.bf16.gmra.mxu0 %v2426
        %v2486 = vpop.f32.mrf.mxu0
        %v2487 = vadd.f32 0.0, %v2486
        %v2488 = vpop.f32.mrf.mxu0
        %v2489 = vpop.f32.mrf.mxu0
        %v2490 = vadd.f32 0.0, %v2489
        %v2491 = vpop.f32.mrf.mxu0
        %2492 = vdwg.mxu0
        %v2493 = vadd.f32 %v2314, %v2463
        %v2494 = vadd.f32 %v2315, %v2466
        %v2495 = vadd.f32 %v2316, %v2471
        %v2496 = vadd.f32 %v2317, %v2474
        %v2497 = vadd.f32 %v2318, %v2479
        %v2498 = vadd.f32 %v2319, %v2482
        %v2499 = vadd.f32 %v2320, %v2487
        %v2500 = vadd.f32 %v2321, %v2490
        %v2501 = vld [vmem:[%s7] sm:$0x1]
        %v2503 = vlaneseq
        %v2504 = vshrl.u32 %v2503, 7
        %v2505 = vsub.s32 0, %v2504
        %v2506 = vrot.slane %v2501, %v2505
        %v2508 = vmul.f32 %v2493, %v2506
        %v2509 = vmul.f32 %v2494, %v2506
        %v2510 = vmul.f32 %v2495, %v2506
        %v2511 = vmul.f32 %v2496, %v2506
        %v2512 = vmul.f32 %v2497, %v2506
        %v2513 = vmul.f32 %v2498, %v2506
        %v2514 = vmul.f32 %v2499, %v2506
        %v2515 = vmul.f32 %v2500, %v2506
        %v2516 = vld [vmem:[%s8] sm:$0x1]
        %v2518 = vlaneseq
        %v2519 = vshrl.u32 %v2518, 7
        %v2520 = vsub.s32 0, %v2519
        %v2521 = vrot.slane %v2516, %v2520
        %v2523 = vadd.f32 %v2508, %v2521
        %v2524 = vadd.f32 %v2509, %v2521
        %v2525 = vadd.f32 %v2510, %v2521
        %v2526 = vadd.f32 %v2511, %v2521
        %v2527 = vadd.f32 %v2512, %v2521
        %v2528 = vadd.f32 %v2513, %v2521
        %v2529 = vadd.f32 %v2514, %v2521
        %v2530 = vadd.f32 %v2515, %v2521
        %v2531 = vmax.f32 %v2523, 0.0
        %v2532 = vmax.f32 %v2524, 0.0
        %v2533 = vmax.f32 %v2525, 0.0
        %v2534 = vmax.f32 %v2526, 0.0
        %v2535 = vmax.f32 %v2527, 0.0
        %v2536 = vmax.f32 %v2528, 0.0
        %v2537 = vmax.f32 %v2529, 0.0
        %v2538 = vmax.f32 %v2530, 0.0
        %v2539 = vpack.c.bf16 %v2532, %v2531
        %v2540 = vpack.c.bf16 %v2534, %v2533
        %v2541 = vpack.c.bf16 %v2536, %v2535
        %v2542 = vpack.c.bf16 %v2538, %v2537
        %v2543 = vld [vmem:[%s9] sm:$0xf]
        %v2544 = vld [vmem:[%s9 + $0x4] sm:$0xf]
        %v2545 = vld [vmem:[%s9 + $0x8] sm:$0xf]
        %v2546 = vld [vmem:[%s9 + $0xc] sm:$0xf]
        %v2551 = vunpack.c.l.b16 %v2543
        %v2552 = vunpack.c.l.b16 %v2544
        %v2553 = vunpack.c.l.b16 %v2545
        %v2554 = vunpack.c.l.b16 %v2546
        %v2555 = vpack.c.b16 %v2552, %v2551
        %v2556 = vpack.c.b16 %v2554, %v2553
        %v2560 = vsel %vm937, %v2539, 0
        %v2563 = vsel %vm937, %v2540, 0
        %v2566 = vsel %vm937, %v2541, 0
        %v2569 = vsel %vm937, %v2542, 0
        %2571 = vmatprep.subr.bf16.mxu0 0
        %2572 = vmatpush1.bf16.msra.mxu0 0
        %2573 = vmatprep.subr.bf16.mxu0 0
        %2574 = vmatpush1.bf16.msra.mxu0 0
        %2575 = vmatprep.subr.bf16.mxu0 0
        %2576 = vmatpush1.bf16.msra.mxu0 0
        %2577 = vmatprep.subr.bf16.mxu0 0
        %2578 = vmatpush1.bf16.msra.mxu0 0
        %2579 = vmatprep.subr.bf16.mxu0 0
        %2580 = vmatpush1.bf16.msra.mxu0 0
        %2581 = vmatprep.subr.bf16.mxu0 0
        %2582 = vmatpush1.bf16.msra.mxu0 0
        %2583 = vmatprep.subr.bf16.mxu0 0
        %2584 = vmatpush1.bf16.msra.mxu0 %v2556
        %2585 = vmatprep.subr.bf16.mxu0 0
        %2586 = vmatpush1.bf16.msra.mxu0 %v2555
        %2587 = vmatprep.subr.bf16.mxu0 0
        %2588 = vmatpush2.bf16.msra.mxu0 0
        %2589 = vmatprep.subr.bf16.mxu0 0
        %2590 = vmatpush2.bf16.msra.mxu0 0
        %2591 = vmatprep.subr.bf16.mxu0 0
        %2592 = vmatpush2.bf16.msra.mxu0 0
        %2593 = vmatprep.subr.bf16.mxu0 0
        %2594 = vmatpush2.bf16.msra.mxu0 0
        %2595 = vmatprep.subr.bf16.mxu0 0
        %2596 = vmatpush2.bf16.msra.mxu0 0
        %2597 = vmatprep.subr.bf16.mxu0 0
        %2598 = vmatpush2.bf16.msra.mxu0 0
        %2599 = vmatprep.subr.bf16.mxu0 0
        %2600 = vmatpush2.bf16.msra.mxu0 0
        %2601 = vmatprep.subr.bf16.mxu0 0
        %2602 = vmatpush2.bf16.msra.mxu0 0
        %2603 = vmatprep.mubr.bf16.mxu0 0
        %2604 = vmatmul.mubr.bf16.gmra.mxu0 %v2560
        %v2605 = vpop.f32.mrf.mxu0
        %v2606 = vadd.f32 0.0, %v2605
        %v2607 = vpop.f32.mrf.mxu0
        %v2608 = vpop.f32.mrf.mxu0
        %v2609 = vadd.f32 0.0, %v2608
        %v2610 = vpop.f32.mrf.mxu0
        %2611 = vmatprep.mubr.bf16.mxu0 0
        %2612 = vmatmul.mubr.bf16.gmra.mxu0 %v2563
        %v2613 = vpop.f32.mrf.mxu0
        %v2614 = vadd.f32 0.0, %v2613
        %v2615 = vpop.f32.mrf.mxu0
        %v2616 = vpop.f32.mrf.mxu0
        %v2617 = vadd.f32 0.0, %v2616
        %v2618 = vpop.f32.mrf.mxu0
        %2619 = vmatprep.mubr.bf16.mxu0 0
        %2620 = vmatmul.mubr.bf16.gmra.mxu0 %v2566
        %v2621 = vpop.f32.mrf.mxu0
        %v2622 = vadd.f32 0.0, %v2621
        %v2623 = vpop.f32.mrf.mxu0
        %v2624 = vpop.f32.mrf.mxu0
        %v2625 = vadd.f32 0.0, %v2624
        %v2626 = vpop.f32.mrf.mxu0
        %2627 = vmatprep.mubr.bf16.mxu0 0
        %2628 = vmatmul.mubr.bf16.gmra.mxu0 %v2569
        %v2629 = vpop.f32.mrf.mxu0
        %v2630 = vadd.f32 0.0, %v2629
        %v2631 = vpop.f32.mrf.mxu0
        %v2632 = vpop.f32.mrf.mxu0
        %v2633 = vadd.f32 0.0, %v2632
        %v2634 = vpop.f32.mrf.mxu0
        %2635 = vdwg.mxu0
        %v2636 = vadd.f32 %v413, %v2606
        %v2637 = vadd.f32 %v414, %v2609
        %v2638 = vadd.f32 %v415, %v2614
        %v2639 = vadd.f32 %v416, %v2617
        %v2640 = vadd.f32 %v417, %v2622
        %v2641 = vadd.f32 %v418, %v2625
        %v2642 = vadd.f32 %v419, %v2630
        %v2643 = vadd.f32 %v420, %v2633
        %2644 = vst [vmem:[%s406] sm:$0xff] %v2636
        %2645 = vst [vmem:[%s406 + $0x8] sm:$0xff] %v2637
        %2646 = vst [vmem:[%s406 + $0x10] sm:$0xff] %v2638
        %2647 = vst [vmem:[%s406 + $0x18] sm:$0xff] %v2639
        %2648 = vst [vmem:[%s406 + $0x20] sm:$0xff] %v2640
        %2649 = vst [vmem:[%s406 + $0x28] sm:$0xff] %v2641
        %2650 = vst [vmem:[%s406 + $0x30] sm:$0xff] %v2642
        %2651 = vst [vmem:[%s406 + $0x38] sm:$0xff] %v2643
        %s2652 = sand.u32 %s291, 1
        %s2653 = scalar_lea.sflag [#allocation4], %s2652
        %s2654 = sand.u32 %s291, 1
        %s2655 = smul.addr %s2654, 64
        %s2656 = scalar_lea.vmem [#allocation3], %s2655
        // Predicated region
        $region69: #{downsample_forward.3} parent=67 // pred_check
          %p2657 = pneg %p301
        $region70: #{downsample_forward.3} parent=67 // pred_check_branch
          %2659 = sbr.rel (%p2657) target = $region72
        $region71: #{downsample_forward.3} parent=67 // pred_region
          %s2661 = ssub.s32 1024, 1024
          %2662 = vsyncadd %s2653, %s2661
          %s2663 = smul.addr %s26, 8
          %s2664 = smul.addr %s2663, 128
          %s2665 = scalar_lea.hbm %s12, %s2664
          %s2666 = sshll.u32 %s2656, 4
          %s2667 = int_to_ptr.vmem [resolvable:$true] %s2666
          %2672 = dma.vmem_to_hbm [thread:$0]  %s2667, 1024, %s2665, %s2653, 128, 128, 8
        $region72: #{downsample_forward.3} parent=67 // pred_fallthru
          _
      $region68: #{downsample_forward.3} parent=5 // pred_fallthru
        _
      %p2673 = scmp.le.s32.totalorder 2, %s21
      // Predicated region
      $region73: #{downsample_forward.3} parent=5 // pred_check
        %p2674 = pneg %p2673
      $region74: #{downsample_forward.3} parent=5 // pred_check_branch
        %2676 = sbr.rel (%p2674) target = $region76
      $region75: #{downsample_forward.3} parent=5 // pred_region
        %s2677 = ssub.s32 %s21, 2
        // Predicated region
        $region77: #{downsample_forward.3} parent=75 // pred_check
          %p2678 = pneg %p307
        $region78: #{downsample_forward.3} parent=75 // pred_check_branch
          %2680 = sbr.rel (%p2678) target = $region80
        $region79: #{downsample_forward.3} parent=75 // pred_region
          %s2681 = sand.u32 %s292, 1
          %s2682 = scalar_lea.sflag [#allocation4], %s2681
          %s2683 = sand.u32 %s292, 1
          %s2684 = smul.addr %s2683, 64
          %s2685 = scalar_lea.vmem [#allocation3], %s2684
          %2686 = dma.done %s2682, 1024
        $region80: #{downsample_forward.3} parent=75 // pred_fallthru
          _
      $region76: #{downsample_forward.3} parent=5 // pred_fallthru
        _
    $region6: #{downsample_forward.3} parent=1 // loop_footer
      %s25 = sadd.s32 1, %s21
    $region7: #{downsample_forward.3} parent=1 // loop_footer_branch
      %20 = sbr.rel target = $region3
    $region8: #{downsample_forward.3} parent=1 // loop_exit
      _
    %2687 = vsyncpa [#allocation4], 1
    %s2688 = scalar_lea.sflag [#allocation4], 1
    %2689 = vsyncpa %s2688, 1

</llo_original>
